<compile_context>
chip_gen: v6e
topology: v6e:2x2x1
jax: 0.10.0
libtpu: 0.0.40
codegen_flags: <defaults>
</compile_context>

<pallas_src>
import math

import jax
import jax.numpy as jnp
from jax.experimental import pallas as pl
from jax.experimental.pallas import tpu as pltpu

_EPS = 1e-5
# Set to jnp.bfloat16 on v6e/v7x for full-rate MXU + halved VMEM/HBM per tile
# (accumulation stays f32 via preferred_element_type). Kept f32 to match PyTorch numerics.
_MXU_DTYPE = jnp.float32


def _row_tile(total, target=1024):
    """Largest row tile <= target that divides `total` and is sublane aligned (multiple of 8).
    Falls back to the full extent (single block) when no aligned divisor exists."""
    if total <= target:
        return total
    start = target - (target % 8)
    for t in range(start, 7, -8):
        if total % t == 0:
            return t
    return total


# ----------------------------- Pallas kernels -----------------------------

def _matmul_bias_stats_kernel(x_ref, w_ref, b_ref, y_ref, sum_ref, sq_ref):
    """Pass 1: y = x @ w + b as ONE MXU matmul per tile, plus per-channel sum / sum-of-squares
    accumulated across the row-tile grid (global BatchNorm statistics)."""
    @pl.when(pl.program_id(0) == 0)
    def _init():
        sum_ref[...] = jnp.zeros_like(sum_ref)
        sq_ref[...] = jnp.zeros_like(sq_ref)

    y = jnp.dot(x_ref[...].astype(_MXU_DTYPE), w_ref[...].astype(_MXU_DTYPE),
                preferred_element_type=jnp.float32) + b_ref[...]
    y_ref[...] = y
    sum_ref[...] += jnp.sum(y, axis=0, keepdims=True)
    sq_ref[...] += jnp.sum(y * y, axis=0, keepdims=True)


def _bn_relu_pool_kernel(x4_ref, scale_ref, shift_ref, o_ref):
    """Pass 2 (encoder): per-tap BN affine + ReLU, then 2x2 max-pool as a max over the
    leading tap axis (pure vreg-group max, lane/sublane layout untouched)."""
    y = jnp.maximum(x4_ref[...] * scale_ref[...] + shift_ref[...], 0.0)   # (4, T, C)
    o_ref[...] = jnp.max(y, axis=0)                                       # (T, C)


def _scale_shift_relu_kernel(y_ref, scale_ref, shift_ref, o_ref):
    """Pass 2 (decoder BN layers): lane-dense normalize + ReLU."""
    o_ref[...] = jnp.maximum(y_ref[...] * scale_ref[...] + shift_ref[...], 0.0)


def _matmul_bias_sigmoid_kernel(x_ref, w_ref, b_ref, o_ref):
    """Final deconv: single fused matmul + bias + sigmoid (EUP)."""
    y = jnp.dot(x_ref[...].astype(_MXU_DTYPE), w_ref[...].astype(_MXU_DTYPE),
                preferred_element_type=jnp.float32) + b_ref[...]
    o_ref[...] = jax.nn.sigmoid(y)


# ----------------------------- shared pallas wrappers -----------------------------

def _matmul_bias_stats(x2, w2, bias_row, tile_r):
    """Row-tiled y = x2 @ w2 + bias, returning y plus global per-column sum / sum-of-squares."""
    R, K = x2.shape
    C = w2.shape[1]
    y, s, sq = pl.pallas_call(
        _matmul_bias_stats_kernel,
        out_shape=(jax.ShapeDtypeStruct((R, C), jnp.float32),
                   jax.ShapeDtypeStruct((1, C), jnp.float32),
                   jax.ShapeDtypeStruct((1, C), jnp.float32)),
        grid=(R // tile_r,),
        in_specs=[pl.BlockSpec((tile_r, K), lambda i: (i, 0)),
                  pl.BlockSpec((K, C), lambda i: (0, 0)),
                  pl.BlockSpec((1, C), lambda i: (0, 0))],
        out_specs=(pl.BlockSpec((tile_r, C), lambda i: (i, 0)),
                   pl.BlockSpec((1, C), lambda i: (0, 0)),     # resident accumulator
                   pl.BlockSpec((1, C), lambda i: (0, 0))),    # resident accumulator
        compiler_params=pltpu.CompilerParams(dimension_semantics=("arbitrary",)),
    )(x2, w2, bias_row.reshape(1, C))
    return y, s[0], sq[0]


def _bn_scale_shift(s, sq, count, gamma, beta):
    """Fold train-mode BN (biased variance) into a per-channel scale/shift (tiny XLA vector math)."""
    mean = s / count
    var = jnp.maximum(sq / count - mean * mean, 0.0)
    scale = gamma * jax.lax.rsqrt(var + _EPS)
    shift = beta - mean * scale
    return scale, shift


def _pixel_shuffle2(y, N, H, W, Cout):
    """rows=(n,h,w), lanes=(dy,dx,c)  ->  (N, 2H, 2W, Cout)."""
    # TODO(synk): could be written directly from the kernel via per-tap strided out BlockSpecs
    # to remove this XLA relayout; kept in the wrapper for lowering robustness.
    return (y.reshape(N, H, W, 2, 2, Cout)
             .transpose(0, 1, 3, 2, 4, 5)
             .reshape(N, 2 * H, 2 * W, Cout))


# ----------------------------- layers -----------------------------

def conv_bn_relu_pool(x, w, b, g, be):
    """Conv2d(3x3, pad=1) + BatchNorm2d + ReLU + MaxPool2d(2,2).
    x: (N,H,W,Cin) NHWC; w: PyTorch layout (Cout,Cin,3,3)."""
    N, H, W, Cin = x.shape
    Cout = w.shape[0]
    assert H % 2 == 0 and W % 2 == 0, "MaxPool2d(2,2) needs even spatial dims"
    R = N * H * W

    xpad = jnp.pad(x, ((0, 0), (1, 1), (1, 1), (0, 0)))
    # im2col slab (R, 9*Cin); lane order (ky, kx, cin) matches the reshaped weight below.
    x9 = jnp.concatenate(
        [xpad[:, ky:ky + H, kx:kx + W, :] for ky in range(3) for kx in range(3)],
        axis=-1).reshape(R, 9 * Cin)
    w9 = jnp.transpose(w, (2, 3, 1, 0)).reshape(9 * Cin, Cout)

    tile_r = _row_tile(R)
    y, s, sq = _matmul_bias_stats(x9, w9, b, tile_r)
    scale, shift = _bn_scale_shift(s, sq, R, g, be)

    # Gather the 4 elements of every 2x2 window onto a leading axis (channel lanes untouched),
    # then fuse BN affine + ReLU + pool in one tiled kernel (writes only the pooled activation).
    Ho, Wo = H // 2, W // 2
    Rp = N * Ho * Wo
    x4 = (y.reshape(N, Ho, 2, Wo, 2, Cout)
           .transpose(2, 4, 0, 1, 3, 5)
           .reshape(4, Rp, Cout))
    tile_p = _row_tile(Rp, 2048)
    out = pl.pallas_call(
        _bn_relu_pool_kernel,
        out_shape=jax.ShapeDtypeStruct((Rp, Cout), jnp.float32),
        grid=(Rp // tile_p,),
        in_specs=[pl.BlockSpec((4, tile_p, Cout), lambda i: (0, i, 0)),
                  pl.BlockSpec((1, Cout), lambda i: (0, 0)),
                  pl.BlockSpec((1, Cout), lambda i: (0, 0))],
        out_specs=pl.BlockSpec((tile_p, Cout), lambda i: (i, 0)),
        compiler_params=pltpu.CompilerParams(dimension_semantics=("parallel",)),
    )(x4, scale.reshape(1, Cout), shift.reshape(1, Cout))
    return out.reshape(N, Ho, Wo, Cout)


def deconv_bn_relu(x, w, b, g, be):
    """ConvTranspose2d(2x2, stride=2) + BatchNorm2d + ReLU.
    x: (N,H,W,Cin); w: PyTorch ConvTranspose2d layout (Cin,Cout,2,2) -> (N,2H,2W,Cout)."""
    N, H, W, Cin = x.shape
    Cout = w.shape[1]
    R = N * H * W
    x2 = x.reshape(R, Cin)
    w4 = jnp.transpose(w, (0, 2, 3, 1)).reshape(Cin, 4 * Cout)   # lane order (dy, dx, cout)
    b4 = jnp.tile(b, 4)

    tile_r = _row_tile(R)
    y, s, sq = _matmul_bias_stats(x2, w4, b4, tile_r)
    # BN stats are per output channel over all 4*R output positions (all taps).
    s_c = s.reshape(4, Cout).sum(axis=0)
    sq_c = sq.reshape(4, Cout).sum(axis=0)
    scale, shift = _bn_scale_shift(s_c, sq_c, 4 * R, g, be)
    scale4 = jnp.tile(scale, 4).reshape(1, 4 * Cout)
    shift4 = jnp.tile(shift, 4).reshape(1, 4 * Cout)

    yact = pl.pallas_call(
        _scale_shift_relu_kernel,
        out_shape=jax.ShapeDtypeStruct((R, 4 * Cout), jnp.float32),
        grid=(R // tile_r,),
        in_specs=[pl.BlockSpec((tile_r, 4 * Cout), lambda i: (i, 0)),
                  pl.BlockSpec((1, 4 * Cout), lambda i: (0, 0)),
                  pl.BlockSpec((1, 4 * Cout), lambda i: (0, 0))],
        out_specs=pl.BlockSpec((tile_r, 4 * Cout), lambda i: (i, 0)),
        compiler_params=pltpu.CompilerParams(dimension_semantics=("parallel",)),
    )(y, scale4, shift4)
    return _pixel_shuffle2(yact, N, H, W, Cout)


def deconv_sigmoid(x, w, b):
    """ConvTranspose2d(2x2, stride=2) + Sigmoid (final layer)."""
    N, H, W, Cin = x.shape
    Cout = w.shape[1]
    R = N * H * W
    x2 = x.reshape(R, Cin)
    w4 = jnp.transpose(w, (0, 2, 3, 1)).reshape(Cin, 4 * Cout)
    b4 = jnp.tile(b, 4)
    tile_r = _row_tile(R)
    y = pl.pallas_call(
        _matmul_bias_sigmoid_kernel,
        out_shape=jax.ShapeDtypeStruct((R, 4 * Cout), jnp.float32),
        grid=(R // tile_r,),
        in_specs=[pl.BlockSpec((tile_r, Cin), lambda i: (i, 0)),
                  pl.BlockSpec((Cin, 4 * Cout), lambda i: (0, 0)),
                  pl.BlockSpec((1, 4 * Cout), lambda i: (0, 0))],
        out_specs=pl.BlockSpec((tile_r, 4 * Cout), lambda i: (i, 0)),
        compiler_params=pltpu.CompilerParams(dimension_semantics=("parallel",)),
    )(x2, w4, b4.reshape(1, 4 * Cout))
    return _pixel_shuffle2(y, N, H, W, Cout)


# ----------------------------- parameters -----------------------------

def _conv_init(key, cout, cin, kh, kw):
    bound = 1.0 / math.sqrt(cin * kh * kw)
    kw_, kb_ = jax.random.split(key)
    w = jax.random.uniform(kw_, (cout, cin, kh, kw), jnp.float32, -bound, bound)
    b = jax.random.uniform(kb_, (cout,), jnp.float32, -bound, bound)
    return w, b


def _deconv_init(key, cin, cout, kh, kw):
    bound = 1.0 / math.sqrt(cin * kh * kw)
    kw_, kb_ = jax.random.split(key)
    w = jax.random.uniform(kw_, (cin, cout, kh, kw), jnp.float32, -bound, bound)
    b = jax.random.uniform(kb_, (cout,), jnp.float32, -bound, bound)
    return w, b


def init_params(key):
    k1, k2, k3, k4, k5, k6 = jax.random.split(key, 6)
    p = {}
    p["conv1_w"], p["conv1_b"] = _conv_init(k1, 32, 3, 3, 3)
    p["bn1_g"], p["bn1_b"] = jnp.ones((32,), jnp.float32), jnp.zeros((32,), jnp.float32)
    p["conv2_w"], p["conv2_b"] = _conv_init(k2, 64, 32, 3, 3)
    p["bn2_g"], p["bn2_b"] = jnp.ones((64,), jnp.float32), jnp.zeros((64,), jnp.float32)
    p["conv3_w"], p["conv3_b"] = _conv_init(k3, 128, 64, 3, 3)
    p["bn3_g"], p["bn3_b"] = jnp.ones((128,), jnp.float32), jnp.zeros((128,), jnp.float32)
    p["deconv1_w"], p["deconv1_b"] = _deconv_init(k4, 128, 64, 2, 2)
    p["dbn1_g"], p["dbn1_b"] = jnp.ones((64,), jnp.float32), jnp.zeros((64,), jnp.float32)
    p["deconv2_w"], p["deconv2_b"] = _deconv_init(k5, 64, 32, 2, 2)
    p["dbn2_g"], p["dbn2_b"] = jnp.ones((32,), jnp.float32), jnp.zeros((32,), jnp.float32)
    p["deconv3_w"], p["deconv3_b"] = _deconv_init(k6, 32, 3, 2, 2)
    return p


# ----------------------------- forward -----------------------------

@jax.jit
def autoencoder_forward(params, x_nchw):
    x = jnp.transpose(x_nchw, (0, 2, 3, 1))  # NCHW -> NHWC (channels-last = lane axis)
    # encoder
    out = conv_bn_relu_pool(x, params["conv1_w"], params["conv1_b"], params["bn1_g"], params["bn1_b"])
    out = conv_bn_relu_pool(out, params["conv2_w"], params["conv2_b"], params["bn2_g"], params["bn2_b"])
    out = conv_bn_relu_pool(out, params["conv3_w"], params["conv3_b"], params["bn3_g"], params["bn3_b"])
    # decoder
    out = deconv_bn_relu(out, params["deconv1_w"], params["deconv1_b"], params["dbn1_g"], params["dbn1_b"])
    out = deconv_bn_relu(out, params["deconv2_w"], params["deconv2_b"], params["dbn2_g"], params["dbn2_b"])
    out = deconv_sigmoid(out, params["deconv3_w"], params["deconv3_b"])
    return jnp.transpose(out, (0, 3, 1, 2))  # NHWC -> NCHW


if __name__ == "__main__":
    key = jax.random.PRNGKey(0)
    pkey, xkey = jax.random.split(key)
    params = init_params(pkey)
    x = jax.random.normal(xkey, (2, 3, 16, 16), jnp.float32)  # NCHW like PyTorch
    out = jax.block_until_ready(autoencoder_forward(params, x))
    assert out.shape == (2, 3, 16, 16), out.shape
    assert bool(jnp.all(jnp.isfinite(out)))
    assert bool(jnp.all((out >= 0.0) & (out <= 1.0)))  # sigmoid output range
    print("KERNEL_OK")
</pallas_src>

<mosaic_0001>
module attributes {stable_mosaic.version = 11 : i64} {
  func.func @_matmul_bias_stats_kernel(%arg0: i32, %arg1: memref<512x27xf32, #tpu.memory_space<vmem>>, %arg2: memref<27x32xf32, #tpu.memory_space<vmem>>, %arg3: memref<1x32xf32, #tpu.memory_space<vmem>>, %arg4: memref<512x32xf32, #tpu.memory_space<vmem>>, %arg5: memref<1x32xf32, #tpu.memory_space<vmem>>, %arg6: memref<1x32xf32, #tpu.memory_space<vmem>>) attributes {dimension_semantics = [#tpu.dimension_semantics<arbitrary>], iteration_bounds = array<i64: 1>, scalar_prefetch = 0 : i64, scratch_operands = 0 : i64, tpu.core_type = #tpu.core_type<tc>, window_params = [{transform_indices = @transform_0, window_bounds = array<i64: 512, 27>}, {pipeline_mode = #tpu.pipeline_mode<synchronous>, transform_indices = @transform_1, window_bounds = array<i64: 27, 32>}, {pipeline_mode = #tpu.pipeline_mode<synchronous>, transform_indices = @transform_2, window_bounds = array<i64: 1, 32>}, {transform_indices = @transform_3, window_bounds = array<i64: 512, 32>}, {pipeline_mode = #tpu.pipeline_mode<synchronous>, transform_indices = @transform_4, window_bounds = array<i64: 1, 32>}, {pipeline_mode = #tpu.pipeline_mode<synchronous>, transform_indices = @transform_5, window_bounds = array<i64: 1, 32>}]} {
    %c0_i32 = arith.constant 0 : i32
    %0 = arith.cmpi eq, %arg0, %c0_i32 : i32
    %1 = arith.extui %0 : i1 to i32
    %c0_i32_0 = arith.constant 0 : i32
    %2 = arith.cmpi ne, %1, %c0_i32_0 : i32
    scf.if %2 {
      %cst_18 = arith.constant 0.000000e+00 : f32
      %21 = vector.broadcast %cst_18 : f32 to vector<1x32xf32>
      %c0_19 = arith.constant 0 : index
      %c0_20 = arith.constant 0 : index
      %22 = vector.load %arg5[%c0_19, %c0_20] : memref<1x32xf32, #tpu.memory_space<vmem>>, vector<1x32xf32>
      tpu.vector_store %arg5[%c0_19, %c0_20], %21 {strides = array<i32>} : memref<1x32xf32, #tpu.memory_space<vmem>>, vector<1x32xf32>,
      %cst_21 = arith.constant 0.000000e+00 : f32
      %23 = vector.broadcast %cst_21 : f32 to vector<1x32xf32>
      %c0_22 = arith.constant 0 : index
      %c0_23 = arith.constant 0 : index
      %24 = vector.load %arg6[%c0_22, %c0_23] : memref<1x32xf32, #tpu.memory_space<vmem>>, vector<1x32xf32>
      tpu.vector_store %arg6[%c0_22, %c0_23], %23 {strides = array<i32>} : memref<1x32xf32, #tpu.memory_space<vmem>>, vector<1x32xf32>,
    } else {
    }
    %c0 = arith.constant 0 : index
    %c0_1 = arith.constant 0 : index
    %3 = vector.load %arg1[%c0, %c0_1] : memref<512x27xf32, #tpu.memory_space<vmem>>, vector<512x27xf32>
    %c0_2 = arith.constant 0 : index
    %c0_3 = arith.constant 0 : index
    %4 = vector.load %arg2[%c0_2, %c0_3] : memref<27x32xf32, #tpu.memory_space<vmem>>, vector<27x32xf32>
    %cst = arith.constant dense<0.000000e+00> : vector<512x32xf32>
    %5 = tpu.matmul %3, %4, %cst {dimension_numbers = #tpu.dot_dimension_numbers<[1], [0], [0], [1], [0, 0, 1, 1], [], []>} : vector<512x27xf32>, vector<27x32xf32>, vector<512x32xf32> -> vector<512x32xf32>
    %c0_4 = arith.constant 0 : index
    %c0_5 = arith.constant 0 : index
    %6 = vector.load %arg3[%c0_4, %c0_5] : memref<1x32xf32, #tpu.memory_space<vmem>>, vector<1x32xf32>
    %7 = vector.broadcast %6 : vector<1x32xf32> to vector<512x32xf32>
    %8 = arith.addf %5, %7 : vector<512x32xf32>
    %c0_6 = arith.constant 0 : index
    %c0_7 = arith.constant 0 : index
    %9 = vector.load %arg4[%c0_6, %c0_7] : memref<512x32xf32, #tpu.memory_space<vmem>>, vector<512x32xf32>
    tpu.vector_store %arg4[%c0_6, %c0_7], %8 {strides = array<i32>} : memref<512x32xf32, #tpu.memory_space<vmem>>, vector<512x32xf32>,
    %c0_8 = arith.constant 0 : index
    %c0_9 = arith.constant 0 : index
    %10 = vector.load %arg5[%c0_8, %c0_9] : memref<1x32xf32, #tpu.memory_space<vmem>>, vector<1x32xf32>
    %cst_10 = arith.constant dense<0.000000e+00> : vector<32xf32>
    %11 = vector.multi_reduction <add>, %8, %cst_10 [0] : vector<512x32xf32> to vector<32xf32>
    %12 = vector.shape_cast %11 : vector<32xf32> to vector<1x32xf32>
    %13 = arith.addf %10, %12 : vector<1x32xf32>
    %c0_11 = arith.constant 0 : index
    %c0_12 = arith.constant 0 : index
    %14 = vector.load %arg5[%c0_11, %c0_12] : memref<1x32xf32, #tpu.memory_space<vmem>>, vector<1x32xf32>
    tpu.vector_store %arg5[%c0_11, %c0_12], %13 {strides = array<i32>} : memref<1x32xf32, #tpu.memory_space<vmem>>, vector<1x32xf32>,
    %c0_13 = arith.constant 0 : index
    %c0_14 = arith.constant 0 : index
    %15 = vector.load %arg6[%c0_13, %c0_14] : memref<1x32xf32, #tpu.memory_space<vmem>>, vector<1x32xf32>
    %16 = arith.mulf %8, %8 : vector<512x32xf32>
    %cst_15 = arith.constant dense<0.000000e+00> : vector<32xf32>
    %17 = vector.multi_reduction <add>, %16, %cst_15 [0] : vector<512x32xf32> to vector<32xf32>
    %18 = vector.shape_cast %17 : vector<32xf32> to vector<1x32xf32>
    %19 = arith.addf %15, %18 : vector<1x32xf32>
    %c0_16 = arith.constant 0 : index
    %c0_17 = arith.constant 0 : index
    %20 = vector.load %arg6[%c0_16, %c0_17] : memref<1x32xf32, #tpu.memory_space<vmem>>, vector<1x32xf32>
    tpu.vector_store %arg6[%c0_16, %c0_17], %19 {strides = array<i32>} : memref<1x32xf32, #tpu.memory_space<vmem>>, vector<1x32xf32>,
    return
  }
  func.func @transform_0(%arg0: i32) -> (i32, i32) {
    %c0_i32 = arith.constant 0 : i32
    %c0_i32_0 = arith.constant 0 : i32
    return %arg0, %c0_i32 : i32, i32
  }
  func.func @transform_1(%arg0: i32) -> (i32, i32) {
    %c0_i32 = arith.constant 0 : i32
    %c0_i32_0 = arith.constant 0 : i32
    %c0_i32_1 = arith.constant 0 : i32
    return %c0_i32, %c0_i32_0 : i32, i32
  }
  func.func @transform_2(%arg0: i32) -> (i32, i32) {
    %c0_i32 = arith.constant 0 : i32
    %c0_i32_0 = arith.constant 0 : i32
    %c0_i32_1 = arith.constant 0 : i32
    return %c0_i32, %c0_i32_0 : i32, i32
  }
  func.func @transform_3(%arg0: i32) -> (i32, i32) {
    %c0_i32 = arith.constant 0 : i32
    %c0_i32_0 = arith.constant 0 : i32
    return %arg0, %c0_i32 : i32, i32
  }
  func.func @transform_4(%arg0: i32) -> (i32, i32) {
    %c0_i32 = arith.constant 0 : i32
    %c0_i32_0 = arith.constant 0 : i32
    %c0_i32_1 = arith.constant 0 : i32
    return %c0_i32, %c0_i32_0 : i32, i32
  }
  func.func @transform_5(%arg0: i32) -> (i32, i32) {
    %c0_i32 = arith.constant 0 : i32
    %c0_i32_0 = arith.constant 0 : i32
    %c0_i32_1 = arith.constant 0 : i32
    return %c0_i32, %c0_i32_0 : i32, i32
  }
}

module attributes {stable_mosaic.version = 11 : i64} {
  func.func @_bn_relu_pool_kernel(%arg0: i32, %arg1: memref<4x128x32xf32, #tpu.memory_space<vmem>>, %arg2: memref<1x32xf32, #tpu.memory_space<vmem>>, %arg3: memref<1x32xf32, #tpu.memory_space<vmem>>, %arg4: memref<128x32xf32, #tpu.memory_space<vmem>>) attributes {dimension_semantics = [#tpu.dimension_semantics<parallel>], iteration_bounds = array<i64: 1>, scalar_prefetch = 0 : i64, scratch_operands = 0 : i64, tpu.core_type = #tpu.core_type<tc>, window_params = [{transform_indices = @transform_0, window_bounds = array<i64: 4, 128, 32>}, {pipeline_mode = #tpu.pipeline_mode<synchronous>, transform_indices = @transform_1, window_bounds = array<i64: 1, 32>}, {pipeline_mode = #tpu.pipeline_mode<synchronous>, transform_indices = @transform_2, window_bounds = array<i64: 1, 32>}, {transform_indices = @transform_3, window_bounds = array<i64: 128, 32>}]} {
    %c0 = arith.constant 0 : index
    %c0_0 = arith.constant 0 : index
    %c0_1 = arith.constant 0 : index
    %0 = vector.load %arg1[%c0, %c0_0, %c0_1] : memref<4x128x32xf32, #tpu.memory_space<vmem>>, vector<4x128x32xf32>
    %c0_2 = arith.constant 0 : index
    %c0_3 = arith.constant 0 : index
    %1 = vector.load %arg2[%c0_2, %c0_3] : memref<1x32xf32, #tpu.memory_space<vmem>>, vector<1x32xf32>
    %2 = vector.shape_cast %1 : vector<1x32xf32> to vector<1x1x32xf32>
    %3 = vector.broadcast %2 : vector<1x1x32xf32> to vector<4x128x32xf32>
    %4 = arith.mulf %0, %3 : vector<4x128x32xf32>
    %c0_4 = arith.constant 0 : index
    %c0_5 = arith.constant 0 : index
    %5 = vector.load %arg3[%c0_4, %c0_5] : memref<1x32xf32, #tpu.memory_space<vmem>>, vector<1x32xf32>
    %6 = vector.shape_cast %5 : vector<1x32xf32> to vector<1x1x32xf32>
    %7 = vector.broadcast %6 : vector<1x1x32xf32> to vector<4x128x32xf32>
    %8 = arith.addf %4, %7 : vector<4x128x32xf32>
    %cst = arith.constant 0.000000e+00 : f32
    %9 = vector.broadcast %cst : f32 to vector<4x128x32xf32>
    %10 = arith.maximumf %8, %9 : vector<4x128x32xf32>
    %cst_6 = arith.constant dense<0xFF800000> : vector<128x32xf32>
    %11 = vector.multi_reduction <maximumf>, %10, %cst_6 [0] : vector<4x128x32xf32> to vector<128x32xf32>
    %c0_7 = arith.constant 0 : index
    %c0_8 = arith.constant 0 : index
    %12 = vector.load %arg4[%c0_7, %c0_8] : memref<128x32xf32, #tpu.memory_space<vmem>>, vector<128x32xf32>
    tpu.vector_store %arg4[%c0_7, %c0_8], %11 {strides = array<i32>} : memref<128x32xf32, #tpu.memory_space<vmem>>, vector<128x32xf32>,
    return
  }
  func.func @transform_0(%arg0: i32) -> (i32, i32, i32) {
    %c0_i32 = arith.constant 0 : i32
    %c0_i32_0 = arith.constant 0 : i32
    %c0_i32_1 = arith.constant 0 : i32
    return %c0_i32, %arg0, %c0_i32_0 : i32, i32, i32
  }
  func.func @transform_1(%arg0: i32) -> (i32, i32) {
    %c0_i32 = arith.constant 0 : i32
    %c0_i32_0 = arith.constant 0 : i32
    %c0_i32_1 = arith.constant 0 : i32
    return %c0_i32, %c0_i32_0 : i32, i32
  }
  func.func @transform_2(%arg0: i32) -> (i32, i32) {
    %c0_i32 = arith.constant 0 : i32
    %c0_i32_0 = arith.constant 0 : i32
    %c0_i32_1 = arith.constant 0 : i32
    return %c0_i32, %c0_i32_0 : i32, i32
  }
  func.func @transform_3(%arg0: i32) -> (i32, i32) {
    %c0_i32 = arith.constant 0 : i32
    %c0_i32_0 = arith.constant 0 : i32
    return %arg0, %c0_i32 : i32, i32
  }
}

module attributes {stable_mosaic.version = 11 : i64} {
  func.func @_matmul_bias_stats_kernel(%arg0: i32, %arg1: memref<128x288xf32, #tpu.memory_space<vmem>>, %arg2: memref<288x64xf32, #tpu.memory_space<vmem>>, %arg3: memref<1x64xf32, #tpu.memory_space<vmem>>, %arg4: memref<128x64xf32, #tpu.memory_space<vmem>>, %arg5: memref<1x64xf32, #tpu.memory_space<vmem>>, %arg6: memref<1x64xf32, #tpu.memory_space<vmem>>) attributes {dimension_semantics = [#tpu.dimension_semantics<arbitrary>], iteration_bounds = array<i64: 1>, scalar_prefetch = 0 : i64, scratch_operands = 0 : i64, tpu.core_type = #tpu.core_type<tc>, window_params = [{transform_indices = @transform_0, window_bounds = array<i64: 128, 288>}, {pipeline_mode = #tpu.pipeline_mode<synchronous>, transform_indices = @transform_1, window_bounds = array<i64: 288, 64>}, {pipeline_mode = #tpu.pipeline_mode<synchronous>, transform_indices = @transform_2, window_bounds = array<i64: 1, 64>}, {transform_indices = @transform_3, window_bounds = array<i64: 128, 64>}, {pipeline_mode = #tpu.pipeline_mode<synchronous>, transform_indices = @transform_4, window_bounds = array<i64: 1, 64>}, {pipeline_mode = #tpu.pipeline_mode<synchronous>, transform_indices = @transform_5, window_bounds = array<i64: 1, 64>}]} {
    %c0_i32 = arith.constant 0 : i32
    %0 = arith.cmpi eq, %arg0, %c0_i32 : i32
    %1 = arith.extui %0 : i1 to i32
    %c0_i32_0 = arith.constant 0 : i32
    %2 = arith.cmpi ne, %1, %c0_i32_0 : i32
    scf.if %2 {
      %cst_18 = arith.constant 0.000000e+00 : f32
      %21 = vector.broadcast %cst_18 : f32 to vector<1x64xf32>
      %c0_19 = arith.constant 0 : index
      %c0_20 = arith.constant 0 : index
      %22 = vector.load %arg5[%c0_19, %c0_20] : memref<1x64xf32, #tpu.memory_space<vmem>>, vector<1x64xf32>
      tpu.vector_store %arg5[%c0_19, %c0_20], %21 {strides = array<i32>} : memref<1x64xf32, #tpu.memory_space<vmem>>, vector<1x64xf32>,
      %cst_21 = arith.constant 0.000000e+00 : f32
      %23 = vector.broadcast %cst_21 : f32 to vector<1x64xf32>
      %c0_22 = arith.constant 0 : index
      %c0_23 = arith.constant 0 : index
      %24 = vector.load %arg6[%c0_22, %c0_23] : memref<1x64xf32, #tpu.memory_space<vmem>>, vector<1x64xf32>
      tpu.vector_store %arg6[%c0_22, %c0_23], %23 {strides = array<i32>} : memref<1x64xf32, #tpu.memory_space<vmem>>, vector<1x64xf32>,
    } else {
    }
    %c0 = arith.constant 0 : index
    %c0_1 = arith.constant 0 : index
    %3 = vector.load %arg1[%c0, %c0_1] : memref<128x288xf32, #tpu.memory_space<vmem>>, vector<128x288xf32>
    %c0_2 = arith.constant 0 : index
    %c0_3 = arith.constant 0 : index
    %4 = vector.load %arg2[%c0_2, %c0_3] : memref<288x64xf32, #tpu.memory_space<vmem>>, vector<288x64xf32>
    %cst = arith.constant dense<0.000000e+00> : vector<128x64xf32>
    %5 = tpu.matmul %3, %4, %cst {dimension_numbers = #tpu.dot_dimension_numbers<[1], [0], [0], [1], [0, 0, 1, 1], [], []>} : vector<128x288xf32>, vector<288x64xf32>, vector<128x64xf32> -> vector<128x64xf32>
    %c0_4 = arith.constant 0 : index
    %c0_5 = arith.constant 0 : index
    %6 = vector.load %arg3[%c0_4, %c0_5] : memref<1x64xf32, #tpu.memory_space<vmem>>, vector<1x64xf32>
    %7 = vector.broadcast %6 : vector<1x64xf32> to vector<128x64xf32>
    %8 = arith.addf %5, %7 : vector<128x64xf32>
    %c0_6 = arith.constant 0 : index
    %c0_7 = arith.constant 0 : index
    %9 = vector.load %arg4[%c0_6, %c0_7] : memref<128x64xf32, #tpu.memory_space<vmem>>, vector<128x64xf32>
    tpu.vector_store %arg4[%c0_6, %c0_7], %8 {strides = array<i32>} : memref<128x64xf32, #tpu.memory_space<vmem>>, vector<128x64xf32>,
    %c0_8 = arith.constant 0 : index
    %c0_9 = arith.constant 0 : index
    %10 = vector.load %arg5[%c0_8, %c0_9] : memref<1x64xf32, #tpu.memory_space<vmem>>, vector<1x64xf32>
    %cst_10 = arith.constant dense<0.000000e+00> : vector<64xf32>
    %11 = vector.multi_reduction <add>, %8, %cst_10 [0] : vector<128x64xf32> to vector<64xf32>
    %12 = vector.shape_cast %11 : vector<64xf32> to vector<1x64xf32>
    %13 = arith.addf %10, %12 : vector<1x64xf32>
    %c0_11 = arith.constant 0 : index
    %c0_12 = arith.constant 0 : index
    %14 = vector.load %arg5[%c0_11, %c0_12] : memref<1x64xf32, #tpu.memory_space<vmem>>, vector<1x64xf32>
    tpu.vector_store %arg5[%c0_11, %c0_12], %13 {strides = array<i32>} : memref<1x64xf32, #tpu.memory_space<vmem>>, vector<1x64xf32>,
    %c0_13 = arith.constant 0 : index
    %c0_14 = arith.constant 0 : index
    %15 = vector.load %arg6[%c0_13, %c0_14] : memref<1x64xf32, #tpu.memory_space<vmem>>, vector<1x64xf32>
    %16 = arith.mulf %8, %8 : vector<128x64xf32>
    %cst_15 = arith.constant dense<0.000000e+00> : vector<64xf32>
    %17 = vector.multi_reduction <add>, %16, %cst_15 [0] : vector<128x64xf32> to vector<64xf32>
    %18 = vector.shape_cast %17 : vector<64xf32> to vector<1x64xf32>
    %19 = arith.addf %15, %18 : vector<1x64xf32>
    %c0_16 = arith.constant 0 : index
    %c0_17 = arith.constant 0 : index
    %20 = vector.load %arg6[%c0_16, %c0_17] : memref<1x64xf32, #tpu.memory_space<vmem>>, vector<1x64xf32>
    tpu.vector_store %arg6[%c0_16, %c0_17], %19 {strides = array<i32>} : memref<1x64xf32, #tpu.memory_space<vmem>>, vector<1x64xf32>,
    return
  }
  func.func @transform_0(%arg0: i32) -> (i32, i32) {
    %c0_i32 = arith.constant 0 : i32
    %c0_i32_0 = arith.constant 0 : i32
    return %arg0, %c0_i32 : i32, i32
  }
  func.func @transform_1(%arg0: i32) -> (i32, i32) {
    %c0_i32 = arith.constant 0 : i32
    %c0_i32_0 = arith.constant 0 : i32
    %c0_i32_1 = arith.constant 0 : i32
    return %c0_i32, %c0_i32_0 : i32, i32
  }
  func.func @transform_2(%arg0: i32) -> (i32, i32) {
    %c0_i32 = arith.constant 0 : i32
    %c0_i32_0 = arith.constant 0 : i32
    %c0_i32_1 = arith.constant 0 : i32
    return %c0_i32, %c0_i32_0 : i32, i32
  }
  func.func @transform_3(%arg0: i32) -> (i32, i32) {
    %c0_i32 = arith.constant 0 : i32
    %c0_i32_0 = arith.constant 0 : i32
    return %arg0, %c0_i32 : i32, i32
  }
  func.func @transform_4(%arg0: i32) -> (i32, i32) {
    %c0_i32 = arith.constant 0 : i32
    %c0_i32_0 = arith.constant 0 : i32
    %c0_i32_1 = arith.constant 0 : i32
    return %c0_i32, %c0_i32_0 : i32, i32
  }
  func.func @transform_5(%arg0: i32) -> (i32, i32) {
    %c0_i32 = arith.constant 0 : i32
    %c0_i32_0 = arith.constant 0 : i32
    %c0_i32_1 = arith.constant 0 : i32
    return %c0_i32, %c0_i32_0 : i32, i32
  }
}

module attributes {stable_mosaic.version = 11 : i64} {
  func.func @_bn_relu_pool_kernel(%arg0: i32, %arg1: memref<4x32x64xf32, #tpu.memory_space<vmem>>, %arg2: memref<1x64xf32, #tpu.memory_space<vmem>>, %arg3: memref<1x64xf32, #tpu.memory_space<vmem>>, %arg4: memref<32x64xf32, #tpu.memory_space<vmem>>) attributes {dimension_semantics = [#tpu.dimension_semantics<parallel>], iteration_bounds = array<i64: 1>, scalar_prefetch = 0 : i64, scratch_operands = 0 : i64, tpu.core_type = #tpu.core_type<tc>, window_params = [{transform_indices = @transform_0, window_bounds = array<i64: 4, 32, 64>}, {pipeline_mode = #tpu.pipeline_mode<synchronous>, transform_indices = @transform_1, window_bounds = array<i64: 1, 64>}, {pipeline_mode = #tpu.pipeline_mode<synchronous>, transform_indices = @transform_2, window_bounds = array<i64: 1, 64>}, {transform_indices = @transform_3, window_bounds = array<i64: 32, 64>}]} {
    %c0 = arith.constant 0 : index
    %c0_0 = arith.constant 0 : index
    %c0_1 = arith.constant 0 : index
    %0 = vector.load %arg1[%c0, %c0_0, %c0_1] : memref<4x32x64xf32, #tpu.memory_space<vmem>>, vector<4x32x64xf32>
    %c0_2 = arith.constant 0 : index
    %c0_3 = arith.constant 0 : index
    %1 = vector.load %arg2[%c0_2, %c0_3] : memref<1x64xf32, #tpu.memory_space<vmem>>, vector<1x64xf32>
    %2 = vector.shape_cast %1 : vector<1x64xf32> to vector<1x1x64xf32>
    %3 = vector.broadcast %2 : vector<1x1x64xf32> to vector<4x32x64xf32>
    %4 = arith.mulf %0, %3 : vector<4x32x64xf32>
    %c0_4 = arith.constant 0 : index
    %c0_5 = arith.constant 0 : index
    %5 = vector.load %arg3[%c0_4, %c0_5] : memref<1x64xf32, #tpu.memory_space<vmem>>, vector<1x64xf32>
    %6 = vector.shape_cast %5 : vector<1x64xf32> to vector<1x1x64xf32>
    %7 = vector.broadcast %6 : vector<1x1x64xf32> to vector<4x32x64xf32>
    %8 = arith.addf %4, %7 : vector<4x32x64xf32>
    %cst = arith.constant 0.000000e+00 : f32
    %9 = vector.broadcast %cst : f32 to vector<4x32x64xf32>
    %10 = arith.maximumf %8, %9 : vector<4x32x64xf32>
    %cst_6 = arith.constant dense<0xFF800000> : vector<32x64xf32>
    %11 = vector.multi_reduction <maximumf>, %10, %cst_6 [0] : vector<4x32x64xf32> to vector<32x64xf32>
    %c0_7 = arith.constant 0 : index
    %c0_8 = arith.constant 0 : index
    %12 = vector.load %arg4[%c0_7, %c0_8] : memref<32x64xf32, #tpu.memory_space<vmem>>, vector<32x64xf32>
    tpu.vector_store %arg4[%c0_7, %c0_8], %11 {strides = array<i32>} : memref<32x64xf32, #tpu.memory_space<vmem>>, vector<32x64xf32>,
    return
  }
  func.func @transform_0(%arg0: i32) -> (i32, i32, i32) {
    %c0_i32 = arith.constant 0 : i32
    %c0_i32_0 = arith.constant 0 : i32
    %c0_i32_1 = arith.constant 0 : i32
    return %c0_i32, %arg0, %c0_i32_0 : i32, i32, i32
  }
  func.func @transform_1(%arg0: i32) -> (i32, i32) {
    %c0_i32 = arith.constant 0 : i32
    %c0_i32_0 = arith.constant 0 : i32
    %c0_i32_1 = arith.constant 0 : i32
    return %c0_i32, %c0_i32_0 : i32, i32
  }
  func.func @transform_2(%arg0: i32) -> (i32, i32) {
    %c0_i32 = arith.constant 0 : i32
    %c0_i32_0 = arith.constant 0 : i32
    %c0_i32_1 = arith.constant 0 : i32
    return %c0_i32, %c0_i32_0 : i32, i32
  }
  func.func @transform_3(%arg0: i32) -> (i32, i32) {
    %c0_i32 = arith.constant 0 : i32
    %c0_i32_0 = arith.constant 0 : i32
    return %arg0, %c0_i32 : i32, i32
  }
}

module attributes {stable_mosaic.version = 11 : i64} {
  func.func @_matmul_bias_stats_kernel(%arg0: i32, %arg1: memref<32x576xf32, #tpu.memory_space<vmem>>, %arg2: memref<576x128xf32, #tpu.memory_space<vmem>>, %arg3: memref<1x128xf32, #tpu.memory_space<vmem>>, %arg4: memref<32x128xf32, #tpu.memory_space<vmem>>, %arg5: memref<1x128xf32, #tpu.memory_space<vmem>>, %arg6: memref<1x128xf32, #tpu.memory_space<vmem>>) attributes {dimension_semantics = [#tpu.dimension_semantics<arbitrary>], iteration_bounds = array<i64: 1>, scalar_prefetch = 0 : i64, scratch_operands = 0 : i64, tpu.core_type = #tpu.core_type<tc>, window_params = [{transform_indices = @transform_0, window_bounds = array<i64: 32, 576>}, {pipeline_mode = #tpu.pipeline_mode<synchronous>, transform_indices = @transform_1, window_bounds = array<i64: 576, 128>}, {pipeline_mode = #tpu.pipeline_mode<synchronous>, transform_indices = @transform_2, window_bounds = array<i64: 1, 128>}, {transform_indices = @transform_3, window_bounds = array<i64: 32, 128>}, {pipeline_mode = #tpu.pipeline_mode<synchronous>, transform_indices = @transform_4, window_bounds = array<i64: 1, 128>}, {pipeline_mode = #tpu.pipeline_mode<synchronous>, transform_indices = @transform_5, window_bounds = array<i64: 1, 128>}]} {
    %c0_i32 = arith.constant 0 : i32
    %0 = arith.cmpi eq, %arg0, %c0_i32 : i32
    %1 = arith.extui %0 : i1 to i32
    %c0_i32_0 = arith.constant 0 : i32
    %2 = arith.cmpi ne, %1, %c0_i32_0 : i32
    scf.if %2 {
      %cst_18 = arith.constant 0.000000e+00 : f32
      %21 = vector.broadcast %cst_18 : f32 to vector<1x128xf32>
      %c0_19 = arith.constant 0 : index
      %c0_20 = arith.constant 0 : index
      %22 = vector.load %arg5[%c0_19, %c0_20] : memref<1x128xf32, #tpu.memory_space<vmem>>, vector<1x128xf32>
      tpu.vector_store %arg5[%c0_19, %c0_20], %21 {strides = array<i32>} : memref<1x128xf32, #tpu.memory_space<vmem>>, vector<1x128xf32>,
      %cst_21 = arith.constant 0.000000e+00 : f32
      %23 = vector.broadcast %cst_21 : f32 to vector<1x128xf32>
      %c0_22 = arith.constant 0 : index
      %c0_23 = arith.constant 0 : index
      %24 = vector.load %arg6[%c0_22, %c0_23] : memref<1x128xf32, #tpu.memory_space<vmem>>, vector<1x128xf32>
      tpu.vector_store %arg6[%c0_22, %c0_23], %23 {strides = array<i32>} : memref<1x128xf32, #tpu.memory_space<vmem>>, vector<1x128xf32>,
    } else {
    }
    %c0 = arith.constant 0 : index
    %c0_1 = arith.constant 0 : index
    %3 = vector.load %arg1[%c0, %c0_1] : memref<32x576xf32, #tpu.memory_space<vmem>>, vector<32x576xf32>
    %c0_2 = arith.constant 0 : index
    %c0_3 = arith.constant 0 : index
    %4 = vector.load %arg2[%c0_2, %c0_3] : memref<576x128xf32, #tpu.memory_space<vmem>>, vector<576x128xf32>
    %cst = arith.constant dense<0.000000e+00> : vector<32x128xf32>
    %5 = tpu.matmul %3, %4, %cst {dimension_numbers = #tpu.dot_dimension_numbers<[1], [0], [0], [1], [0, 0, 1, 1], [], []>} : vector<32x576xf32>, vector<576x128xf32>, vector<32x128xf32> -> vector<32x128xf32>
    %c0_4 = arith.constant 0 : index
    %c0_5 = arith.constant 0 : index
    %6 = vector.load %arg3[%c0_4, %c0_5] : memref<1x128xf32, #tpu.memory_space<vmem>>, vector<1x128xf32>
    %7 = vector.broadcast %6 : vector<1x128xf32> to vector<32x128xf32>
    %8 = arith.addf %5, %7 : vector<32x128xf32>
    %c0_6 = arith.constant 0 : index
    %c0_7 = arith.constant 0 : index
    %9 = vector.load %arg4[%c0_6, %c0_7] : memref<32x128xf32, #tpu.memory_space<vmem>>, vector<32x128xf32>
    tpu.vector_store %arg4[%c0_6, %c0_7], %8 {strides = array<i32>} : memref<32x128xf32, #tpu.memory_space<vmem>>, vector<32x128xf32>,
    %c0_8 = arith.constant 0 : index
    %c0_9 = arith.constant 0 : index
    %10 = vector.load %arg5[%c0_8, %c0_9] : memref<1x128xf32, #tpu.memory_space<vmem>>, vector<1x128xf32>
    %cst_10 = arith.constant dense<0.000000e+00> : vector<128xf32>
    %11 = vector.multi_reduction <add>, %8, %cst_10 [0] : vector<32x128xf32> to vector<128xf32>
    %12 = vector.shape_cast %11 : vector<128xf32> to vector<1x128xf32>
    %13 = arith.addf %10, %12 : vector<1x128xf32>
    %c0_11 = arith.constant 0 : index
    %c0_12 = arith.constant 0 : index
    %14 = vector.load %arg5[%c0_11, %c0_12] : memref<1x128xf32, #tpu.memory_space<vmem>>, vector<1x128xf32>
    tpu.vector_store %arg5[%c0_11, %c0_12], %13 {strides = array<i32>} : memref<1x128xf32, #tpu.memory_space<vmem>>, vector<1x128xf32>,
    %c0_13 = arith.constant 0 : index
    %c0_14 = arith.constant 0 : index
    %15 = vector.load %arg6[%c0_13, %c0_14] : memref<1x128xf32, #tpu.memory_space<vmem>>, vector<1x128xf32>
    %16 = arith.mulf %8, %8 : vector<32x128xf32>
    %cst_15 = arith.constant dense<0.000000e+00> : vector<128xf32>
    %17 = vector.multi_reduction <add>, %16, %cst_15 [0] : vector<32x128xf32> to vector<128xf32>
    %18 = vector.shape_cast %17 : vector<128xf32> to vector<1x128xf32>
    %19 = arith.addf %15, %18 : vector<1x128xf32>
    %c0_16 = arith.constant 0 : index
    %c0_17 = arith.constant 0 : index
    %20 = vector.load %arg6[%c0_16, %c0_17] : memref<1x128xf32, #tpu.memory_space<vmem>>, vector<1x128xf32>
    tpu.vector_store %arg6[%c0_16, %c0_17], %19 {strides = array<i32>} : memref<1x128xf32, #tpu.memory_space<vmem>>, vector<1x128xf32>,
    return
  }
  func.func @transform_0(%arg0: i32) -> (i32, i32) {
    %c0_i32 = arith.constant 0 : i32
    %c0_i32_0 = arith.constant 0 : i32
    return %arg0, %c0_i32 : i32, i32
  }
  func.func @transform_1(%arg0: i32) -> (i32, i32) {
    %c0_i32 = arith.constant 0 : i32
    %c0_i32_0 = arith.constant 0 : i32
    %c0_i32_1 = arith.constant 0 : i32
    return %c0_i32, %c0_i32_0 : i32, i32
  }
  func.func @transform_2(%arg0: i32) -> (i32, i32) {
    %c0_i32 = arith.constant 0 : i32
    %c0_i32_0 = arith.constant 0 : i32
    %c0_i32_1 = arith.constant 0 : i32
    return %c0_i32, %c0_i32_0 : i32, i32
  }
  func.func @transform_3(%arg0: i32) -> (i32, i32) {
    %c0_i32 = arith.constant 0 : i32
    %c0_i32_0 = arith.constant 0 : i32
    return %arg0, %c0_i32 : i32, i32
  }
  func.func @transform_4(%arg0: i32) -> (i32, i32) {
    %c0_i32 = arith.constant 0 : i32
    %c0_i32_0 = arith.constant 0 : i32
    %c0_i32_1 = arith.constant 0 : i32
    return %c0_i32, %c0_i32_0 : i32, i32
  }
  func.func @transform_5(%arg0: i32) -> (i32, i32) {
    %c0_i32 = arith.constant 0 : i32
    %c0_i32_0 = arith.constant 0 : i32
    %c0_i32_1 = arith.constant 0 : i32
    return %c0_i32, %c0_i32_0 : i32, i32
  }
}

module attributes {stable_mosaic.version = 11 : i64} {
  func.func @_bn_relu_pool_kernel(%arg0: i32, %arg1: memref<4x8x128xf32, #tpu.memory_space<vmem>>, %arg2: memref<1x128xf32, #tpu.memory_space<vmem>>, %arg3: memref<1x128xf32, #tpu.memory_space<vmem>>, %arg4: memref<8x128xf32, #tpu.memory_space<vmem>>) attributes {dimension_semantics = [#tpu.dimension_semantics<parallel>], iteration_bounds = array<i64: 1>, scalar_prefetch = 0 : i64, scratch_operands = 0 : i64, tpu.core_type = #tpu.core_type<tc>, window_params = [{transform_indices = @transform_0, window_bounds = array<i64: 4, 8, 128>}, {pipeline_mode = #tpu.pipeline_mode<synchronous>, transform_indices = @transform_1, window_bounds = array<i64: 1, 128>}, {pipeline_mode = #tpu.pipeline_mode<synchronous>, transform_indices = @transform_2, window_bounds = array<i64: 1, 128>}, {transform_indices = @transform_3, window_bounds = array<i64: 8, 128>}]} {
    %c0 = arith.constant 0 : index
    %c0_0 = arith.constant 0 : index
    %c0_1 = arith.constant 0 : index
    %0 = vector.load %arg1[%c0, %c0_0, %c0_1] : memref<4x8x128xf32, #tpu.memory_space<vmem>>, vector<4x8x128xf32>
    %c0_2 = arith.constant 0 : index
    %c0_3 = arith.constant 0 : index
    %1 = vector.load %arg2[%c0_2, %c0_3] : memref<1x128xf32, #tpu.memory_space<vmem>>, vector<1x128xf32>
    %2 = vector.shape_cast %1 : vector<1x128xf32> to vector<1x1x128xf32>
    %3 = vector.broadcast %2 : vector<1x1x128xf32> to vector<4x8x128xf32>
    %4 = arith.mulf %0, %3 : vector<4x8x128xf32>
    %c0_4 = arith.constant 0 : index
    %c0_5 = arith.constant 0 : index
    %5 = vector.load %arg3[%c0_4, %c0_5] : memref<1x128xf32, #tpu.memory_space<vmem>>, vector<1x128xf32>
    %6 = vector.shape_cast %5 : vector<1x128xf32> to vector<1x1x128xf32>
    %7 = vector.broadcast %6 : vector<1x1x128xf32> to vector<4x8x128xf32>
    %8 = arith.addf %4, %7 : vector<4x8x128xf32>
    %cst = arith.constant 0.000000e+00 : f32
    %9 = vector.broadcast %cst : f32 to vector<4x8x128xf32>
    %10 = arith.maximumf %8, %9 : vector<4x8x128xf32>
    %cst_6 = arith.constant dense<0xFF800000> : vector<8x128xf32>
    %11 = vector.multi_reduction <maximumf>, %10, %cst_6 [0] : vector<4x8x128xf32> to vector<8x128xf32>
    %c0_7 = arith.constant 0 : index
    %c0_8 = arith.constant 0 : index
    %12 = vector.load %arg4[%c0_7, %c0_8] : memref<8x128xf32, #tpu.memory_space<vmem>>, vector<8x128xf32>
    tpu.vector_store %arg4[%c0_7, %c0_8], %11 {strides = array<i32>} : memref<8x128xf32, #tpu.memory_space<vmem>>, vector<8x128xf32>,
    return
  }
  func.func @transform_0(%arg0: i32) -> (i32, i32, i32) {
    %c0_i32 = arith.constant 0 : i32
    %c0_i32_0 = arith.constant 0 : i32
    %c0_i32_1 = arith.constant 0 : i32
    return %c0_i32, %arg0, %c0_i32_0 : i32, i32, i32
  }
  func.func @transform_1(%arg0: i32) -> (i32, i32) {
    %c0_i32 = arith.constant 0 : i32
    %c0_i32_0 = arith.constant 0 : i32
    %c0_i32_1 = arith.constant 0 : i32
    return %c0_i32, %c0_i32_0 : i32, i32
  }
  func.func @transform_2(%arg0: i32) -> (i32, i32) {
    %c0_i32 = arith.constant 0 : i32
    %c0_i32_0 = arith.constant 0 : i32
    %c0_i32_1 = arith.constant 0 : i32
    return %c0_i32, %c0_i32_0 : i32, i32
  }
  func.func @transform_3(%arg0: i32) -> (i32, i32) {
    %c0_i32 = arith.constant 0 : i32
    %c0_i32_0 = arith.constant 0 : i32
    return %arg0, %c0_i32 : i32, i32
  }
}

module attributes {stable_mosaic.version = 11 : i64} {
  func.func @_matmul_bias_stats_kernel(%arg0: i32, %arg1: memref<8x128xf32, #tpu.memory_space<vmem>>, %arg2: memref<128x256xf32, #tpu.memory_space<vmem>>, %arg3: memref<1x256xf32, #tpu.memory_space<vmem>>, %arg4: memref<8x256xf32, #tpu.memory_space<vmem>>, %arg5: memref<1x256xf32, #tpu.memory_space<vmem>>, %arg6: memref<1x256xf32, #tpu.memory_space<vmem>>) attributes {dimension_semantics = [#tpu.dimension_semantics<arbitrary>], iteration_bounds = array<i64: 1>, scalar_prefetch = 0 : i64, scratch_operands = 0 : i64, tpu.core_type = #tpu.core_type<tc>, window_params = [{transform_indices = @transform_0, window_bounds = array<i64: 8, 128>}, {pipeline_mode = #tpu.pipeline_mode<synchronous>, transform_indices = @transform_1, window_bounds = array<i64: 128, 256>}, {pipeline_mode = #tpu.pipeline_mode<synchronous>, transform_indices = @transform_2, window_bounds = array<i64: 1, 256>}, {transform_indices = @transform_3, window_bounds = array<i64: 8, 256>}, {pipeline_mode = #tpu.pipeline_mode<synchronous>, transform_indices = @transform_4, window_bounds = array<i64: 1, 256>}, {pipeline_mode = #tpu.pipeline_mode<synchronous>, transform_indices = @transform_5, window_bounds = array<i64: 1, 256>}]} {
    %c0_i32 = arith.constant 0 : i32
    %0 = arith.cmpi eq, %arg0, %c0_i32 : i32
    %1 = arith.extui %0 : i1 to i32
    %c0_i32_0 = arith.constant 0 : i32
    %2 = arith.cmpi ne, %1, %c0_i32_0 : i32
    scf.if %2 {
      %cst_18 = arith.constant 0.000000e+00 : f32
      %21 = vector.broadcast %cst_18 : f32 to vector<1x256xf32>
      %c0_19 = arith.constant 0 : index
      %c0_20 = arith.constant 0 : index
      %22 = vector.load %arg5[%c0_19, %c0_20] : memref<1x256xf32, #tpu.memory_space<vmem>>, vector<1x256xf32>
      tpu.vector_store %arg5[%c0_19, %c0_20], %21 {strides = array<i32>} : memref<1x256xf32, #tpu.memory_space<vmem>>, vector<1x256xf32>,
      %cst_21 = arith.constant 0.000000e+00 : f32
      %23 = vector.broadcast %cst_21 : f32 to vector<1x256xf32>
      %c0_22 = arith.constant 0 : index
      %c0_23 = arith.constant 0 : index
      %24 = vector.load %arg6[%c0_22, %c0_23] : memref<1x256xf32, #tpu.memory_space<vmem>>, vector<1x256xf32>
      tpu.vector_store %arg6[%c0_22, %c0_23], %23 {strides = array<i32>} : memref<1x256xf32, #tpu.memory_space<vmem>>, vector<1x256xf32>,
    } else {
    }
    %c0 = arith.constant 0 : index
    %c0_1 = arith.constant 0 : index
    %3 = vector.load %arg1[%c0, %c0_1] : memref<8x128xf32, #tpu.memory_space<vmem>>, vector<8x128xf32>
    %c0_2 = arith.constant 0 : index
    %c0_3 = arith.constant 0 : index
    %4 = vector.load %arg2[%c0_2, %c0_3] : memref<128x256xf32, #tpu.memory_space<vmem>>, vector<128x256xf32>
    %cst = arith.constant dense<0.000000e+00> : vector<8x256xf32>
    %5 = tpu.matmul %3, %4, %cst {dimension_numbers = #tpu.dot_dimension_numbers<[1], [0], [0], [1], [0, 0, 1, 1], [], []>} : vector<8x128xf32>, vector<128x256xf32>, vector<8x256xf32> -> vector<8x256xf32>
    %c0_4 = arith.constant 0 : index
    %c0_5 = arith.constant 0 : index
    %6 = vector.load %arg3[%c0_4, %c0_5] : memref<1x256xf32, #tpu.memory_space<vmem>>, vector<1x256xf32>
    %7 = vector.broadcast %6 : vector<1x256xf32> to vector<8x256xf32>
    %8 = arith.addf %5, %7 : vector<8x256xf32>
    %c0_6 = arith.constant 0 : index
    %c0_7 = arith.constant 0 : index
    %9 = vector.load %arg4[%c0_6, %c0_7] : memref<8x256xf32, #tpu.memory_space<vmem>>, vector<8x256xf32>
    tpu.vector_store %arg4[%c0_6, %c0_7], %8 {strides = array<i32>} : memref<8x256xf32, #tpu.memory_space<vmem>>, vector<8x256xf32>,
    %c0_8 = arith.constant 0 : index
    %c0_9 = arith.constant 0 : index
    %10 = vector.load %arg5[%c0_8, %c0_9] : memref<1x256xf32, #tpu.memory_space<vmem>>, vector<1x256xf32>
    %cst_10 = arith.constant dense<0.000000e+00> : vector<256xf32>
    %11 = vector.multi_reduction <add>, %8, %cst_10 [0] : vector<8x256xf32> to vector<256xf32>
    %12 = vector.shape_cast %11 : vector<256xf32> to vector<1x256xf32>
    %13 = arith.addf %10, %12 : vector<1x256xf32>
    %c0_11 = arith.constant 0 : index
    %c0_12 = arith.constant 0 : index
    %14 = vector.load %arg5[%c0_11, %c0_12] : memref<1x256xf32, #tpu.memory_space<vmem>>, vector<1x256xf32>
    tpu.vector_store %arg5[%c0_11, %c0_12], %13 {strides = array<i32>} : memref<1x256xf32, #tpu.memory_space<vmem>>, vector<1x256xf32>,
    %c0_13 = arith.constant 0 : index
    %c0_14 = arith.constant 0 : index
    %15 = vector.load %arg6[%c0_13, %c0_14] : memref<1x256xf32, #tpu.memory_space<vmem>>, vector<1x256xf32>
    %16 = arith.mulf %8, %8 : vector<8x256xf32>
    %cst_15 = arith.constant dense<0.000000e+00> : vector<256xf32>
    %17 = vector.multi_reduction <add>, %16, %cst_15 [0] : vector<8x256xf32> to vector<256xf32>
    %18 = vector.shape_cast %17 : vector<256xf32> to vector<1x256xf32>
    %19 = arith.addf %15, %18 : vector<1x256xf32>
    %c0_16 = arith.constant 0 : index
    %c0_17 = arith.constant 0 : index
    %20 = vector.load %arg6[%c0_16, %c0_17] : memref<1x256xf32, #tpu.memory_space<vmem>>, vector<1x256xf32>
    tpu.vector_store %arg6[%c0_16, %c0_17], %19 {strides = array<i32>} : memref<1x256xf32, #tpu.memory_space<vmem>>, vector<1x256xf32>,
    return
  }
  func.func @transform_0(%arg0: i32) -> (i32, i32) {
    %c0_i32 = arith.constant 0 : i32
    %c0_i32_0 = arith.constant 0 : i32
    return %arg0, %c0_i32 : i32, i32
  }
  func.func @transform_1(%arg0: i32) -> (i32, i32) {
    %c0_i32 = arith.constant 0 : i32
    %c0_i32_0 = arith.constant 0 : i32
    %c0_i32_1 = arith.constant 0 : i32
    return %c0_i32, %c0_i32_0 : i32, i32
  }
  func.func @transform_2(%arg0: i32) -> (i32, i32) {
    %c0_i32 = arith.constant 0 : i32
    %c0_i32_0 = arith.constant 0 : i32
    %c0_i32_1 = arith.constant 0 : i32
    return %c0_i32, %c0_i32_0 : i32, i32
  }
  func.func @transform_3(%arg0: i32) -> (i32, i32) {
    %c0_i32 = arith.constant 0 : i32
    %c0_i32_0 = arith.constant 0 : i32
    return %arg0, %c0_i32 : i32, i32
  }
  func.func @transform_4(%arg0: i32) -> (i32, i32) {
    %c0_i32 = arith.constant 0 : i32
    %c0_i32_0 = arith.constant 0 : i32
    %c0_i32_1 = arith.constant 0 : i32
    return %c0_i32, %c0_i32_0 : i32, i32
  }
  func.func @transform_5(%arg0: i32) -> (i32, i32) {
    %c0_i32 = arith.constant 0 : i32
    %c0_i32_0 = arith.constant 0 : i32
    %c0_i32_1 = arith.constant 0 : i32
    return %c0_i32, %c0_i32_0 : i32, i32
  }
}

module attributes {stable_mosaic.version = 11 : i64} {
  func.func @_scale_shift_relu_kernel(%arg0: i32, %arg1: memref<8x256xf32, #tpu.memory_space<vmem>>, %arg2: memref<1x256xf32, #tpu.memory_space<vmem>>, %arg3: memref<1x256xf32, #tpu.memory_space<vmem>>, %arg4: memref<8x256xf32, #tpu.memory_space<vmem>>) attributes {dimension_semantics = [#tpu.dimension_semantics<parallel>], iteration_bounds = array<i64: 1>, scalar_prefetch = 0 : i64, scratch_operands = 0 : i64, tpu.core_type = #tpu.core_type<tc>, window_params = [{transform_indices = @transform_0, window_bounds = array<i64: 8, 256>}, {pipeline_mode = #tpu.pipeline_mode<synchronous>, transform_indices = @transform_1, window_bounds = array<i64: 1, 256>}, {pipeline_mode = #tpu.pipeline_mode<synchronous>, transform_indices = @transform_2, window_bounds = array<i64: 1, 256>}, {transform_indices = @transform_3, window_bounds = array<i64: 8, 256>}]} {
    %c0 = arith.constant 0 : index
    %c0_0 = arith.constant 0 : index
    %0 = vector.load %arg1[%c0, %c0_0] : memref<8x256xf32, #tpu.memory_space<vmem>>, vector<8x256xf32>
    %c0_1 = arith.constant 0 : index
    %c0_2 = arith.constant 0 : index
    %1 = vector.load %arg2[%c0_1, %c0_2] : memref<1x256xf32, #tpu.memory_space<vmem>>, vector<1x256xf32>
    %2 = vector.broadcast %1 : vector<1x256xf32> to vector<8x256xf32>
    %3 = arith.mulf %0, %2 : vector<8x256xf32>
    %c0_3 = arith.constant 0 : index
    %c0_4 = arith.constant 0 : index
    %4 = vector.load %arg3[%c0_3, %c0_4] : memref<1x256xf32, #tpu.memory_space<vmem>>, vector<1x256xf32>
    %5 = vector.broadcast %4 : vector<1x256xf32> to vector<8x256xf32>
    %6 = arith.addf %3, %5 : vector<8x256xf32>
    %cst = arith.constant 0.000000e+00 : f32
    %7 = vector.broadcast %cst : f32 to vector<8x256xf32>
    %8 = arith.maximumf %6, %7 : vector<8x256xf32>
    %c0_5 = arith.constant 0 : index
    %c0_6 = arith.constant 0 : index
    %9 = vector.load %arg4[%c0_5, %c0_6] : memref<8x256xf32, #tpu.memory_space<vmem>>, vector<8x256xf32>
    tpu.vector_store %arg4[%c0_5, %c0_6], %8 {strides = array<i32>} : memref<8x256xf32, #tpu.memory_space<vmem>>, vector<8x256xf32>,
    return
  }
  func.func @transform_0(%arg0: i32) -> (i32, i32) {
    %c0_i32 = arith.constant 0 : i32
    %c0_i32_0 = arith.constant 0 : i32
    return %arg0, %c0_i32 : i32, i32
  }
  func.func @transform_1(%arg0: i32) -> (i32, i32) {
    %c0_i32 = arith.constant 0 : i32
    %c0_i32_0 = arith.constant 0 : i32
    %c0_i32_1 = arith.constant 0 : i32
    return %c0_i32, %c0_i32_0 : i32, i32
  }
  func.func @transform_2(%arg0: i32) -> (i32, i32) {
    %c0_i32 = arith.constant 0 : i32
    %c0_i32_0 = arith.constant 0 : i32
    %c0_i32_1 = arith.constant 0 : i32
    return %c0_i32, %c0_i32_0 : i32, i32
  }
  func.func @transform_3(%arg0: i32) -> (i32, i32) {
    %c0_i32 = arith.constant 0 : i32
    %c0_i32_0 = arith.constant 0 : i32
    return %arg0, %c0_i32 : i32, i32
  }
}

module attributes {stable_mosaic.version = 11 : i64} {
  func.func @_matmul_bias_stats_kernel(%arg0: i32, %arg1: memref<32x64xf32, #tpu.memory_space<vmem>>, %arg2: memref<64x128xf32, #tpu.memory_space<vmem>>, %arg3: memref<1x128xf32, #tpu.memory_space<vmem>>, %arg4: memref<32x128xf32, #tpu.memory_space<vmem>>, %arg5: memref<1x128xf32, #tpu.memory_space<vmem>>, %arg6: memref<1x128xf32, #tpu.memory_space<vmem>>) attributes {dimension_semantics = [#tpu.dimension_semantics<arbitrary>], iteration_bounds = array<i64: 1>, scalar_prefetch = 0 : i64, scratch_operands = 0 : i64, tpu.core_type = #tpu.core_type<tc>, window_params = [{transform_indices = @transform_0, window_bounds = array<i64: 32, 64>}, {pipeline_mode = #tpu.pipeline_mode<synchronous>, transform_indices = @transform_1, window_bounds = array<i64: 64, 128>}, {pipeline_mode = #tpu.pipeline_mode<synchronous>, transform_indices = @transform_2, window_bounds = array<i64: 1, 128>}, {transform_indices = @transform_3, window_bounds = array<i64: 32, 128>}, {pipeline_mode = #tpu.pipeline_mode<synchronous>, transform_indices = @transform_4, window_bounds = array<i64: 1, 128>}, {pipeline_mode = #tpu.pipeline_mode<synchronous>, transform_indices = @transform_5, window_bounds = array<i64: 1, 128>}]} {
    %c0_i32 = arith.constant 0 : i32
    %0 = arith.cmpi eq, %arg0, %c0_i32 : i32
    %1 = arith.extui %0 : i1 to i32
    %c0_i32_0 = arith.constant 0 : i32
    %2 = arith.cmpi ne, %1, %c0_i32_0 : i32
    scf.if %2 {
      %cst_18 = arith.constant 0.000000e+00 : f32
      %21 = vector.broadcast %cst_18 : f32 to vector<1x128xf32>
      %c0_19 = arith.constant 0 : index
      %c0_20 = arith.constant 0 : index
      %22 = vector.load %arg5[%c0_19, %c0_20] : memref<1x128xf32, #tpu.memory_space<vmem>>, vector<1x128xf32>
      tpu.vector_store %arg5[%c0_19, %c0_20], %21 {strides = array<i32>} : memref<1x128xf32, #tpu.memory_space<vmem>>, vector<1x128xf32>,
      %cst_21 = arith.constant 0.000000e+00 : f32
      %23 = vector.broadcast %cst_21 : f32 to vector<1x128xf32>
      %c0_22 = arith.constant 0 : index
      %c0_23 = arith.constant 0 : index
      %24 = vector.load %arg6[%c0_22, %c0_23] : memref<1x128xf32, #tpu.memory_space<vmem>>, vector<1x128xf32>
      tpu.vector_store %arg6[%c0_22, %c0_23], %23 {strides = array<i32>} : memref<1x128xf32, #tpu.memory_space<vmem>>, vector<1x128xf32>,
    } else {
    }
    %c0 = arith.constant 0 : index
    %c0_1 = arith.constant 0 : index
    %3 = vector.load %arg1[%c0, %c0_1] : memref<32x64xf32, #tpu.memory_space<vmem>>, vector<32x64xf32>
    %c0_2 = arith.constant 0 : index
    %c0_3 = arith.constant 0 : index
    %4 = vector.load %arg2[%c0_2, %c0_3] : memref<64x128xf32, #tpu.memory_space<vmem>>, vector<64x128xf32>
    %cst = arith.constant dense<0.000000e+00> : vector<32x128xf32>
    %5 = tpu.matmul %3, %4, %cst {dimension_numbers = #tpu.dot_dimension_numbers<[1], [0], [0], [1], [0, 0, 1, 1], [], []>} : vector<32x64xf32>, vector<64x128xf32>, vector<32x128xf32> -> vector<32x128xf32>
    %c0_4 = arith.constant 0 : index
    %c0_5 = arith.constant 0 : index
    %6 = vector.load %arg3[%c0_4, %c0_5] : memref<1x128xf32, #tpu.memory_space<vmem>>, vector<1x128xf32>
    %7 = vector.broadcast %6 : vector<1x128xf32> to vector<32x128xf32>
    %8 = arith.addf %5, %7 : vector<32x128xf32>
    %c0_6 = arith.constant 0 : index
    %c0_7 = arith.constant 0 : index
    %9 = vector.load %arg4[%c0_6, %c0_7] : memref<32x128xf32, #tpu.memory_space<vmem>>, vector<32x128xf32>
    tpu.vector_store %arg4[%c0_6, %c0_7], %8 {strides = array<i32>} : memref<32x128xf32, #tpu.memory_space<vmem>>, vector<32x128xf32>,
    %c0_8 = arith.constant 0 : index
    %c0_9 = arith.constant 0 : index
    %10 = vector.load %arg5[%c0_8, %c0_9] : memref<1x128xf32, #tpu.memory_space<vmem>>, vector<1x128xf32>
    %cst_10 = arith.constant dense<0.000000e+00> : vector<128xf32>
    %11 = vector.multi_reduction <add>, %8, %cst_10 [0] : vector<32x128xf32> to vector<128xf32>
    %12 = vector.shape_cast %11 : vector<128xf32> to vector<1x128xf32>
    %13 = arith.addf %10, %12 : vector<1x128xf32>
    %c0_11 = arith.constant 0 : index
    %c0_12 = arith.constant 0 : index
    %14 = vector.load %arg5[%c0_11, %c0_12] : memref<1x128xf32, #tpu.memory_space<vmem>>, vector<1x128xf32>
    tpu.vector_store %arg5[%c0_11, %c0_12], %13 {strides = array<i32>} : memref<1x128xf32, #tpu.memory_space<vmem>>, vector<1x128xf32>,
    %c0_13 = arith.constant 0 : index
    %c0_14 = arith.constant 0 : index
    %15 = vector.load %arg6[%c0_13, %c0_14] : memref<1x128xf32, #tpu.memory_space<vmem>>, vector<1x128xf32>
    %16 = arith.mulf %8, %8 : vector<32x128xf32>
    %cst_15 = arith.constant dense<0.000000e+00> : vector<128xf32>
    %17 = vector.multi_reduction <add>, %16, %cst_15 [0] : vector<32x128xf32> to vector<128xf32>
    %18 = vector.shape_cast %17 : vector<128xf32> to vector<1x128xf32>
    %19 = arith.addf %15, %18 : vector<1x128xf32>
    %c0_16 = arith.constant 0 : index
    %c0_17 = arith.constant 0 : index
    %20 = vector.load %arg6[%c0_16, %c0_17] : memref<1x128xf32, #tpu.memory_space<vmem>>, vector<1x128xf32>
    tpu.vector_store %arg6[%c0_16, %c0_17], %19 {strides = array<i32>} : memref<1x128xf32, #tpu.memory_space<vmem>>, vector<1x128xf32>,
    return
  }
  func.func @transform_0(%arg0: i32) -> (i32, i32) {
    %c0_i32 = arith.constant 0 : i32
    %c0_i32_0 = arith.constant 0 : i32
    return %arg0, %c0_i32 : i32, i32
  }
  func.func @transform_1(%arg0: i32) -> (i32, i32) {
    %c0_i32 = arith.constant 0 : i32
    %c0_i32_0 = arith.constant 0 : i32
    %c0_i32_1 = arith.constant 0 : i32
    return %c0_i32, %c0_i32_0 : i32, i32
  }
  func.func @transform_2(%arg0: i32) -> (i32, i32) {
    %c0_i32 = arith.constant 0 : i32
    %c0_i32_0 = arith.constant 0 : i32
    %c0_i32_1 = arith.constant 0 : i32
    return %c0_i32, %c0_i32_0 : i32, i32
  }
  func.func @transform_3(%arg0: i32) -> (i32, i32) {
    %c0_i32 = arith.constant 0 : i32
    %c0_i32_0 = arith.constant 0 : i32
    return %arg0, %c0_i32 : i32, i32
  }
  func.func @transform_4(%arg0: i32) -> (i32, i32) {
    %c0_i32 = arith.constant 0 : i32
    %c0_i32_0 = arith.constant 0 : i32
    %c0_i32_1 = arith.constant 0 : i32
    return %c0_i32, %c0_i32_0 : i32, i32
  }
  func.func @transform_5(%arg0: i32) -> (i32, i32) {
    %c0_i32 = arith.constant 0 : i32
    %c0_i32_0 = arith.constant 0 : i32
    %c0_i32_1 = arith.constant 0 : i32
    return %c0_i32, %c0_i32_0 : i32, i32
  }
}

module attributes {stable_mosaic.version = 11 : i64} {
  func.func @_scale_shift_relu_kernel(%arg0: i32, %arg1: memref<32x128xf32, #tpu.memory_space<vmem>>, %arg2: memref<1x128xf32, #tpu.memory_space<vmem>>, %arg3: memref<1x128xf32, #tpu.memory_space<vmem>>, %arg4: memref<32x128xf32, #tpu.memory_space<vmem>>) attributes {dimension_semantics = [#tpu.dimension_semantics<parallel>], iteration_bounds = array<i64: 1>, scalar_prefetch = 0 : i64, scratch_operands = 0 : i64, tpu.core_type = #tpu.core_type<tc>, window_params = [{transform_indices = @transform_0, window_bounds = array<i64: 32, 128>}, {pipeline_mode = #tpu.pipeline_mode<synchronous>, transform_indices = @transform_1, window_bounds = array<i64: 1, 128>}, {pipeline_mode = #tpu.pipeline_mode<synchronous>, transform_indices = @transform_2, window_bounds = array<i64: 1, 128>}, {transform_indices = @transform_3, window_bounds = array<i64: 32, 128>}]} {
    %c0 = arith.constant 0 : index
    %c0_0 = arith.constant 0 : index
    %0 = vector.load %arg1[%c0, %c0_0] : memref<32x128xf32, #tpu.memory_space<vmem>>, vector<32x128xf32>
    %c0_1 = arith.constant 0 : index
    %c0_2 = arith.constant 0 : index
    %1 = vector.load %arg2[%c0_1, %c0_2] : memref<1x128xf32, #tpu.memory_space<vmem>>, vector<1x128xf32>
    %2 = vector.broadcast %1 : vector<1x128xf32> to vector<32x128xf32>
    %3 = arith.mulf %0, %2 : vector<32x128xf32>
    %c0_3 = arith.constant 0 : index
    %c0_4 = arith.constant 0 : index
    %4 = vector.load %arg3[%c0_3, %c0_4] : memref<1x128xf32, #tpu.memory_space<vmem>>, vector<1x128xf32>
    %5 = vector.broadcast %4 : vector<1x128xf32> to vector<32x128xf32>
    %6 = arith.addf %3, %5 : vector<32x128xf32>
    %cst = arith.constant 0.000000e+00 : f32
    %7 = vector.broadcast %cst : f32 to vector<32x128xf32>
    %8 = arith.maximumf %6, %7 : vector<32x128xf32>
    %c0_5 = arith.constant 0 : index
    %c0_6 = arith.constant 0 : index
    %9 = vector.load %arg4[%c0_5, %c0_6] : memref<32x128xf32, #tpu.memory_space<vmem>>, vector<32x128xf32>
    tpu.vector_store %arg4[%c0_5, %c0_6], %8 {strides = array<i32>} : memref<32x128xf32, #tpu.memory_space<vmem>>, vector<32x128xf32>,
    return
  }
  func.func @transform_0(%arg0: i32) -> (i32, i32) {
    %c0_i32 = arith.constant 0 : i32
    %c0_i32_0 = arith.constant 0 : i32
    return %arg0, %c0_i32 : i32, i32
  }
  func.func @transform_1(%arg0: i32) -> (i32, i32) {
    %c0_i32 = arith.constant 0 : i32
    %c0_i32_0 = arith.constant 0 : i32
    %c0_i32_1 = arith.constant 0 : i32
    return %c0_i32, %c0_i32_0 : i32, i32
  }
  func.func @transform_2(%arg0: i32) -> (i32, i32) {
    %c0_i32 = arith.constant 0 : i32
    %c0_i32_0 = arith.constant 0 : i32
    %c0_i32_1 = arith.constant 0 : i32
    return %c0_i32, %c0_i32_0 : i32, i32
  }
  func.func @transform_3(%arg0: i32) -> (i32, i32) {
    %c0_i32 = arith.constant 0 : i32
    %c0_i32_0 = arith.constant 0 : i32
    return %arg0, %c0_i32 : i32, i32
  }
}

module attributes {stable_mosaic.version = 11 : i64} {
  func.func @_matmul_bias_sigmoid_kernel(%arg0: i32, %arg1: memref<128x32xf32, #tpu.memory_space<vmem>>, %arg2: memref<32x12xf32, #tpu.memory_space<vmem>>, %arg3: memref<1x12xf32, #tpu.memory_space<vmem>>, %arg4: memref<128x12xf32, #tpu.memory_space<vmem>>) attributes {dimension_semantics = [#tpu.dimension_semantics<parallel>], iteration_bounds = array<i64: 1>, scalar_prefetch = 0 : i64, scratch_operands = 0 : i64, tpu.core_type = #tpu.core_type<tc>, window_params = [{transform_indices = @transform_0, window_bounds = array<i64: 128, 32>}, {pipeline_mode = #tpu.pipeline_mode<synchronous>, transform_indices = @transform_1, window_bounds = array<i64: 32, 12>}, {pipeline_mode = #tpu.pipeline_mode<synchronous>, transform_indices = @transform_2, window_bounds = array<i64: 1, 12>}, {transform_indices = @transform_3, window_bounds = array<i64: 128, 12>}]} {
    %c0 = arith.constant 0 : index
    %c0_0 = arith.constant 0 : index
    %0 = vector.load %arg1[%c0, %c0_0] : memref<128x32xf32, #tpu.memory_space<vmem>>, vector<128x32xf32>
    %c0_1 = arith.constant 0 : index
    %c0_2 = arith.constant 0 : index
    %1 = vector.load %arg2[%c0_1, %c0_2] : memref<32x12xf32, #tpu.memory_space<vmem>>, vector<32x12xf32>
    %cst = arith.constant dense<0.000000e+00> : vector<128x12xf32>
    %2 = tpu.matmul %0, %1, %cst {dimension_numbers = #tpu.dot_dimension_numbers<[1], [0], [0], [1], [0, 0, 1, 1], [], []>} : vector<128x32xf32>, vector<32x12xf32>, vector<128x12xf32> -> vector<128x12xf32>
    %c0_3 = arith.constant 0 : index
    %c0_4 = arith.constant 0 : index
    %3 = vector.load %arg3[%c0_3, %c0_4] : memref<1x12xf32, #tpu.memory_space<vmem>>, vector<1x12xf32>
    %4 = vector.broadcast %3 : vector<1x12xf32> to vector<128x12xf32>
    %5 = arith.addf %2, %4 : vector<128x12xf32>
    %6 = arith.negf %5 : vector<128x12xf32>
    %7 = math.exp %6 : vector<128x12xf32>
    %cst_5 = arith.constant 1.000000e+00 : f32
    %8 = vector.broadcast %cst_5 : f32 to vector<128x12xf32>
    %9 = arith.addf %8, %7 : vector<128x12xf32>
    %10 = arith.divf %8, %9 : vector<128x12xf32>
    %c0_6 = arith.constant 0 : index
    %c0_7 = arith.constant 0 : index
    %11 = vector.load %arg4[%c0_6, %c0_7] : memref<128x12xf32, #tpu.memory_space<vmem>>, vector<128x12xf32>
    tpu.vector_store %arg4[%c0_6, %c0_7], %10 {strides = array<i32>} : memref<128x12xf32, #tpu.memory_space<vmem>>, vector<128x12xf32>,
    return
  }
  func.func @transform_0(%arg0: i32) -> (i32, i32) {
    %c0_i32 = arith.constant 0 : i32
    %c0_i32_0 = arith.constant 0 : i32
    return %arg0, %c0_i32 : i32, i32
  }
  func.func @transform_1(%arg0: i32) -> (i32, i32) {
    %c0_i32 = arith.constant 0 : i32
    %c0_i32_0 = arith.constant 0 : i32
    %c0_i32_1 = arith.constant 0 : i32
    return %c0_i32, %c0_i32_0 : i32, i32
  }
  func.func @transform_2(%arg0: i32) -> (i32, i32) {
    %c0_i32 = arith.constant 0 : i32
    %c0_i32_0 = arith.constant 0 : i32
    %c0_i32_1 = arith.constant 0 : i32
    return %c0_i32, %c0_i32_0 : i32, i32
  }
  func.func @transform_3(%arg0: i32) -> (i32, i32) {
    %c0_i32 = arith.constant 0 : i32
    %c0_i32_0 = arith.constant 0 : i32
    return %arg0, %c0_i32 : i32, i32
  }
}

</mosaic_0001>

<llo_original>
// kernel: autoencoder_forward.12
$region0: #{autoencoder_forward.12}
  #allocation0 [shape = 'u32[]', space=smem, size = 0x4, offset = 0x4, fixed_abs, tag = 'smem constant byte address 0x4 - core index']
  #allocation1 [shape = 'u32[144,128]{1,0:T(1,128)}', space=vmem, size = 0x12000, scoped, tag = 'internal scratch']
  %s0 = inlined_call_operand.vmem [shape: f32[4,128,32], index: 0, kind: input, shape index: {}]
  %s1 = inlined_call_operand.vmem [shape: f32[1,32], index: 1, kind: input, shape index: {}]
  %s2 = inlined_call_operand.vmem [shape: f32[1,32], index: 2, kind: input, shape index: {}]
  %s3 = inlined_call_operand.vmem [shape: f32[128,32], index: 3, kind: output, shape index: {}]
  %s4 = sld [smem:[#allocation0]]
  $region22: #{autoencoder_forward.12} parent=0
    _
  %s6 = ssub.s32 1, %s4
  %s7 = scalar_select 0, %s6, %s4
  // Predicated region
  $region2: #{autoencoder_forward.12} parent=0 // pred_check
    _
  $region3: #{autoencoder_forward.12} parent=0 // pred_check_branch
    %9 = sbr.rel (0) target = $region5
  $region4: #{autoencoder_forward.12} parent=0 // pred_region
    _
  $region5: #{autoencoder_forward.12} parent=0 // pred_fallthru
    _
  // Predicated region
  $region6: #{autoencoder_forward.12} parent=0 // pred_check
    _
  $region7: #{autoencoder_forward.12} parent=0 // pred_check_branch
    %11 = sbr.rel (0) target = $region9
  $region8: #{autoencoder_forward.12} parent=0 // pred_region
    _
  $region9: #{autoencoder_forward.12} parent=0 // pred_fallthru
    _
  // Predicated region
  $region10: #{autoencoder_forward.12} parent=0 // pred_check
    _
  $region11: #{autoencoder_forward.12} parent=0 // pred_check_branch
    %13 = sbr.rel (0) target = $region13
  $region12: #{autoencoder_forward.12} parent=0 // pred_region
    _
  $region13: #{autoencoder_forward.12} parent=0 // pred_fallthru
    _
  %v14 = vld [vmem:[%s0] sm:$0xff]
  %v15 = vld [vmem:[%s0 + $0x8] sm:$0xff]
  %v16 = vld [vmem:[%s0 + $0x10] sm:$0xff]
  %v17 = vld [vmem:[%s0 + $0x18] sm:$0xff]
  %v18 = vld [vmem:[%s0 + $0x20] sm:$0xff]
  %v19 = vld [vmem:[%s0 + $0x28] sm:$0xff]
  %v20 = vld [vmem:[%s0 + $0x30] sm:$0xff]
  %v21 = vld [vmem:[%s0 + $0x38] sm:$0xff]
  %v22 = vld [vmem:[%s0 + $0x40] sm:$0xff]
  %v23 = vld [vmem:[%s0 + $0x48] sm:$0xff]
  %v24 = vld [vmem:[%s0 + $0x50] sm:$0xff]
  %v25 = vld [vmem:[%s0 + $0x58] sm:$0xff]
  %v26 = vld [vmem:[%s0 + $0x60] sm:$0xff]
  %v27 = vld [vmem:[%s0 + $0x68] sm:$0xff]
  %v28 = vld [vmem:[%s0 + $0x70] sm:$0xff]
  %v29 = vld [vmem:[%s0 + $0x78] sm:$0xff]
  %v30 = vld [vmem:[%s0 + $0x80] sm:$0xff]
  %v31 = vld [vmem:[%s0 + $0x88] sm:$0xff]
  %v32 = vld [vmem:[%s0 + $0x90] sm:$0xff]
  %v33 = vld [vmem:[%s0 + $0x98] sm:$0xff]
  %v34 = vld [vmem:[%s0 + $0xa0] sm:$0xff]
  %v35 = vld [vmem:[%s0 + $0xa8] sm:$0xff]
  %v36 = vld [vmem:[%s0 + $0xb0] sm:$0xff]
  %v37 = vld [vmem:[%s0 + $0xb8] sm:$0xff]
  %v38 = vld [vmem:[%s0 + $0xc0] sm:$0xff]
  %v39 = vld [vmem:[%s0 + $0xc8] sm:$0xff]
  %v40 = vld [vmem:[%s0 + $0xd0] sm:$0xff]
  %v41 = vld [vmem:[%s0 + $0xd8] sm:$0xff]
  %v42 = vld [vmem:[%s0 + $0xe0] sm:$0xff]
  %v43 = vld [vmem:[%s0 + $0xe8] sm:$0xff]
  %v44 = vld [vmem:[%s0 + $0xf0] sm:$0xff]
  %v45 = vld [vmem:[%s0 + $0xf8] sm:$0xff]
  %v46 = vld [vmem:[%s0 + $0x100] sm:$0xff]
  %v47 = vld [vmem:[%s0 + $0x108] sm:$0xff]
  %v48 = vld [vmem:[%s0 + $0x110] sm:$0xff]
  %v49 = vld [vmem:[%s0 + $0x118] sm:$0xff]
  %v50 = vld [vmem:[%s0 + $0x120] sm:$0xff]
  %v51 = vld [vmem:[%s0 + $0x128] sm:$0xff]
  %v52 = vld [vmem:[%s0 + $0x130] sm:$0xff]
  %v53 = vld [vmem:[%s0 + $0x138] sm:$0xff]
  %v54 = vld [vmem:[%s0 + $0x140] sm:$0xff]
  %v55 = vld [vmem:[%s0 + $0x148] sm:$0xff]
  %v56 = vld [vmem:[%s0 + $0x150] sm:$0xff]
  %v57 = vld [vmem:[%s0 + $0x158] sm:$0xff]
  %v58 = vld [vmem:[%s0 + $0x160] sm:$0xff]
  %v59 = vld [vmem:[%s0 + $0x168] sm:$0xff]
  %v60 = vld [vmem:[%s0 + $0x170] sm:$0xff]
  %v61 = vld [vmem:[%s0 + $0x178] sm:$0xff]
  %v62 = vld [vmem:[%s0 + $0x180] sm:$0xff]
  %v63 = vld [vmem:[%s0 + $0x188] sm:$0xff]
  %v64 = vld [vmem:[%s0 + $0x190] sm:$0xff]
  %v65 = vld [vmem:[%s0 + $0x198] sm:$0xff]
  %v66 = vld [vmem:[%s0 + $0x1a0] sm:$0xff]
  %v67 = vld [vmem:[%s0 + $0x1a8] sm:$0xff]
  %v68 = vld [vmem:[%s0 + $0x1b0] sm:$0xff]
  %v69 = vld [vmem:[%s0 + $0x1b8] sm:$0xff]
  %v70 = vld [vmem:[%s0 + $0x1c0] sm:$0xff]
  %v71 = vld [vmem:[%s0 + $0x1c8] sm:$0xff]
  %v72 = vld [vmem:[%s0 + $0x1d0] sm:$0xff]
  %v73 = vld [vmem:[%s0 + $0x1d8] sm:$0xff]
  %v74 = vld [vmem:[%s0 + $0x1e0] sm:$0xff]
  %v75 = vld [vmem:[%s0 + $0x1e8] sm:$0xff]
  %v76 = vld [vmem:[%s0 + $0x1f0] sm:$0xff]
  %v77 = vld [vmem:[%s0 + $0x1f8] sm:$0xff]
  %v78 = vld [vmem:[%s1] sm:$0x1]
  %v80 = vlaneseq
  %v81 = vshrl.u32 %v80, 7
  %v82 = vsub.s32 0, %v81
  %v83 = vrot.slane %v78, %v82
  %v85 = vmul.f32 %v14, %v83
  %v86 = vmul.f32 %v15, %v83
  %v87 = vmul.f32 %v16, %v83
  %v88 = vmul.f32 %v17, %v83
  %v89 = vmul.f32 %v18, %v83
  %v90 = vmul.f32 %v19, %v83
  %v91 = vmul.f32 %v20, %v83
  %v92 = vmul.f32 %v21, %v83
  %v93 = vmul.f32 %v22, %v83
  %v94 = vmul.f32 %v23, %v83
  %v95 = vmul.f32 %v24, %v83
  %v96 = vmul.f32 %v25, %v83
  %v97 = vmul.f32 %v26, %v83
  %v98 = vmul.f32 %v27, %v83
  %v99 = vmul.f32 %v28, %v83
  %v100 = vmul.f32 %v29, %v83
  %v101 = vmul.f32 %v30, %v83
  %v102 = vmul.f32 %v31, %v83
  %v103 = vmul.f32 %v32, %v83
  %v104 = vmul.f32 %v33, %v83
  %v105 = vmul.f32 %v34, %v83
  %v106 = vmul.f32 %v35, %v83
  %v107 = vmul.f32 %v36, %v83
  %v108 = vmul.f32 %v37, %v83
  %v109 = vmul.f32 %v38, %v83
  %v110 = vmul.f32 %v39, %v83
  %v111 = vmul.f32 %v40, %v83
  %v112 = vmul.f32 %v41, %v83
  %v113 = vmul.f32 %v42, %v83
  %v114 = vmul.f32 %v43, %v83
  %v115 = vmul.f32 %v44, %v83
  %v116 = vmul.f32 %v45, %v83
  %v117 = vmul.f32 %v46, %v83
  %v118 = vmul.f32 %v47, %v83
  %v119 = vmul.f32 %v48, %v83
  %v120 = vmul.f32 %v49, %v83
  %v121 = vmul.f32 %v50, %v83
  %v122 = vmul.f32 %v51, %v83
  %v123 = vmul.f32 %v52, %v83
  %v124 = vmul.f32 %v53, %v83
  %v125 = vmul.f32 %v54, %v83
  %v126 = vmul.f32 %v55, %v83
  %v127 = vmul.f32 %v56, %v83
  %v128 = vmul.f32 %v57, %v83
  %v129 = vmul.f32 %v58, %v83
  %v130 = vmul.f32 %v59, %v83
  %v131 = vmul.f32 %v60, %v83
  %v132 = vmul.f32 %v61, %v83
  %v133 = vmul.f32 %v62, %v83
  %v134 = vmul.f32 %v63, %v83
  %v135 = vmul.f32 %v64, %v83
  %v136 = vmul.f32 %v65, %v83
  %v137 = vmul.f32 %v66, %v83
  %v138 = vmul.f32 %v67, %v83
  %v139 = vmul.f32 %v68, %v83
  %v140 = vmul.f32 %v69, %v83
  %v141 = vmul.f32 %v70, %v83
  %v142 = vmul.f32 %v71, %v83
  %v143 = vmul.f32 %v72, %v83
  %v144 = vmul.f32 %v73, %v83
  %v145 = vmul.f32 %v74, %v83
  %v146 = vmul.f32 %v75, %v83
  %v147 = vmul.f32 %v76, %v83
  %v148 = vmul.f32 %v77, %v83
  %v149 = vld [vmem:[%s2] sm:$0x1]
  %v151 = vlaneseq
  %v152 = vshrl.u32 %v151, 7
  %v153 = vsub.s32 0, %v152
  %v154 = vrot.slane %v149, %v153
  %v156 = vadd.f32 %v85, %v154
  %v157 = vadd.f32 %v86, %v154
  %v158 = vadd.f32 %v87, %v154
  %v159 = vadd.f32 %v88, %v154
  %v160 = vadd.f32 %v89, %v154
  %v161 = vadd.f32 %v90, %v154
  %v162 = vadd.f32 %v91, %v154
  %v163 = vadd.f32 %v92, %v154
  %v164 = vadd.f32 %v93, %v154
  %v165 = vadd.f32 %v94, %v154
  %v166 = vadd.f32 %v95, %v154
  %v167 = vadd.f32 %v96, %v154
  %v168 = vadd.f32 %v97, %v154
  %v169 = vadd.f32 %v98, %v154
  %v170 = vadd.f32 %v99, %v154
  %v171 = vadd.f32 %v100, %v154
  %v172 = vadd.f32 %v101, %v154
  %v173 = vadd.f32 %v102, %v154
  %v174 = vadd.f32 %v103, %v154
  %v175 = vadd.f32 %v104, %v154
  %v176 = vadd.f32 %v105, %v154
  %v177 = vadd.f32 %v106, %v154
  %v178 = vadd.f32 %v107, %v154
  %v179 = vadd.f32 %v108, %v154
  %v180 = vadd.f32 %v109, %v154
  %v181 = vadd.f32 %v110, %v154
  %v182 = vadd.f32 %v111, %v154
  %v183 = vadd.f32 %v112, %v154
  %v184 = vadd.f32 %v113, %v154
  %v185 = vadd.f32 %v114, %v154
  %v186 = vadd.f32 %v115, %v154
  %v187 = vadd.f32 %v116, %v154
  %v188 = vadd.f32 %v117, %v154
  %v189 = vadd.f32 %v118, %v154
  %v190 = vadd.f32 %v119, %v154
  %v191 = vadd.f32 %v120, %v154
  %v192 = vadd.f32 %v121, %v154
  %v193 = vadd.f32 %v122, %v154
  %v194 = vadd.f32 %v123, %v154
  %v195 = vadd.f32 %v124, %v154
  %v196 = vadd.f32 %v125, %v154
  %v197 = vadd.f32 %v126, %v154
  %v198 = vadd.f32 %v127, %v154
  %v199 = vadd.f32 %v128, %v154
  %v200 = vadd.f32 %v129, %v154
  %v201 = vadd.f32 %v130, %v154
  %v202 = vadd.f32 %v131, %v154
  %v203 = vadd.f32 %v132, %v154
  %v204 = vadd.f32 %v133, %v154
  %v205 = vadd.f32 %v134, %v154
  %v206 = vadd.f32 %v135, %v154
  %v207 = vadd.f32 %v136, %v154
  %v208 = vadd.f32 %v137, %v154
  %v209 = vadd.f32 %v138, %v154
  %v210 = vadd.f32 %v139, %v154
  %v211 = vadd.f32 %v140, %v154
  %v212 = vadd.f32 %v141, %v154
  %v213 = vadd.f32 %v142, %v154
  %v214 = vadd.f32 %v143, %v154
  %v215 = vadd.f32 %v144, %v154
  %v216 = vadd.f32 %v145, %v154
  %v217 = vadd.f32 %v146, %v154
  %v218 = vadd.f32 %v147, %v154
  %v219 = vadd.f32 %v148, %v154
  %v220 = vmax.f32 %v156, 0.0
  %v221 = vmax.f32 %v157, 0.0
  %v222 = vmax.f32 %v158, 0.0
  %v223 = vmax.f32 %v159, 0.0
  %v224 = vmax.f32 %v160, 0.0
  %v225 = vmax.f32 %v161, 0.0
  %v226 = vmax.f32 %v162, 0.0
  %v227 = vmax.f32 %v163, 0.0
  %v228 = vmax.f32 %v164, 0.0
  %v229 = vmax.f32 %v165, 0.0
  %v230 = vmax.f32 %v166, 0.0
  %v231 = vmax.f32 %v167, 0.0
  %v232 = vmax.f32 %v168, 0.0
  %v233 = vmax.f32 %v169, 0.0
  %v234 = vmax.f32 %v170, 0.0
  %v235 = vmax.f32 %v171, 0.0
  %v236 = vmax.f32 %v172, 0.0
  %v237 = vmax.f32 %v173, 0.0
  %v238 = vmax.f32 %v174, 0.0
  %v239 = vmax.f32 %v175, 0.0
  %v240 = vmax.f32 %v176, 0.0
  %v241 = vmax.f32 %v177, 0.0
  %v242 = vmax.f32 %v178, 0.0
  %v243 = vmax.f32 %v179, 0.0
  %v244 = vmax.f32 %v180, 0.0
  %v245 = vmax.f32 %v181, 0.0
  %v246 = vmax.f32 %v182, 0.0
  %v247 = vmax.f32 %v183, 0.0
  %v248 = vmax.f32 %v184, 0.0
  %v249 = vmax.f32 %v185, 0.0
  %v250 = vmax.f32 %v186, 0.0
  %v251 = vmax.f32 %v187, 0.0
  %v252 = vmax.f32 %v188, 0.0
  %v253 = vmax.f32 %v189, 0.0
  %v254 = vmax.f32 %v190, 0.0
  %v255 = vmax.f32 %v191, 0.0
  %v256 = vmax.f32 %v192, 0.0
  %v257 = vmax.f32 %v193, 0.0
  %v258 = vmax.f32 %v194, 0.0
  %v259 = vmax.f32 %v195, 0.0
  %v260 = vmax.f32 %v196, 0.0
  %v261 = vmax.f32 %v197, 0.0
  %v262 = vmax.f32 %v198, 0.0
  %v263 = vmax.f32 %v199, 0.0
  %v264 = vmax.f32 %v200, 0.0
  %v265 = vmax.f32 %v201, 0.0
  %v266 = vmax.f32 %v202, 0.0
  %v267 = vmax.f32 %v203, 0.0
  %v268 = vmax.f32 %v204, 0.0
  %v269 = vmax.f32 %v205, 0.0
  %v270 = vmax.f32 %v206, 0.0
  %v271 = vmax.f32 %v207, 0.0
  %v272 = vmax.f32 %v208, 0.0
  %v273 = vmax.f32 %v209, 0.0
  %v274 = vmax.f32 %v210, 0.0
  %v275 = vmax.f32 %v211, 0.0
  %v276 = vmax.f32 %v212, 0.0
  %v277 = vmax.f32 %v213, 0.0
  %v278 = vmax.f32 %v214, 0.0
  %v279 = vmax.f32 %v215, 0.0
  %v280 = vmax.f32 %v216, 0.0
  %v281 = vmax.f32 %v217, 0.0
  %v282 = vmax.f32 %v218, 0.0
  %v283 = vmax.f32 %v219, 0.0
  %vm284 = vcmask 261120
  %v285 = vsel %vm284, %v220, -inf
  %v286 = vsel %vm284, %v236, -inf
  %v287 = vmax.f32 %v285, %v286
  %v288 = vsel %vm284, %v252, -inf
  %v289 = vmax.f32 %v287, %v288
  %v290 = vsel %vm284, %v268, -inf
  %v291 = vmax.f32 %v289, %v290
  %v292 = vsel %vm284, %v221, -inf
  %v293 = vsel %vm284, %v237, -inf
  %v294 = vmax.f32 %v292, %v293
  %v295 = vsel %vm284, %v253, -inf
  %v296 = vmax.f32 %v294, %v295
  %v297 = vsel %vm284, %v269, -inf
  %v298 = vmax.f32 %v296, %v297
  %v299 = vsel %vm284, %v222, -inf
  %v300 = vsel %vm284, %v238, -inf
  %v301 = vmax.f32 %v299, %v300
  %v302 = vsel %vm284, %v254, -inf
  %v303 = vmax.f32 %v301, %v302
  %v304 = vsel %vm284, %v270, -inf
  %v305 = vmax.f32 %v303, %v304
  %v306 = vsel %vm284, %v223, -inf
  %v307 = vsel %vm284, %v239, -inf
  %v308 = vmax.f32 %v306, %v307
  %v309 = vsel %vm284, %v255, -inf
  %v310 = vmax.f32 %v308, %v309
  %v311 = vsel %vm284, %v271, -inf
  %v312 = vmax.f32 %v310, %v311
  %v313 = vsel %vm284, %v224, -inf
  %v314 = vsel %vm284, %v240, -inf
  %v315 = vmax.f32 %v313, %v314
  %v316 = vsel %vm284, %v256, -inf
  %v317 = vmax.f32 %v315, %v316
  %v318 = vsel %vm284, %v272, -inf
  %v319 = vmax.f32 %v317, %v318
  %v320 = vsel %vm284, %v225, -inf
  %v321 = vsel %vm284, %v241, -inf
  %v322 = vmax.f32 %v320, %v321
  %v323 = vsel %vm284, %v257, -inf
  %v324 = vmax.f32 %v322, %v323
  %v325 = vsel %vm284, %v273, -inf
  %v326 = vmax.f32 %v324, %v325
  %v327 = vsel %vm284, %v226, -inf
  %v328 = vsel %vm284, %v242, -inf
  %v329 = vmax.f32 %v327, %v328
  %v330 = vsel %vm284, %v258, -inf
  %v331 = vmax.f32 %v329, %v330
  %v332 = vsel %vm284, %v274, -inf
  %v333 = vmax.f32 %v331, %v332
  %v334 = vsel %vm284, %v227, -inf
  %v335 = vsel %vm284, %v243, -inf
  %v336 = vmax.f32 %v334, %v335
  %v337 = vsel %vm284, %v259, -inf
  %v338 = vmax.f32 %v336, %v337
  %v339 = vsel %vm284, %v275, -inf
  %v340 = vmax.f32 %v338, %v339
  %v341 = vsel %vm284, %v228, -inf
  %v342 = vsel %vm284, %v244, -inf
  %v343 = vmax.f32 %v341, %v342
  %v344 = vsel %vm284, %v260, -inf
  %v345 = vmax.f32 %v343, %v344
  %v346 = vsel %vm284, %v276, -inf
  %v347 = vmax.f32 %v345, %v346
  %v348 = vsel %vm284, %v229, -inf
  %v349 = vsel %vm284, %v245, -inf
  %v350 = vmax.f32 %v348, %v349
  %v351 = vsel %vm284, %v261, -inf
  %v352 = vmax.f32 %v350, %v351
  %v353 = vsel %vm284, %v277, -inf
  %v354 = vmax.f32 %v352, %v353
  %v355 = vsel %vm284, %v230, -inf
  %v356 = vsel %vm284, %v246, -inf
  %v357 = vmax.f32 %v355, %v356
  %v358 = vsel %vm284, %v262, -inf
  %v359 = vmax.f32 %v357, %v358
  %v360 = vsel %vm284, %v278, -inf
  %v361 = vmax.f32 %v359, %v360
  %v362 = vsel %vm284, %v231, -inf
  %v363 = vsel %vm284, %v247, -inf
  %v364 = vmax.f32 %v362, %v363
  %v365 = vsel %vm284, %v263, -inf
  %v366 = vmax.f32 %v364, %v365
  %v367 = vsel %vm284, %v279, -inf
  %v368 = vmax.f32 %v366, %v367
  %v369 = vsel %vm284, %v232, -inf
  %v370 = vsel %vm284, %v248, -inf
  %v371 = vmax.f32 %v369, %v370
  %v372 = vsel %vm284, %v264, -inf
  %v373 = vmax.f32 %v371, %v372
  %v374 = vsel %vm284, %v280, -inf
  %v375 = vmax.f32 %v373, %v374
  %v376 = vsel %vm284, %v233, -inf
  %v377 = vsel %vm284, %v249, -inf
  %v378 = vmax.f32 %v376, %v377
  %v379 = vsel %vm284, %v265, -inf
  %v380 = vmax.f32 %v378, %v379
  %v381 = vsel %vm284, %v281, -inf
  %v382 = vmax.f32 %v380, %v381
  %v383 = vsel %vm284, %v234, -inf
  %v384 = vsel %vm284, %v250, -inf
  %v385 = vmax.f32 %v383, %v384
  %v386 = vsel %vm284, %v266, -inf
  %v387 = vmax.f32 %v385, %v386
  %v388 = vsel %vm284, %v282, -inf
  %v389 = vmax.f32 %v387, %v388
  %v390 = vsel %vm284, %v235, -inf
  %v391 = vsel %vm284, %v251, -inf
  %v392 = vmax.f32 %v390, %v391
  %v393 = vsel %vm284, %v267, -inf
  %v394 = vmax.f32 %v392, %v393
  %v395 = vsel %vm284, %v283, -inf
  %v396 = vmax.f32 %v394, %v395
  %397 = vst.msk [vmem:[%s3] sm:$0xff] %vm284, %v291
  %398 = vst.msk [vmem:[%s3 + $0x8] sm:$0xff] %vm284, %v298
  %399 = vst.msk [vmem:[%s3 + $0x10] sm:$0xff] %vm284, %v305
  %400 = vst.msk [vmem:[%s3 + $0x18] sm:$0xff] %vm284, %v312
  %401 = vst.msk [vmem:[%s3 + $0x20] sm:$0xff] %vm284, %v319
  %402 = vst.msk [vmem:[%s3 + $0x28] sm:$0xff] %vm284, %v326
  %403 = vst.msk [vmem:[%s3 + $0x30] sm:$0xff] %vm284, %v333
  %404 = vst.msk [vmem:[%s3 + $0x38] sm:$0xff] %vm284, %v340
  %405 = vst.msk [vmem:[%s3 + $0x40] sm:$0xff] %vm284, %v347
  %406 = vst.msk [vmem:[%s3 + $0x48] sm:$0xff] %vm284, %v354
  %407 = vst.msk [vmem:[%s3 + $0x50] sm:$0xff] %vm284, %v361
  %408 = vst.msk [vmem:[%s3 + $0x58] sm:$0xff] %vm284, %v368
  %409 = vst.msk [vmem:[%s3 + $0x60] sm:$0xff] %vm284, %v375
  %410 = vst.msk [vmem:[%s3 + $0x68] sm:$0xff] %vm284, %v382
  %411 = vst.msk [vmem:[%s3 + $0x70] sm:$0xff] %vm284, %v389
  %412 = vst.msk [vmem:[%s3 + $0x78] sm:$0xff] %vm284, %v396
  // Predicated region
  $region14: #{autoencoder_forward.12} parent=0 // pred_check
    _
  $region15: #{autoencoder_forward.12} parent=0 // pred_check_branch
    %414 = sbr.rel (0) target = $region17
  $region16: #{autoencoder_forward.12} parent=0 // pred_region
    _
  $region17: #{autoencoder_forward.12} parent=0 // pred_fallthru
    _
  // Predicated region
  $region18: #{autoencoder_forward.12} parent=0 // pred_check
    _
  $region19: #{autoencoder_forward.12} parent=0 // pred_check_branch
    %416 = sbr.rel (0) target = $region21
  $region20: #{autoencoder_forward.12} parent=0 // pred_region
    _
  $region21: #{autoencoder_forward.12} parent=0 // pred_fallthru
    _

// kernel: autoencoder_forward.11
$region0: #{autoencoder_forward.11}
  #allocation0 [shape = 'u32[]', space=smem, size = 0x4, offset = 0x4, fixed_abs, tag = 'smem constant byte address 0x4 - core index']
  #allocation1 [shape = 'u32[144,128]{1,0:T(1,128)}', space=vmem, size = 0x12000, scoped, tag = 'internal scratch']
  %s0 = inlined_call_operand.vmem [shape: f32[512,27], index: 0, kind: input, shape index: {}]
  %s1 = inlined_call_operand.vmem [shape: f32[27,32], index: 1, kind: input, shape index: {}]
  %s2 = inlined_call_operand.vmem [shape: f32[1,32], index: 2, kind: input, shape index: {}]
  %s3 = inlined_call_operand.vmem [shape: f32[512,32], index: 3, kind: output, shape index: {0}]
  %s4 = inlined_call_operand.vmem [shape: f32[1,32], index: 4, kind: output, shape index: {1}]
  %s5 = inlined_call_operand.vmem [shape: f32[1,32], index: 5, kind: output, shape index: {2}]
  %6 = xla_tuple %s3, %s4, %s5
  %s7 = sld [smem:[#allocation0]]
  $region42: #{autoencoder_forward.11} parent=0
    _
  %s9 = ssub.s32 1, %s7
  %s10 = scalar_select 0, %s9, %s7
  // Predicated region
  $region2: #{autoencoder_forward.11} parent=0 // pred_check
    _
  $region3: #{autoencoder_forward.11} parent=0 // pred_check_branch
    %12 = sbr.rel (0) target = $region5
  $region4: #{autoencoder_forward.11} parent=0 // pred_region
    _
  $region5: #{autoencoder_forward.11} parent=0 // pred_fallthru
    _
  // Predicated region
  $region6: #{autoencoder_forward.11} parent=0 // pred_check
    _
  $region7: #{autoencoder_forward.11} parent=0 // pred_check_branch
    %14 = sbr.rel (0) target = $region9
  $region8: #{autoencoder_forward.11} parent=0 // pred_region
    _
  $region9: #{autoencoder_forward.11} parent=0 // pred_fallthru
    _
  // Predicated region
  $region10: #{autoencoder_forward.11} parent=0 // pred_check
    _
  $region11: #{autoencoder_forward.11} parent=0 // pred_check_branch
    %16 = sbr.rel (0) target = $region13
  $region12: #{autoencoder_forward.11} parent=0 // pred_region
    _
  $region13: #{autoencoder_forward.11} parent=0 // pred_fallthru
    _
  %p17 = scmp.eq.s32.totalorder 0, 0
  // Predicated region
  $region14: #{autoencoder_forward.11} parent=0 // pred_check
    %p18 = pneg %p17
  $region15: #{autoencoder_forward.11} parent=0 // pred_check_branch
    %20 = sbr.rel (%p18) target = $region17
  $region16: #{autoencoder_forward.11} parent=0 // pred_region
    %vm21 = vcmask 253952
    %22 = vst.msk [vmem:[%s4] sm:$0x1] %vm21, 0.0
    %23 = vst.msk [vmem:[%s5] sm:$0x1] %vm21, 0.0
  $region17: #{autoencoder_forward.11} parent=0 // pred_fallthru
    _
  %v24 = vld [vmem:[%s0] sm:$0xff]
  %v25 = vld [vmem:[%s0 + $0x8] sm:$0xff]
  %v26 = vld [vmem:[%s0 + $0x10] sm:$0xff]
  %v27 = vld [vmem:[%s0 + $0x18] sm:$0xff]
  %v28 = vld [vmem:[%s0 + $0x20] sm:$0xff]
  %v29 = vld [vmem:[%s0 + $0x28] sm:$0xff]
  %v30 = vld [vmem:[%s0 + $0x30] sm:$0xff]
  %v31 = vld [vmem:[%s0 + $0x38] sm:$0xff]
  %v32 = vld [vmem:[%s0 + $0x40] sm:$0xff]
  %v33 = vld [vmem:[%s0 + $0x48] sm:$0xff]
  %v34 = vld [vmem:[%s0 + $0x50] sm:$0xff]
  %v35 = vld [vmem:[%s0 + $0x58] sm:$0xff]
  %v36 = vld [vmem:[%s0 + $0x60] sm:$0xff]
  %v37 = vld [vmem:[%s0 + $0x68] sm:$0xff]
  %v38 = vld [vmem:[%s0 + $0x70] sm:$0xff]
  %v39 = vld [vmem:[%s0 + $0x78] sm:$0xff]
  %v40 = vld [vmem:[%s0 + $0x80] sm:$0xff]
  %v41 = vld [vmem:[%s0 + $0x88] sm:$0xff]
  %v42 = vld [vmem:[%s0 + $0x90] sm:$0xff]
  %v43 = vld [vmem:[%s0 + $0x98] sm:$0xff]
  %v44 = vld [vmem:[%s0 + $0xa0] sm:$0xff]
  %v45 = vld [vmem:[%s0 + $0xa8] sm:$0xff]
  %v46 = vld [vmem:[%s0 + $0xb0] sm:$0xff]
  %v47 = vld [vmem:[%s0 + $0xb8] sm:$0xff]
  %v48 = vld [vmem:[%s0 + $0xc0] sm:$0xff]
  %v49 = vld [vmem:[%s0 + $0xc8] sm:$0xff]
  %v50 = vld [vmem:[%s0 + $0xd0] sm:$0xff]
  %v51 = vld [vmem:[%s0 + $0xd8] sm:$0xff]
  %v52 = vld [vmem:[%s0 + $0xe0] sm:$0xff]
  %v53 = vld [vmem:[%s0 + $0xe8] sm:$0xff]
  %v54 = vld [vmem:[%s0 + $0xf0] sm:$0xff]
  %v55 = vld [vmem:[%s0 + $0xf8] sm:$0xff]
  %v56 = vld [vmem:[%s0 + $0x100] sm:$0xff]
  %v57 = vld [vmem:[%s0 + $0x108] sm:$0xff]
  %v58 = vld [vmem:[%s0 + $0x110] sm:$0xff]
  %v59 = vld [vmem:[%s0 + $0x118] sm:$0xff]
  %v60 = vld [vmem:[%s0 + $0x120] sm:$0xff]
  %v61 = vld [vmem:[%s0 + $0x128] sm:$0xff]
  %v62 = vld [vmem:[%s0 + $0x130] sm:$0xff]
  %v63 = vld [vmem:[%s0 + $0x138] sm:$0xff]
  %v64 = vld [vmem:[%s0 + $0x140] sm:$0xff]
  %v65 = vld [vmem:[%s0 + $0x148] sm:$0xff]
  %v66 = vld [vmem:[%s0 + $0x150] sm:$0xff]
  %v67 = vld [vmem:[%s0 + $0x158] sm:$0xff]
  %v68 = vld [vmem:[%s0 + $0x160] sm:$0xff]
  %v69 = vld [vmem:[%s0 + $0x168] sm:$0xff]
  %v70 = vld [vmem:[%s0 + $0x170] sm:$0xff]
  %v71 = vld [vmem:[%s0 + $0x178] sm:$0xff]
  %v72 = vld [vmem:[%s0 + $0x180] sm:$0xff]
  %v73 = vld [vmem:[%s0 + $0x188] sm:$0xff]
  %v74 = vld [vmem:[%s0 + $0x190] sm:$0xff]
  %v75 = vld [vmem:[%s0 + $0x198] sm:$0xff]
  %v76 = vld [vmem:[%s0 + $0x1a0] sm:$0xff]
  %v77 = vld [vmem:[%s0 + $0x1a8] sm:$0xff]
  %v78 = vld [vmem:[%s0 + $0x1b0] sm:$0xff]
  %v79 = vld [vmem:[%s0 + $0x1b8] sm:$0xff]
  %v80 = vld [vmem:[%s0 + $0x1c0] sm:$0xff]
  %v81 = vld [vmem:[%s0 + $0x1c8] sm:$0xff]
  %v82 = vld [vmem:[%s0 + $0x1d0] sm:$0xff]
  %v83 = vld [vmem:[%s0 + $0x1d8] sm:$0xff]
  %v84 = vld [vmem:[%s0 + $0x1e0] sm:$0xff]
  %v85 = vld [vmem:[%s0 + $0x1e8] sm:$0xff]
  %v86 = vld [vmem:[%s0 + $0x1f0] sm:$0xff]
  %v87 = vld [vmem:[%s0 + $0x1f8] sm:$0xff]
  %v88 = vld [vmem:[%s1] sm:$0xff]
  %v89 = vld [vmem:[%s1 + $0x8] sm:$0xff]
  %v90 = vld [vmem:[%s1 + $0x10] sm:$0xff]
  %v91 = vld [vmem:[%s1 + $0x18] sm:$0x7]
  %v92 = vld [vmem:[%s2] sm:$0x1]
  %v94 = vlaneseq
  %v95 = vshrl.u32 %v94, 7
  %v96 = vsub.s32 0, %v95
  %v97 = vrot.slane %v92, %v96
  %vm99 = vcmask 220160
  %v101 = vsel %vm99, %v24, 0
  %v104 = vsel %vm99, %v25, 0
  %v107 = vsel %vm99, %v26, 0
  %v110 = vsel %vm99, %v27, 0
  %v113 = vsel %vm99, %v28, 0
  %v116 = vsel %vm99, %v29, 0
  %v119 = vsel %vm99, %v30, 0
  %v122 = vsel %vm99, %v31, 0
  %v125 = vsel %vm99, %v32, 0
  %v128 = vsel %vm99, %v33, 0
  %v131 = vsel %vm99, %v34, 0
  %v134 = vsel %vm99, %v35, 0
  %v137 = vsel %vm99, %v36, 0
  %v140 = vsel %vm99, %v37, 0
  %v143 = vsel %vm99, %v38, 0
  %v146 = vsel %vm99, %v39, 0
  %v149 = vsel %vm99, %v40, 0
  %v152 = vsel %vm99, %v41, 0
  %v155 = vsel %vm99, %v42, 0
  %v158 = vsel %vm99, %v43, 0
  %v161 = vsel %vm99, %v44, 0
  %v164 = vsel %vm99, %v45, 0
  %v167 = vsel %vm99, %v46, 0
  %v170 = vsel %vm99, %v47, 0
  %v173 = vsel %vm99, %v48, 0
  %v176 = vsel %vm99, %v49, 0
  %v179 = vsel %vm99, %v50, 0
  %v182 = vsel %vm99, %v51, 0
  %v185 = vsel %vm99, %v52, 0
  %v188 = vsel %vm99, %v53, 0
  %v191 = vsel %vm99, %v54, 0
  %v194 = vsel %vm99, %v55, 0
  %v197 = vsel %vm99, %v56, 0
  %v200 = vsel %vm99, %v57, 0
  %v203 = vsel %vm99, %v58, 0
  %v206 = vsel %vm99, %v59, 0
  %v209 = vsel %vm99, %v60, 0
  %v212 = vsel %vm99, %v61, 0
  %v215 = vsel %vm99, %v62, 0
  %v218 = vsel %vm99, %v63, 0
  %v221 = vsel %vm99, %v64, 0
  %v224 = vsel %vm99, %v65, 0
  %v227 = vsel %vm99, %v66, 0
  %v230 = vsel %vm99, %v67, 0
  %v233 = vsel %vm99, %v68, 0
  %v236 = vsel %vm99, %v69, 0
  %v239 = vsel %vm99, %v70, 0
  %v242 = vsel %vm99, %v71, 0
  %v245 = vsel %vm99, %v72, 0
  %v248 = vsel %vm99, %v73, 0
  %v251 = vsel %vm99, %v74, 0
  %v254 = vsel %vm99, %v75, 0
  %v257 = vsel %vm99, %v76, 0
  %v260 = vsel %vm99, %v77, 0
  %v263 = vsel %vm99, %v78, 0
  %v266 = vsel %vm99, %v79, 0
  %v269 = vsel %vm99, %v80, 0
  %v272 = vsel %vm99, %v81, 0
  %v275 = vsel %vm99, %v82, 0
  %v278 = vsel %vm99, %v83, 0
  %v281 = vsel %vm99, %v84, 0
  %v284 = vsel %vm99, %v85, 0
  %v287 = vsel %vm99, %v86, 0
  %v290 = vsel %vm99, %v87, 0
  %vm292 = vcmask 1042432
  %v294 = vsel %vm292, %v91, 0
  %296 = vmatprep.subr.mxu0 0.0
  %297 = vmatpush1.msra.mxu0 0.0
  %298 = vmatprep.subr.mxu0 0.0
  %299 = vmatpush1.msra.mxu0 0.0
  %300 = vmatprep.subr.mxu0 0.0
  %301 = vmatpush1.msra.mxu0 0.0
  %302 = vmatprep.subr.mxu0 0.0
  %303 = vmatpush1.msra.mxu0 0.0
  %304 = vmatprep.subr.mxu0 0.0
  %305 = vmatpush1.msra.mxu0 0.0
  %306 = vmatprep.subr.mxu0 0.0
  %307 = vmatpush1.msra.mxu0 0.0
  %308 = vmatprep.subr.mxu0 0.0
  %309 = vmatpush1.msra.mxu0 0.0
  %310 = vmatprep.subr.mxu0 0.0
  %311 = vmatpush1.msra.mxu0 0.0
  %312 = vmatprep.subr.mxu0 0.0
  %313 = vmatpush1.msra.mxu0 0.0
  %314 = vmatprep.subr.mxu0 0.0
  %315 = vmatpush1.msra.mxu0 0.0
  %316 = vmatprep.subr.mxu0 0.0
  %317 = vmatpush1.msra.mxu0 0.0
  %318 = vmatprep.subr.mxu0 0.0
  %319 = vmatpush1.msra.mxu0 0.0
  %320 = vmatprep.subr.mxu0 0.0
  %321 = vmatpush1.msra.mxu0 %v294
  %322 = vmatprep.subr.mxu0 0.0
  %323 = vmatpush1.msra.mxu0 %v90
  %324 = vmatprep.subr.mxu0 0.0
  %325 = vmatpush1.msra.mxu0 %v89
  %326 = vmatprep.subr.mxu0 0.0
  %327 = vmatpush1.msra.mxu0 %v88
  %328 = vmatprep.subr.mxu0 0.0
  %329 = vmatpush2.msra.mxu0 0.0
  %330 = vmatprep.subr.mxu0 0.0
  %331 = vmatpush2.msra.mxu0 0.0
  %332 = vmatprep.subr.mxu0 0.0
  %333 = vmatpush2.msra.mxu0 0.0
  %334 = vmatprep.subr.mxu0 0.0
  %335 = vmatpush2.msra.mxu0 0.0
  %336 = vmatprep.subr.mxu0 0.0
  %337 = vmatpush2.msra.mxu0 0.0
  %338 = vmatprep.subr.mxu0 0.0
  %339 = vmatpush2.msra.mxu0 0.0
  %340 = vmatprep.subr.mxu0 0.0
  %341 = vmatpush2.msra.mxu0 0.0
  %342 = vmatprep.subr.mxu0 0.0
  %343 = vmatpush2.msra.mxu0 0.0
  %344 = vmatprep.subr.mxu0 0.0
  %345 = vmatpush2.msra.mxu0 0.0
  %346 = vmatprep.subr.mxu0 0.0
  %347 = vmatpush2.msra.mxu0 0.0
  %348 = vmatprep.subr.mxu0 0.0
  %349 = vmatpush2.msra.mxu0 0.0
  %350 = vmatprep.subr.mxu0 0.0
  %351 = vmatpush2.msra.mxu0 0.0
  %352 = vmatprep.subr.mxu0 0.0
  %353 = vmatpush2.msra.mxu0 0.0
  %354 = vmatprep.subr.mxu0 0.0
  %355 = vmatpush2.msra.mxu0 0.0
  %356 = vmatprep.subr.mxu0 0.0
  %357 = vmatpush2.msra.mxu0 0.0
  %358 = vmatprep.subr.mxu0 0.0
  %359 = vmatpush2.msra.mxu0 0.0
  %360 = vmatprep.mubr.f32.mxu0 0.0
  %361 = vmatmul.mubr.f32.gmra.mxu0 %v101
  %v362 = vpop.f32.mrf.mxu0
  %v363 = vadd.f32 %v97, %v362
  %v364 = vpop.f32.mrf.mxu0
  %365 = vmatprep.mubr.f32.mxu0 0.0
  %366 = vmatmul.mubr.f32.gmra.mxu0 %v104
  %v367 = vpop.f32.mrf.mxu0
  %v368 = vadd.f32 %v97, %v367
  %v369 = vpop.f32.mrf.mxu0
  %370 = vmatprep.mubr.f32.mxu0 0.0
  %371 = vmatmul.mubr.f32.gmra.mxu0 %v107
  %v372 = vpop.f32.mrf.mxu0
  %v373 = vadd.f32 %v97, %v372
  %v374 = vpop.f32.mrf.mxu0
  %375 = vmatprep.mubr.f32.mxu0 0.0
  %376 = vmatmul.mubr.f32.gmra.mxu0 %v110
  %v377 = vpop.f32.mrf.mxu0
  %v378 = vadd.f32 %v97, %v377
  %v379 = vpop.f32.mrf.mxu0
  %380 = vmatprep.mubr.f32.mxu0 0.0
  %381 = vmatmul.mubr.f32.gmra.mxu0 %v113
  %v382 = vpop.f32.mrf.mxu0
  %v383 = vadd.f32 %v97, %v382
  %v384 = vpop.f32.mrf.mxu0
  %385 = vmatprep.mubr.f32.mxu0 0.0
  %386 = vmatmul.mubr.f32.gmra.mxu0 %v116
  %v387 = vpop.f32.mrf.mxu0
  %v388 = vadd.f32 %v97, %v387
  %v389 = vpop.f32.mrf.mxu0
  %390 = vmatprep.mubr.f32.mxu0 0.0
  %391 = vmatmul.mubr.f32.gmra.mxu0 %v119
  %v392 = vpop.f32.mrf.mxu0
  %v393 = vadd.f32 %v97, %v392
  %v394 = vpop.f32.mrf.mxu0
  %395 = vmatprep.mubr.f32.mxu0 0.0
  %396 = vmatmul.mubr.f32.gmra.mxu0 %v122
  %v397 = vpop.f32.mrf.mxu0
  %v398 = vadd.f32 %v97, %v397
  %v399 = vpop.f32.mrf.mxu0
  %400 = vmatprep.mubr.f32.mxu0 0.0
  %401 = vmatmul.mubr.f32.gmra.mxu0 %v125
  %v402 = vpop.f32.mrf.mxu0
  %v403 = vadd.f32 %v97, %v402
  %v404 = vpop.f32.mrf.mxu0
  %405 = vmatprep.mubr.f32.mxu0 0.0
  %406 = vmatmul.mubr.f32.gmra.mxu0 %v128
  %v407 = vpop.f32.mrf.mxu0
  %v408 = vadd.f32 %v97, %v407
  %v409 = vpop.f32.mrf.mxu0
  %410 = vmatprep.mubr.f32.mxu0 0.0
  %411 = vmatmul.mubr.f32.gmra.mxu0 %v131
  %v412 = vpop.f32.mrf.mxu0
  %v413 = vadd.f32 %v97, %v412
  %v414 = vpop.f32.mrf.mxu0
  %415 = vmatprep.mubr.f32.mxu0 0.0
  %416 = vmatmul.mubr.f32.gmra.mxu0 %v134
  %v417 = vpop.f32.mrf.mxu0
  %v418 = vadd.f32 %v97, %v417
  %v419 = vpop.f32.mrf.mxu0
  %420 = vmatprep.mubr.f32.mxu0 0.0
  %421 = vmatmul.mubr.f32.gmra.mxu0 %v137
  %v422 = vpop.f32.mrf.mxu0
  %v423 = vadd.f32 %v97, %v422
  %v424 = vpop.f32.mrf.mxu0
  %425 = vmatprep.mubr.f32.mxu0 0.0
  %426 = vmatmul.mubr.f32.gmra.mxu0 %v140
  %v427 = vpop.f32.mrf.mxu0
  %v428 = vadd.f32 %v97, %v427
  %v429 = vpop.f32.mrf.mxu0
  %430 = vmatprep.mubr.f32.mxu0 0.0
  %431 = vmatmul.mubr.f32.gmra.mxu0 %v143
  %v432 = vpop.f32.mrf.mxu0
  %v433 = vadd.f32 %v97, %v432
  %v434 = vpop.f32.mrf.mxu0
  %435 = vmatprep.mubr.f32.mxu0 0.0
  %436 = vmatmul.mubr.f32.gmra.mxu0 %v146
  %v437 = vpop.f32.mrf.mxu0
  %v438 = vadd.f32 %v97, %v437
  %v439 = vpop.f32.mrf.mxu0
  %440 = vmatprep.mubr.f32.mxu0 0.0
  %441 = vmatmul.mubr.f32.gmra.mxu0 %v149
  %v442 = vpop.f32.mrf.mxu0
  %v443 = vadd.f32 %v97, %v442
  %v444 = vpop.f32.mrf.mxu0
  %445 = vmatprep.mubr.f32.mxu0 0.0
  %446 = vmatmul.mubr.f32.gmra.mxu0 %v152
  %v447 = vpop.f32.mrf.mxu0
  %v448 = vadd.f32 %v97, %v447
  %v449 = vpop.f32.mrf.mxu0
  %450 = vmatprep.mubr.f32.mxu0 0.0
  %451 = vmatmul.mubr.f32.gmra.mxu0 %v155
  %v452 = vpop.f32.mrf.mxu0
  %v453 = vadd.f32 %v97, %v452
  %v454 = vpop.f32.mrf.mxu0
  %455 = vmatprep.mubr.f32.mxu0 0.0
  %456 = vmatmul.mubr.f32.gmra.mxu0 %v158
  %v457 = vpop.f32.mrf.mxu0
  %v458 = vadd.f32 %v97, %v457
  %v459 = vpop.f32.mrf.mxu0
  %460 = vmatprep.mubr.f32.mxu0 0.0
  %461 = vmatmul.mubr.f32.gmra.mxu0 %v161
  %v462 = vpop.f32.mrf.mxu0
  %v463 = vadd.f32 %v97, %v462
  %v464 = vpop.f32.mrf.mxu0
  %465 = vmatprep.mubr.f32.mxu0 0.0
  %466 = vmatmul.mubr.f32.gmra.mxu0 %v164
  %v467 = vpop.f32.mrf.mxu0
  %v468 = vadd.f32 %v97, %v467
  %v469 = vpop.f32.mrf.mxu0
  %470 = vmatprep.mubr.f32.mxu0 0.0
  %471 = vmatmul.mubr.f32.gmra.mxu0 %v167
  %v472 = vpop.f32.mrf.mxu0
  %v473 = vadd.f32 %v97, %v472
  %v474 = vpop.f32.mrf.mxu0
  %475 = vmatprep.mubr.f32.mxu0 0.0
  %476 = vmatmul.mubr.f32.gmra.mxu0 %v170
  %v477 = vpop.f32.mrf.mxu0
  %v478 = vadd.f32 %v97, %v477
  %v479 = vpop.f32.mrf.mxu0
  %480 = vmatprep.mubr.f32.mxu0 0.0
  %481 = vmatmul.mubr.f32.gmra.mxu0 %v173
  %v482 = vpop.f32.mrf.mxu0
  %v483 = vadd.f32 %v97, %v482
  %v484 = vpop.f32.mrf.mxu0
  %485 = vmatprep.mubr.f32.mxu0 0.0
  %486 = vmatmul.mubr.f32.gmra.mxu0 %v176
  %v487 = vpop.f32.mrf.mxu0
  %v488 = vadd.f32 %v97, %v487
  %v489 = vpop.f32.mrf.mxu0
  %490 = vmatprep.mubr.f32.mxu0 0.0
  %491 = vmatmul.mubr.f32.gmra.mxu0 %v179
  %v492 = vpop.f32.mrf.mxu0
  %v493 = vadd.f32 %v97, %v492
  %v494 = vpop.f32.mrf.mxu0
  %495 = vmatprep.mubr.f32.mxu0 0.0
  %496 = vmatmul.mubr.f32.gmra.mxu0 %v182
  %v497 = vpop.f32.mrf.mxu0
  %v498 = vadd.f32 %v97, %v497
  %v499 = vpop.f32.mrf.mxu0
  %500 = vmatprep.mubr.f32.mxu0 0.0
  %501 = vmatmul.mubr.f32.gmra.mxu0 %v185
  %v502 = vpop.f32.mrf.mxu0
  %v503 = vadd.f32 %v97, %v502
  %v504 = vpop.f32.mrf.mxu0
  %505 = vmatprep.mubr.f32.mxu0 0.0
  %506 = vmatmul.mubr.f32.gmra.mxu0 %v188
  %v507 = vpop.f32.mrf.mxu0
  %v508 = vadd.f32 %v97, %v507
  %v509 = vpop.f32.mrf.mxu0
  %510 = vmatprep.mubr.f32.mxu0 0.0
  %511 = vmatmul.mubr.f32.gmra.mxu0 %v191
  %v512 = vpop.f32.mrf.mxu0
  %v513 = vadd.f32 %v97, %v512
  %v514 = vpop.f32.mrf.mxu0
  %515 = vmatprep.mubr.f32.mxu0 0.0
  %516 = vmatmul.mubr.f32.gmra.mxu0 %v194
  %v517 = vpop.f32.mrf.mxu0
  %v518 = vadd.f32 %v97, %v517
  %v519 = vpop.f32.mrf.mxu0
  %520 = vmatprep.mubr.f32.mxu0 0.0
  %521 = vmatmul.mubr.f32.gmra.mxu0 %v197
  %v522 = vpop.f32.mrf.mxu0
  %v523 = vadd.f32 %v97, %v522
  %v524 = vpop.f32.mrf.mxu0
  %525 = vmatprep.mubr.f32.mxu0 0.0
  %526 = vmatmul.mubr.f32.gmra.mxu0 %v200
  %v527 = vpop.f32.mrf.mxu0
  %v528 = vadd.f32 %v97, %v527
  %v529 = vpop.f32.mrf.mxu0
  %530 = vmatprep.mubr.f32.mxu0 0.0
  %531 = vmatmul.mubr.f32.gmra.mxu0 %v203
  %v532 = vpop.f32.mrf.mxu0
  %v533 = vadd.f32 %v97, %v532
  %v534 = vpop.f32.mrf.mxu0
  %535 = vmatprep.mubr.f32.mxu0 0.0
  %536 = vmatmul.mubr.f32.gmra.mxu0 %v206
  %v537 = vpop.f32.mrf.mxu0
  %v538 = vadd.f32 %v97, %v537
  %v539 = vpop.f32.mrf.mxu0
  %540 = vmatprep.mubr.f32.mxu0 0.0
  %541 = vmatmul.mubr.f32.gmra.mxu0 %v209
  %v542 = vpop.f32.mrf.mxu0
  %v543 = vadd.f32 %v97, %v542
  %v544 = vpop.f32.mrf.mxu0
  %545 = vmatprep.mubr.f32.mxu0 0.0
  %546 = vmatmul.mubr.f32.gmra.mxu0 %v212
  %v547 = vpop.f32.mrf.mxu0
  %v548 = vadd.f32 %v97, %v547
  %v549 = vpop.f32.mrf.mxu0
  %550 = vmatprep.mubr.f32.mxu0 0.0
  %551 = vmatmul.mubr.f32.gmra.mxu0 %v215
  %v552 = vpop.f32.mrf.mxu0
  %v553 = vadd.f32 %v97, %v552
  %v554 = vpop.f32.mrf.mxu0
  %555 = vmatprep.mubr.f32.mxu0 0.0
  %556 = vmatmul.mubr.f32.gmra.mxu0 %v218
  %v557 = vpop.f32.mrf.mxu0
  %v558 = vadd.f32 %v97, %v557
  %v559 = vpop.f32.mrf.mxu0
  %560 = vmatprep.mubr.f32.mxu0 0.0
  %561 = vmatmul.mubr.f32.gmra.mxu0 %v221
  %v562 = vpop.f32.mrf.mxu0
  %v563 = vadd.f32 %v97, %v562
  %v564 = vpop.f32.mrf.mxu0
  %565 = vmatprep.mubr.f32.mxu0 0.0
  %566 = vmatmul.mubr.f32.gmra.mxu0 %v224
  %v567 = vpop.f32.mrf.mxu0
  %v568 = vadd.f32 %v97, %v567
  %v569 = vpop.f32.mrf.mxu0
  %570 = vmatprep.mubr.f32.mxu0 0.0
  %571 = vmatmul.mubr.f32.gmra.mxu0 %v227
  %v572 = vpop.f32.mrf.mxu0
  %v573 = vadd.f32 %v97, %v572
  %v574 = vpop.f32.mrf.mxu0
  %575 = vmatprep.mubr.f32.mxu0 0.0
  %576 = vmatmul.mubr.f32.gmra.mxu0 %v230
  %v577 = vpop.f32.mrf.mxu0
  %v578 = vadd.f32 %v97, %v577
  %v579 = vpop.f32.mrf.mxu0
  %580 = vmatprep.mubr.f32.mxu0 0.0
  %581 = vmatmul.mubr.f32.gmra.mxu0 %v233
  %v582 = vpop.f32.mrf.mxu0
  %v583 = vadd.f32 %v97, %v582
  %v584 = vpop.f32.mrf.mxu0
  %585 = vmatprep.mubr.f32.mxu0 0.0
  %586 = vmatmul.mubr.f32.gmra.mxu0 %v236
  %v587 = vpop.f32.mrf.mxu0
  %v588 = vadd.f32 %v97, %v587
  %v589 = vpop.f32.mrf.mxu0
  %590 = vmatprep.mubr.f32.mxu0 0.0
  %591 = vmatmul.mubr.f32.gmra.mxu0 %v239
  %v592 = vpop.f32.mrf.mxu0
  %v593 = vadd.f32 %v97, %v592
  %v594 = vpop.f32.mrf.mxu0
  %595 = vmatprep.mubr.f32.mxu0 0.0
  %596 = vmatmul.mubr.f32.gmra.mxu0 %v242
  %v597 = vpop.f32.mrf.mxu0
  %v598 = vadd.f32 %v97, %v597
  %v599 = vpop.f32.mrf.mxu0
  %600 = vmatprep.mubr.f32.mxu0 0.0
  %601 = vmatmul.mubr.f32.gmra.mxu0 %v245
  %v602 = vpop.f32.mrf.mxu0
  %v603 = vadd.f32 %v97, %v602
  %v604 = vpop.f32.mrf.mxu0
  %605 = vmatprep.mubr.f32.mxu0 0.0
  %606 = vmatmul.mubr.f32.gmra.mxu0 %v248
  %v607 = vpop.f32.mrf.mxu0
  %v608 = vadd.f32 %v97, %v607
  %v609 = vpop.f32.mrf.mxu0
  %610 = vmatprep.mubr.f32.mxu0 0.0
  %611 = vmatmul.mubr.f32.gmra.mxu0 %v251
  %v612 = vpop.f32.mrf.mxu0
  %v613 = vadd.f32 %v97, %v612
  %v614 = vpop.f32.mrf.mxu0
  %615 = vmatprep.mubr.f32.mxu0 0.0
  %616 = vmatmul.mubr.f32.gmra.mxu0 %v254
  %v617 = vpop.f32.mrf.mxu0
  %v618 = vadd.f32 %v97, %v617
  %v619 = vpop.f32.mrf.mxu0
  %620 = vmatprep.mubr.f32.mxu0 0.0
  %621 = vmatmul.mubr.f32.gmra.mxu0 %v257
  %v622 = vpop.f32.mrf.mxu0
  %v623 = vadd.f32 %v97, %v622
  %v624 = vpop.f32.mrf.mxu0
  %625 = vmatprep.mubr.f32.mxu0 0.0
  %626 = vmatmul.mubr.f32.gmra.mxu0 %v260
  %v627 = vpop.f32.mrf.mxu0
  %v628 = vadd.f32 %v97, %v627
  %v629 = vpop.f32.mrf.mxu0
  %630 = vmatprep.mubr.f32.mxu0 0.0
  %631 = vmatmul.mubr.f32.gmra.mxu0 %v263
  %v632 = vpop.f32.mrf.mxu0
  %v633 = vadd.f32 %v97, %v632
  %v634 = vpop.f32.mrf.mxu0
  %635 = vmatprep.mubr.f32.mxu0 0.0
  %636 = vmatmul.mubr.f32.gmra.mxu0 %v266
  %v637 = vpop.f32.mrf.mxu0
  %v638 = vadd.f32 %v97, %v637
  %v639 = vpop.f32.mrf.mxu0
  %640 = vmatprep.mubr.f32.mxu0 0.0
  %641 = vmatmul.mubr.f32.gmra.mxu0 %v269
  %v642 = vpop.f32.mrf.mxu0
  %v643 = vadd.f32 %v97, %v642
  %v644 = vpop.f32.mrf.mxu0
  %645 = vmatprep.mubr.f32.mxu0 0.0
  %646 = vmatmul.mubr.f32.gmra.mxu0 %v272
  %v647 = vpop.f32.mrf.mxu0
  %v648 = vadd.f32 %v97, %v647
  %v649 = vpop.f32.mrf.mxu0
  %650 = vmatprep.mubr.f32.mxu0 0.0
  %651 = vmatmul.mubr.f32.gmra.mxu0 %v275
  %v652 = vpop.f32.mrf.mxu0
  %v653 = vadd.f32 %v97, %v652
  %v654 = vpop.f32.mrf.mxu0
  %655 = vmatprep.mubr.f32.mxu0 0.0
  %656 = vmatmul.mubr.f32.gmra.mxu0 %v278
  %v657 = vpop.f32.mrf.mxu0
  %v658 = vadd.f32 %v97, %v657
  %v659 = vpop.f32.mrf.mxu0
  %660 = vmatprep.mubr.f32.mxu0 0.0
  %661 = vmatmul.mubr.f32.gmra.mxu0 %v281
  %v662 = vpop.f32.mrf.mxu0
  %v663 = vadd.f32 %v97, %v662
  %v664 = vpop.f32.mrf.mxu0
  %665 = vmatprep.mubr.f32.mxu0 0.0
  %666 = vmatmul.mubr.f32.gmra.mxu0 %v284
  %v667 = vpop.f32.mrf.mxu0
  %v668 = vadd.f32 %v97, %v667
  %v669 = vpop.f32.mrf.mxu0
  %670 = vmatprep.mubr.f32.mxu0 0.0
  %671 = vmatmul.mubr.f32.gmra.mxu0 %v287
  %v672 = vpop.f32.mrf.mxu0
  %v673 = vadd.f32 %v97, %v672
  %v674 = vpop.f32.mrf.mxu0
  %675 = vmatprep.mubr.f32.mxu0 0.0
  %676 = vmatmul.mubr.f32.gmra.mxu0 %v290
  %v677 = vpop.f32.mrf.mxu0
  %v678 = vadd.f32 %v97, %v677
  %v679 = vpop.f32.mrf.mxu0
  %680 = vdwg.mxu0
  %vm681 = vcmask 261120
  %682 = vst.msk [vmem:[%s3] sm:$0xff] %vm681, %v363
  %683 = vst.msk [vmem:[%s3 + $0x8] sm:$0xff] %vm681, %v368
  %684 = vst.msk [vmem:[%s3 + $0x10] sm:$0xff] %vm681, %v373
  %685 = vst.msk [vmem:[%s3 + $0x18] sm:$0xff] %vm681, %v378
  %686 = vst.msk [vmem:[%s3 + $0x20] sm:$0xff] %vm681, %v383
  %687 = vst.msk [vmem:[%s3 + $0x28] sm:$0xff] %vm681, %v388
  %688 = vst.msk [vmem:[%s3 + $0x30] sm:$0xff] %vm681, %v393
  %689 = vst.msk [vmem:[%s3 + $0x38] sm:$0xff] %vm681, %v398
  %690 = vst.msk [vmem:[%s3 + $0x40] sm:$0xff] %vm681, %v403
  %691 = vst.msk [vmem:[%s3 + $0x48] sm:$0xff] %vm681, %v408
  %692 = vst.msk [vmem:[%s3 + $0x50] sm:$0xff] %vm681, %v413
  %693 = vst.msk [vmem:[%s3 + $0x58] sm:$0xff] %vm681, %v418
  %694 = vst.msk [vmem:[%s3 + $0x60] sm:$0xff] %vm681, %v423
  %695 = vst.msk [vmem:[%s3 + $0x68] sm:$0xff] %vm681, %v428
  %696 = vst.msk [vmem:[%s3 + $0x70] sm:$0xff] %vm681, %v433
  %697 = vst.msk [vmem:[%s3 + $0x78] sm:$0xff] %vm681, %v438
  %698 = vst.msk [vmem:[%s3 + $0x80] sm:$0xff] %vm681, %v443
  %699 = vst.msk [vmem:[%s3 + $0x88] sm:$0xff] %vm681, %v448
  %700 = vst.msk [vmem:[%s3 + $0x90] sm:$0xff] %vm681, %v453
  %701 = vst.msk [vmem:[%s3 + $0x98] sm:$0xff] %vm681, %v458
  %702 = vst.msk [vmem:[%s3 + $0xa0] sm:$0xff] %vm681, %v463
  %703 = vst.msk [vmem:[%s3 + $0xa8] sm:$0xff] %vm681, %v468
  %704 = vst.msk [vmem:[%s3 + $0xb0] sm:$0xff] %vm681, %v473
  %705 = vst.msk [vmem:[%s3 + $0xb8] sm:$0xff] %vm681, %v478
  %706 = vst.msk [vmem:[%s3 + $0xc0] sm:$0xff] %vm681, %v483
  %707 = vst.msk [vmem:[%s3 + $0xc8] sm:$0xff] %vm681, %v488
  %708 = vst.msk [vmem:[%s3 + $0xd0] sm:$0xff] %vm681, %v493
  %709 = vst.msk [vmem:[%s3 + $0xd8] sm:$0xff] %vm681, %v498
  %710 = vst.msk [vmem:[%s3 + $0xe0] sm:$0xff] %vm681, %v503
  %711 = vst.msk [vmem:[%s3 + $0xe8] sm:$0xff] %vm681, %v508
  %712 = vst.msk [vmem:[%s3 + $0xf0] sm:$0xff] %vm681, %v513
  %713 = vst.msk [vmem:[%s3 + $0xf8] sm:$0xff] %vm681, %v518
  %714 = vst.msk [vmem:[%s3 + $0x100] sm:$0xff] %vm681, %v523
  %715 = vst.msk [vmem:[%s3 + $0x108] sm:$0xff] %vm681, %v528
  %716 = vst.msk [vmem:[%s3 + $0x110] sm:$0xff] %vm681, %v533
  %717 = vst.msk [vmem:[%s3 + $0x118] sm:$0xff] %vm681, %v538
  %718 = vst.msk [vmem:[%s3 + $0x120] sm:$0xff] %vm681, %v543
  %719 = vst.msk [vmem:[%s3 + $0x128] sm:$0xff] %vm681, %v548
  %720 = vst.msk [vmem:[%s3 + $0x130] sm:$0xff] %vm681, %v553
  %721 = vst.msk [vmem:[%s3 + $0x138] sm:$0xff] %vm681, %v558
  %722 = vst.msk [vmem:[%s3 + $0x140] sm:$0xff] %vm681, %v563
  %723 = vst.msk [vmem:[%s3 + $0x148] sm:$0xff] %vm681, %v568
  %724 = vst.msk [vmem:[%s3 + $0x150] sm:$0xff] %vm681, %v573
  %725 = vst.msk [vmem:[%s3 + $0x158] sm:$0xff] %vm681, %v578
  %726 = vst.msk [vmem:[%s3 + $0x160] sm:$0xff] %vm681, %v583
  %727 = vst.msk [vmem:[%s3 + $0x168] sm:$0xff] %vm681, %v588
  %728 = vst.msk [vmem:[%s3 + $0x170] sm:$0xff] %vm681, %v593
  %729 = vst.msk [vmem:[%s3 + $0x178] sm:$0xff] %vm681, %v598
  %730 = vst.msk [vmem:[%s3 + $0x180] sm:$0xff] %vm681, %v603
  %731 = vst.msk [vmem:[%s3 + $0x188] sm:$0xff] %vm681, %v608
  %732 = vst.msk [vmem:[%s3 + $0x190] sm:$0xff] %vm681, %v613
  %733 = vst.msk [vmem:[%s3 + $0x198] sm:$0xff] %vm681, %v618
  %734 = vst.msk [vmem:[%s3 + $0x1a0] sm:$0xff] %vm681, %v623
  %735 = vst.msk [vmem:[%s3 + $0x1a8] sm:$0xff] %vm681, %v628
  %736 = vst.msk [vmem:[%s3 + $0x1b0] sm:$0xff] %vm681, %v633
  %737 = vst.msk [vmem:[%s3 + $0x1b8] sm:$0xff] %vm681, %v638
  %738 = vst.msk [vmem:[%s3 + $0x1c0] sm:$0xff] %vm681, %v643
  %739 = vst.msk [vmem:[%s3 + $0x1c8] sm:$0xff] %vm681, %v648
  %740 = vst.msk [vmem:[%s3 + $0x1d0] sm:$0xff] %vm681, %v653
  %741 = vst.msk [vmem:[%s3 + $0x1d8] sm:$0xff] %vm681, %v658
  %742 = vst.msk [vmem:[%s3 + $0x1e0] sm:$0xff] %vm681, %v663
  %743 = vst.msk [vmem:[%s3 + $0x1e8] sm:$0xff] %vm681, %v668
  %744 = vst.msk [vmem:[%s3 + $0x1f0] sm:$0xff] %vm681, %v673
  %745 = vst.msk [vmem:[%s3 + $0x1f8] sm:$0xff] %vm681, %v678
  %v746 = vld [vmem:[%s4] sm:$0x1]
  %v747 = vsel %vm681, %v363, 0.0
  %v748 = vsel %vm681, %v368, 0.0
  %v749 = vadd.f32 %v747, %v748
  %v750 = vsel %vm681, %v373, 0.0
  %v751 = vadd.f32 %v749, %v750
  %v752 = vsel %vm681, %v378, 0.0
  %v753 = vadd.f32 %v751, %v752
  %v754 = vsel %vm681, %v383, 0.0
  %v755 = vadd.f32 %v753, %v754
  %v756 = vsel %vm681, %v388, 0.0
  %v757 = vadd.f32 %v755, %v756
  %v758 = vsel %vm681, %v393, 0.0
  %v759 = vadd.f32 %v757, %v758
  %v760 = vsel %vm681, %v398, 0.0
  %v761 = vadd.f32 %v759, %v760
  %v762 = vsel %vm681, %v403, 0.0
  %v763 = vadd.f32 %v761, %v762
  %v764 = vsel %vm681, %v408, 0.0
  %v765 = vadd.f32 %v763, %v764
  %v766 = vsel %vm681, %v413, 0.0
  %v767 = vadd.f32 %v765, %v766
  %v768 = vsel %vm681, %v418, 0.0
  %v769 = vadd.f32 %v767, %v768
  %v770 = vsel %vm681, %v423, 0.0
  %v771 = vadd.f32 %v769, %v770
  %v772 = vsel %vm681, %v428, 0.0
  %v773 = vadd.f32 %v771, %v772
  %v774 = vsel %vm681, %v433, 0.0
  %v775 = vadd.f32 %v773, %v774
  %v776 = vsel %vm681, %v438, 0.0
  %v777 = vadd.f32 %v775, %v776
  %v778 = vsel %vm681, %v443, 0.0
  %v779 = vadd.f32 %v777, %v778
  %v780 = vsel %vm681, %v448, 0.0
  %v781 = vadd.f32 %v779, %v780
  %v782 = vsel %vm681, %v453, 0.0
  %v783 = vadd.f32 %v781, %v782
  %v784 = vsel %vm681, %v458, 0.0
  %v785 = vadd.f32 %v783, %v784
  %v786 = vsel %vm681, %v463, 0.0
  %v787 = vadd.f32 %v785, %v786
  %v788 = vsel %vm681, %v468, 0.0
  %v789 = vadd.f32 %v787, %v788
  %v790 = vsel %vm681, %v473, 0.0
  %v791 = vadd.f32 %v789, %v790
  %v792 = vsel %vm681, %v478, 0.0
  %v793 = vadd.f32 %v791, %v792
  %v794 = vsel %vm681, %v483, 0.0
  %v795 = vadd.f32 %v793, %v794
  %v796 = vsel %vm681, %v488, 0.0
  %v797 = vadd.f32 %v795, %v796
  %v798 = vsel %vm681, %v493, 0.0
  %v799 = vadd.f32 %v797, %v798
  %v800 = vsel %vm681, %v498, 0.0
  %v801 = vadd.f32 %v799, %v800
  %v802 = vsel %vm681, %v503, 0.0
  %v803 = vadd.f32 %v801, %v802
  %v804 = vsel %vm681, %v508, 0.0
  %v805 = vadd.f32 %v803, %v804
  %v806 = vsel %vm681, %v513, 0.0
  %v807 = vadd.f32 %v805, %v806
  %v808 = vsel %vm681, %v518, 0.0
  %v809 = vadd.f32 %v807, %v808
  %v810 = vsel %vm681, %v523, 0.0
  %v811 = vadd.f32 %v809, %v810
  %v812 = vsel %vm681, %v528, 0.0
  %v813 = vadd.f32 %v811, %v812
  %v814 = vsel %vm681, %v533, 0.0
  %v815 = vadd.f32 %v813, %v814
  %v816 = vsel %vm681, %v538, 0.0
  %v817 = vadd.f32 %v815, %v816
  %v818 = vsel %vm681, %v543, 0.0
  %v819 = vadd.f32 %v817, %v818
  %v820 = vsel %vm681, %v548, 0.0
  %v821 = vadd.f32 %v819, %v820
  %v822 = vsel %vm681, %v553, 0.0
  %v823 = vadd.f32 %v821, %v822
  %v824 = vsel %vm681, %v558, 0.0
  %v825 = vadd.f32 %v823, %v824
  %v826 = vsel %vm681, %v563, 0.0
  %v827 = vadd.f32 %v825, %v826
  %v828 = vsel %vm681, %v568, 0.0
  %v829 = vadd.f32 %v827, %v828
  %v830 = vsel %vm681, %v573, 0.0
  %v831 = vadd.f32 %v829, %v830
  %v832 = vsel %vm681, %v578, 0.0
  %v833 = vadd.f32 %v831, %v832
  %v834 = vsel %vm681, %v583, 0.0
  %v835 = vadd.f32 %v833, %v834
  %v836 = vsel %vm681, %v588, 0.0
  %v837 = vadd.f32 %v835, %v836
  %v838 = vsel %vm681, %v593, 0.0
  %v839 = vadd.f32 %v837, %v838
  %v840 = vsel %vm681, %v598, 0.0
  %v841 = vadd.f32 %v839, %v840
  %v842 = vsel %vm681, %v603, 0.0
  %v843 = vadd.f32 %v841, %v842
  %v844 = vsel %vm681, %v608, 0.0
  %v845 = vadd.f32 %v843, %v844
  %v846 = vsel %vm681, %v613, 0.0
  %v847 = vadd.f32 %v845, %v846
  %v848 = vsel %vm681, %v618, 0.0
  %v849 = vadd.f32 %v847, %v848
  %v850 = vsel %vm681, %v623, 0.0
  %v851 = vadd.f32 %v849, %v850
  %v852 = vsel %vm681, %v628, 0.0
  %v853 = vadd.f32 %v851, %v852
  %v854 = vsel %vm681, %v633, 0.0
  %v855 = vadd.f32 %v853, %v854
  %v856 = vsel %vm681, %v638, 0.0
  %v857 = vadd.f32 %v855, %v856
  %v858 = vsel %vm681, %v643, 0.0
  %v859 = vadd.f32 %v857, %v858
  %v860 = vsel %vm681, %v648, 0.0
  %v861 = vadd.f32 %v859, %v860
  %v862 = vsel %vm681, %v653, 0.0
  %v863 = vadd.f32 %v861, %v862
  %v864 = vsel %vm681, %v658, 0.0
  %v865 = vadd.f32 %v863, %v864
  %v866 = vsel %vm681, %v663, 0.0
  %v867 = vadd.f32 %v865, %v866
  %v868 = vsel %vm681, %v668, 0.0
  %v869 = vadd.f32 %v867, %v868
  %v870 = vsel %vm681, %v673, 0.0
  %v871 = vadd.f32 %v869, %v870
  %v872 = vsel %vm681, %v678, 0.0
  %v873 = vadd.f32 %v871, %v872
  %v874 = vrot.slane %v873, 4
  %v875 = vadd.f32 %v873, %v874
  %v876 = vrot.slane %v875, 2
  %v877 = vadd.f32 %v875, %v876
  %v878 = vrot.slane %v877, 1
  %v879 = vadd.f32 %v877, %v878
  %v880 = vadd.f32 %v746, %v879
  %vm881 = vcmask 253952
  %882 = vst.msk [vmem:[%s4] sm:$0x1] %vm881, %v880
  %v883 = vld [vmem:[%s5] sm:$0x1]
  %v884 = vmul.f32 %v363, %v363
  %v885 = vmul.f32 %v368, %v368
  %v886 = vmul.f32 %v373, %v373
  %v887 = vmul.f32 %v378, %v378
  %v888 = vmul.f32 %v383, %v383
  %v889 = vmul.f32 %v388, %v388
  %v890 = vmul.f32 %v393, %v393
  %v891 = vmul.f32 %v398, %v398
  %v892 = vmul.f32 %v403, %v403
  %v893 = vmul.f32 %v408, %v408
  %v894 = vmul.f32 %v413, %v413
  %v895 = vmul.f32 %v418, %v418
  %v896 = vmul.f32 %v423, %v423
  %v897 = vmul.f32 %v428, %v428
  %v898 = vmul.f32 %v433, %v433
  %v899 = vmul.f32 %v438, %v438
  %v900 = vmul.f32 %v443, %v443
  %v901 = vmul.f32 %v448, %v448
  %v902 = vmul.f32 %v453, %v453
  %v903 = vmul.f32 %v458, %v458
  %v904 = vmul.f32 %v463, %v463
  %v905 = vmul.f32 %v468, %v468
  %v906 = vmul.f32 %v473, %v473
  %v907 = vmul.f32 %v478, %v478
  %v908 = vmul.f32 %v483, %v483
  %v909 = vmul.f32 %v488, %v488
  %v910 = vmul.f32 %v493, %v493
  %v911 = vmul.f32 %v498, %v498
  %v912 = vmul.f32 %v503, %v503
  %v913 = vmul.f32 %v508, %v508
  %v914 = vmul.f32 %v513, %v513
  %v915 = vmul.f32 %v518, %v518
  %v916 = vmul.f32 %v523, %v523
  %v917 = vmul.f32 %v528, %v528
  %v918 = vmul.f32 %v533, %v533
  %v919 = vmul.f32 %v538, %v538
  %v920 = vmul.f32 %v543, %v543
  %v921 = vmul.f32 %v548, %v548
  %v922 = vmul.f32 %v553, %v553
  %v923 = vmul.f32 %v558, %v558
  %v924 = vmul.f32 %v563, %v563
  %v925 = vmul.f32 %v568, %v568
  %v926 = vmul.f32 %v573, %v573
  %v927 = vmul.f32 %v578, %v578
  %v928 = vmul.f32 %v583, %v583
  %v929 = vmul.f32 %v588, %v588
  %v930 = vmul.f32 %v593, %v593
  %v931 = vmul.f32 %v598, %v598
  %v932 = vmul.f32 %v603, %v603
  %v933 = vmul.f32 %v608, %v608
  %v934 = vmul.f32 %v613, %v613
  %v935 = vmul.f32 %v618, %v618
  %v936 = vmul.f32 %v623, %v623
  %v937 = vmul.f32 %v628, %v628
  %v938 = vmul.f32 %v633, %v633
  %v939 = vmul.f32 %v638, %v638
  %v940 = vmul.f32 %v643, %v643
  %v941 = vmul.f32 %v648, %v648
  %v942 = vmul.f32 %v653, %v653
  %v943 = vmul.f32 %v658, %v658
  %v944 = vmul.f32 %v663, %v663
  %v945 = vmul.f32 %v668, %v668
  %v946 = vmul.f32 %v673, %v673
  %v947 = vmul.f32 %v678, %v678
  %v948 = vsel %vm681, %v884, 0.0
  %v949 = vsel %vm681, %v885, 0.0
  %v950 = vadd.f32 %v948, %v949
  %v951 = vsel %vm681, %v886, 0.0
  %v952 = vadd.f32 %v950, %v951
  %v953 = vsel %vm681, %v887, 0.0
  %v954 = vadd.f32 %v952, %v953
  %v955 = vsel %vm681, %v888, 0.0
  %v956 = vadd.f32 %v954, %v955
  %v957 = vsel %vm681, %v889, 0.0
  %v958 = vadd.f32 %v956, %v957
  %v959 = vsel %vm681, %v890, 0.0
  %v960 = vadd.f32 %v958, %v959
  %v961 = vsel %vm681, %v891, 0.0
  %v962 = vadd.f32 %v960, %v961
  %v963 = vsel %vm681, %v892, 0.0
  %v964 = vadd.f32 %v962, %v963
  %v965 = vsel %vm681, %v893, 0.0
  %v966 = vadd.f32 %v964, %v965
  %v967 = vsel %vm681, %v894, 0.0
  %v968 = vadd.f32 %v966, %v967
  %v969 = vsel %vm681, %v895, 0.0
  %v970 = vadd.f32 %v968, %v969
  %v971 = vsel %vm681, %v896, 0.0
  %v972 = vadd.f32 %v970, %v971
  %v973 = vsel %vm681, %v897, 0.0
  %v974 = vadd.f32 %v972, %v973
  %v975 = vsel %vm681, %v898, 0.0
  %v976 = vadd.f32 %v974, %v975
  %v977 = vsel %vm681, %v899, 0.0
  %v978 = vadd.f32 %v976, %v977
  %v979 = vsel %vm681, %v900, 0.0
  %v980 = vadd.f32 %v978, %v979
  %v981 = vsel %vm681, %v901, 0.0
  %v982 = vadd.f32 %v980, %v981
  %v983 = vsel %vm681, %v902, 0.0
  %v984 = vadd.f32 %v982, %v983
  %v985 = vsel %vm681, %v903, 0.0
  %v986 = vadd.f32 %v984, %v985
  %v987 = vsel %vm681, %v904, 0.0
  %v988 = vadd.f32 %v986, %v987
  %v989 = vsel %vm681, %v905, 0.0
  %v990 = vadd.f32 %v988, %v989
  %v991 = vsel %vm681, %v906, 0.0
  %v992 = vadd.f32 %v990, %v991
  %v993 = vsel %vm681, %v907, 0.0
  %v994 = vadd.f32 %v992, %v993
  %v995 = vsel %vm681, %v908, 0.0
  %v996 = vadd.f32 %v994, %v995
  %v997 = vsel %vm681, %v909, 0.0
  %v998 = vadd.f32 %v996, %v997
  %v999 = vsel %vm681, %v910, 0.0
  %v1000 = vadd.f32 %v998, %v999
  %v1001 = vsel %vm681, %v911, 0.0
  %v1002 = vadd.f32 %v1000, %v1001
  %v1003 = vsel %vm681, %v912, 0.0
  %v1004 = vadd.f32 %v1002, %v1003
  %v1005 = vsel %vm681, %v913, 0.0
  %v1006 = vadd.f32 %v1004, %v1005
  %v1007 = vsel %vm681, %v914, 0.0
  %v1008 = vadd.f32 %v1006, %v1007
  %v1009 = vsel %vm681, %v915, 0.0
  %v1010 = vadd.f32 %v1008, %v1009
  %v1011 = vsel %vm681, %v916, 0.0
  %v1012 = vadd.f32 %v1010, %v1011
  %v1013 = vsel %vm681, %v917, 0.0
  %v1014 = vadd.f32 %v1012, %v1013
  %v1015 = vsel %vm681, %v918, 0.0
  %v1016 = vadd.f32 %v1014, %v1015
  %v1017 = vsel %vm681, %v919, 0.0
  %v1018 = vadd.f32 %v1016, %v1017
  %v1019 = vsel %vm681, %v920, 0.0
  %v1020 = vadd.f32 %v1018, %v1019
  %v1021 = vsel %vm681, %v921, 0.0
  %v1022 = vadd.f32 %v1020, %v1021
  %v1023 = vsel %vm681, %v922, 0.0
  %v1024 = vadd.f32 %v1022, %v1023
  %v1025 = vsel %vm681, %v923, 0.0
  %v1026 = vadd.f32 %v1024, %v1025
  %v1027 = vsel %vm681, %v924, 0.0
  %v1028 = vadd.f32 %v1026, %v1027
  %v1029 = vsel %vm681, %v925, 0.0
  %v1030 = vadd.f32 %v1028, %v1029
  %v1031 = vsel %vm681, %v926, 0.0
  %v1032 = vadd.f32 %v1030, %v1031
  %v1033 = vsel %vm681, %v927, 0.0
  %v1034 = vadd.f32 %v1032, %v1033
  %v1035 = vsel %vm681, %v928, 0.0
  %v1036 = vadd.f32 %v1034, %v1035
  %v1037 = vsel %vm681, %v929, 0.0
  %v1038 = vadd.f32 %v1036, %v1037
  %v1039 = vsel %vm681, %v930, 0.0
  %v1040 = vadd.f32 %v1038, %v1039
  %v1041 = vsel %vm681, %v931, 0.0
  %v1042 = vadd.f32 %v1040, %v1041
  %v1043 = vsel %vm681, %v932, 0.0
  %v1044 = vadd.f32 %v1042, %v1043
  %v1045 = vsel %vm681, %v933, 0.0
  %v1046 = vadd.f32 %v1044, %v1045
  %v1047 = vsel %vm681, %v934, 0.0
  %v1048 = vadd.f32 %v1046, %v1047
  %v1049 = vsel %vm681, %v935, 0.0
  %v1050 = vadd.f32 %v1048, %v1049
  %v1051 = vsel %vm681, %v936, 0.0
  %v1052 = vadd.f32 %v1050, %v1051
  %v1053 = vsel %vm681, %v937, 0.0
  %v1054 = vadd.f32 %v1052, %v1053
  %v1055 = vsel %vm681, %v938, 0.0
  %v1056 = vadd.f32 %v1054, %v1055
  %v1057 = vsel %vm681, %v939, 0.0
  %v1058 = vadd.f32 %v1056, %v1057
  %v1059 = vsel %vm681, %v940, 0.0
  %v1060 = vadd.f32 %v1058, %v1059
  %v1061 = vsel %vm681, %v941, 0.0
  %v1062 = vadd.f32 %v1060, %v1061
  %v1063 = vsel %vm681, %v942, 0.0
  %v1064 = vadd.f32 %v1062, %v1063
  %v1065 = vsel %vm681, %v943, 0.0
  %v1066 = vadd.f32 %v1064, %v1065
  %v1067 = vsel %vm681, %v944, 0.0
  %v1068 = vadd.f32 %v1066, %v1067
  %v1069 = vsel %vm681, %v945, 0.0
  %v1070 = vadd.f32 %v1068, %v1069
  %v1071 = vsel %vm681, %v946, 0.0
  %v1072 = vadd.f32 %v1070, %v1071
  %v1073 = vsel %vm681, %v947, 0.0
  %v1074 = vadd.f32 %v1072, %v1073
  %v1075 = vrot.slane %v1074, 4
  %v1076 = vadd.f32 %v1074, %v1075
  %v1077 = vrot.slane %v1076, 2
  %v1078 = vadd.f32 %v1076, %v1077
  %v1079 = vrot.slane %v1078, 1
  %v1080 = vadd.f32 %v1078, %v1079
  %v1081 = vadd.f32 %v883, %v1080
  %1082 = vst.msk [vmem:[%s5] sm:$0x1] %vm881, %v1081
  // Predicated region
  $region18: #{autoencoder_forward.11} parent=0 // pred_check
    _
  $region19: #{autoencoder_forward.11} parent=0 // pred_check_branch
    %1084 = sbr.rel (0) target = $region21
  $region20: #{autoencoder_forward.11} parent=0 // pred_region
    _
  $region21: #{autoencoder_forward.11} parent=0 // pred_fallthru
    _
  // Predicated region
  $region22: #{autoencoder_forward.11} parent=0 // pred_check
    _
  $region23: #{autoencoder_forward.11} parent=0 // pred_check_branch
    %1086 = sbr.rel (0) target = $region25
  $region24: #{autoencoder_forward.11} parent=0 // pred_region
    _
  $region25: #{autoencoder_forward.11} parent=0 // pred_fallthru
    _
  // Predicated region
  $region26: #{autoencoder_forward.11} parent=0 // pred_check
    _
  $region27: #{autoencoder_forward.11} parent=0 // pred_check_branch
    %1088 = sbr.rel (0) target = $region29
  $region28: #{autoencoder_forward.11} parent=0 // pred_region
    _
  $region29: #{autoencoder_forward.11} parent=0 // pred_fallthru
    _
  // Predicated region
  $region30: #{autoencoder_forward.11} parent=0 // pred_check
    _
  $region31: #{autoencoder_forward.11} parent=0 // pred_check_branch
    %1090 = sbr.rel (0) target = $region33
  $region32: #{autoencoder_forward.11} parent=0 // pred_region
    _
  $region33: #{autoencoder_forward.11} parent=0 // pred_fallthru
    _
  // Predicated region
  $region34: #{autoencoder_forward.11} parent=0 // pred_check
    _
  $region35: #{autoencoder_forward.11} parent=0 // pred_check_branch
    %1092 = sbr.rel (0) target = $region37
  $region36: #{autoencoder_forward.11} parent=0 // pred_region
    _
  $region37: #{autoencoder_forward.11} parent=0 // pred_fallthru
    _
  // Predicated region
  $region38: #{autoencoder_forward.11} parent=0 // pred_check
    _
  $region39: #{autoencoder_forward.11} parent=0 // pred_check_branch
    %1094 = sbr.rel (0) target = $region41
  $region40: #{autoencoder_forward.11} parent=0 // pred_region
    _
  $region41: #{autoencoder_forward.11} parent=0 // pred_fallthru
    _

// kernel: autoencoder_forward.13
$region0: #{autoencoder_forward.13}
  #allocation0 [shape = 'u32[]', space=smem, size = 0x4, offset = 0x4, fixed_abs, tag = 'smem constant byte address 0x4 - core index']
  #allocation1 [shape = 'u32[144,128]{1,0:T(1,128)}', space=vmem, size = 0x12000, scoped, tag = 'internal scratch']
  %s0 = inlined_call_operand.vmem [shape: f32[128,288], index: 0, kind: input, shape index: {}]
  %s1 = inlined_call_operand.vmem [shape: f32[288,64], index: 1, kind: input, shape index: {}]
  %s2 = inlined_call_operand.vmem [shape: f32[1,64], index: 2, kind: input, shape index: {}]
  %s3 = inlined_call_operand.vmem [shape: f32[128,64], index: 3, kind: output, shape index: {0}]
  %s4 = inlined_call_operand.vmem [shape: f32[1,64], index: 4, kind: output, shape index: {1}]
  %s5 = inlined_call_operand.vmem [shape: f32[1,64], index: 5, kind: output, shape index: {2}]
  %6 = xla_tuple %s3, %s4, %s5
  %s7 = sld [smem:[#allocation0]]
  $region42: #{autoencoder_forward.13} parent=0
    _
  %s9 = ssub.s32 1, %s7
  %s10 = scalar_select 0, %s9, %s7
  // Predicated region
  $region2: #{autoencoder_forward.13} parent=0 // pred_check
    _
  $region3: #{autoencoder_forward.13} parent=0 // pred_check_branch
    %12 = sbr.rel (0) target = $region5
  $region4: #{autoencoder_forward.13} parent=0 // pred_region
    _
  $region5: #{autoencoder_forward.13} parent=0 // pred_fallthru
    _
  // Predicated region
  $region6: #{autoencoder_forward.13} parent=0 // pred_check
    _
  $region7: #{autoencoder_forward.13} parent=0 // pred_check_branch
    %14 = sbr.rel (0) target = $region9
  $region8: #{autoencoder_forward.13} parent=0 // pred_region
    _
  $region9: #{autoencoder_forward.13} parent=0 // pred_fallthru
    _
  // Predicated region
  $region10: #{autoencoder_forward.13} parent=0 // pred_check
    _
  $region11: #{autoencoder_forward.13} parent=0 // pred_check_branch
    %16 = sbr.rel (0) target = $region13
  $region12: #{autoencoder_forward.13} parent=0 // pred_region
    _
  $region13: #{autoencoder_forward.13} parent=0 // pred_fallthru
    _
  %p17 = scmp.eq.s32.totalorder 0, 0
  // Predicated region
  $region14: #{autoencoder_forward.13} parent=0 // pred_check
    %p18 = pneg %p17
  $region15: #{autoencoder_forward.13} parent=0 // pred_check_branch
    %20 = sbr.rel (%p18) target = $region17
  $region16: #{autoencoder_forward.13} parent=0 // pred_region
    %vm21 = vcmask 516096
    %22 = vst.msk [vmem:[%s4] sm:$0x1] %vm21, 0.0
    %23 = vst.msk [vmem:[%s5] sm:$0x1] %vm21, 0.0
  $region17: #{autoencoder_forward.13} parent=0 // pred_fallthru
    _
  %v24 = vld [vmem:[%s0] sm:$0xff]
  %v25 = vld [vmem:[%s0 + $0x8] sm:$0xff]
  %v26 = vld [vmem:[%s0 + $0x10] sm:$0xff]
  %v27 = vld [vmem:[%s0 + $0x18] sm:$0xff]
  %v28 = vld [vmem:[%s0 + $0x20] sm:$0xff]
  %v29 = vld [vmem:[%s0 + $0x28] sm:$0xff]
  %v30 = vld [vmem:[%s0 + $0x30] sm:$0xff]
  %v31 = vld [vmem:[%s0 + $0x38] sm:$0xff]
  %v32 = vld [vmem:[%s0 + $0x40] sm:$0xff]
  %v33 = vld [vmem:[%s0 + $0x48] sm:$0xff]
  %v34 = vld [vmem:[%s0 + $0x50] sm:$0xff]
  %v35 = vld [vmem:[%s0 + $0x58] sm:$0xff]
  %v36 = vld [vmem:[%s0 + $0x60] sm:$0xff]
  %v37 = vld [vmem:[%s0 + $0x68] sm:$0xff]
  %v38 = vld [vmem:[%s0 + $0x70] sm:$0xff]
  %v39 = vld [vmem:[%s0 + $0x78] sm:$0xff]
  %v40 = vld [vmem:[%s0 + $0x80] sm:$0xff]
  %v41 = vld [vmem:[%s0 + $0x88] sm:$0xff]
  %v42 = vld [vmem:[%s0 + $0x90] sm:$0xff]
  %v43 = vld [vmem:[%s0 + $0x98] sm:$0xff]
  %v44 = vld [vmem:[%s0 + $0xa0] sm:$0xff]
  %v45 = vld [vmem:[%s0 + $0xa8] sm:$0xff]
  %v46 = vld [vmem:[%s0 + $0xb0] sm:$0xff]
  %v47 = vld [vmem:[%s0 + $0xb8] sm:$0xff]
  %v48 = vld [vmem:[%s0 + $0xc0] sm:$0xff]
  %v49 = vld [vmem:[%s0 + $0xc8] sm:$0xff]
  %v50 = vld [vmem:[%s0 + $0xd0] sm:$0xff]
  %v51 = vld [vmem:[%s0 + $0xd8] sm:$0xff]
  %v52 = vld [vmem:[%s0 + $0xe0] sm:$0xff]
  %v53 = vld [vmem:[%s0 + $0xe8] sm:$0xff]
  %v54 = vld [vmem:[%s0 + $0xf0] sm:$0xff]
  %v55 = vld [vmem:[%s0 + $0xf8] sm:$0xff]
  %v56 = vld [vmem:[%s0 + $0x100] sm:$0xff]
  %v57 = vld [vmem:[%s0 + $0x108] sm:$0xff]
  %v58 = vld [vmem:[%s0 + $0x110] sm:$0xff]
  %v59 = vld [vmem:[%s0 + $0x118] sm:$0xff]
  %v60 = vld [vmem:[%s0 + $0x120] sm:$0xff]
  %v61 = vld [vmem:[%s0 + $0x128] sm:$0xff]
  %v62 = vld [vmem:[%s0 + $0x130] sm:$0xff]
  %v63 = vld [vmem:[%s0 + $0x138] sm:$0xff]
  %v64 = vld [vmem:[%s0 + $0x140] sm:$0xff]
  %v65 = vld [vmem:[%s0 + $0x148] sm:$0xff]
  %v66 = vld [vmem:[%s0 + $0x150] sm:$0xff]
  %v67 = vld [vmem:[%s0 + $0x158] sm:$0xff]
  %v68 = vld [vmem:[%s0 + $0x160] sm:$0xff]
  %v69 = vld [vmem:[%s0 + $0x168] sm:$0xff]
  %v70 = vld [vmem:[%s0 + $0x170] sm:$0xff]
  %v71 = vld [vmem:[%s0 + $0x178] sm:$0xff]
  %v72 = vld [vmem:[%s1] sm:$0xff]
  %v73 = vld [vmem:[%s1 + $0x8] sm:$0xff]
  %v74 = vld [vmem:[%s1 + $0x10] sm:$0xff]
  %v75 = vld [vmem:[%s1 + $0x18] sm:$0xff]
  %v76 = vld [vmem:[%s1 + $0x20] sm:$0xff]
  %v77 = vld [vmem:[%s1 + $0x28] sm:$0xff]
  %v78 = vld [vmem:[%s1 + $0x30] sm:$0xff]
  %v79 = vld [vmem:[%s1 + $0x38] sm:$0xff]
  %v80 = vld [vmem:[%s1 + $0x40] sm:$0xff]
  %v81 = vld [vmem:[%s1 + $0x48] sm:$0xff]
  %v82 = vld [vmem:[%s1 + $0x50] sm:$0xff]
  %v83 = vld [vmem:[%s1 + $0x58] sm:$0xff]
  %v84 = vld [vmem:[%s1 + $0x60] sm:$0xff]
  %v85 = vld [vmem:[%s1 + $0x68] sm:$0xff]
  %v86 = vld [vmem:[%s1 + $0x70] sm:$0xff]
  %v87 = vld [vmem:[%s1 + $0x78] sm:$0xff]
  %v88 = vld [vmem:[%s1 + $0x80] sm:$0xff]
  %v89 = vld [vmem:[%s1 + $0x88] sm:$0xff]
  %v90 = vld [vmem:[%s1 + $0x90] sm:$0xff]
  %v91 = vld [vmem:[%s1 + $0x98] sm:$0xff]
  %v92 = vld [vmem:[%s1 + $0xa0] sm:$0xff]
  %v93 = vld [vmem:[%s1 + $0xa8] sm:$0xff]
  %v94 = vld [vmem:[%s1 + $0xb0] sm:$0xff]
  %v95 = vld [vmem:[%s1 + $0xb8] sm:$0xff]
  %v96 = vld [vmem:[%s1 + $0xc0] sm:$0xff]
  %v97 = vld [vmem:[%s1 + $0xc8] sm:$0xff]
  %v98 = vld [vmem:[%s1 + $0xd0] sm:$0xff]
  %v99 = vld [vmem:[%s1 + $0xd8] sm:$0xff]
  %v100 = vld [vmem:[%s1 + $0xe0] sm:$0xff]
  %v101 = vld [vmem:[%s1 + $0xe8] sm:$0xff]
  %v102 = vld [vmem:[%s1 + $0xf0] sm:$0xff]
  %v103 = vld [vmem:[%s1 + $0xf8] sm:$0xff]
  %v104 = vld [vmem:[%s1 + $0x100] sm:$0xff]
  %v105 = vld [vmem:[%s1 + $0x108] sm:$0xff]
  %v106 = vld [vmem:[%s1 + $0x110] sm:$0xff]
  %v107 = vld [vmem:[%s1 + $0x118] sm:$0xff]
  %v108 = vld [vmem:[%s2] sm:$0x1]
  %v110 = vlaneseq
  %v111 = vshrl.u32 %v110, 7
  %v112 = vsub.s32 0, %v111
  %v113 = vrot.slane %v108, %v112
  %vm115 = vcmask 261120
  %v117 = vsel %vm115, %v26, 0
  %v120 = vsel %vm115, %v29, 0
  %v123 = vsel %vm115, %v32, 0
  %v126 = vsel %vm115, %v35, 0
  %v129 = vsel %vm115, %v38, 0
  %v132 = vsel %vm115, %v41, 0
  %v135 = vsel %vm115, %v44, 0
  %v138 = vsel %vm115, %v47, 0
  %v141 = vsel %vm115, %v50, 0
  %v144 = vsel %vm115, %v53, 0
  %v147 = vsel %vm115, %v56, 0
  %v150 = vsel %vm115, %v59, 0
  %v153 = vsel %vm115, %v62, 0
  %v156 = vsel %vm115, %v65, 0
  %v159 = vsel %vm115, %v68, 0
  %v162 = vsel %vm115, %v71, 0
  %164 = vmatprep.subr.mxu0 0.0
  %165 = vmatpush1.msra.mxu0 %v87
  %166 = vmatprep.subr.mxu0 0.0
  %167 = vmatpush1.msra.mxu0 %v86
  %168 = vmatprep.subr.mxu0 0.0
  %169 = vmatpush1.msra.mxu0 %v85
  %170 = vmatprep.subr.mxu0 0.0
  %171 = vmatpush1.msra.mxu0 %v84
  %172 = vmatprep.subr.mxu0 0.0
  %173 = vmatpush1.msra.mxu0 %v83
  %174 = vmatprep.subr.mxu0 0.0
  %175 = vmatpush1.msra.mxu0 %v82
  %176 = vmatprep.subr.mxu0 0.0
  %177 = vmatpush1.msra.mxu0 %v81
  %178 = vmatprep.subr.mxu0 0.0
  %179 = vmatpush1.msra.mxu0 %v80
  %180 = vmatprep.subr.mxu0 0.0
  %181 = vmatpush1.msra.mxu0 %v79
  %182 = vmatprep.subr.mxu0 0.0
  %183 = vmatpush1.msra.mxu0 %v78
  %184 = vmatprep.subr.mxu0 0.0
  %185 = vmatpush1.msra.mxu0 %v77
  %186 = vmatprep.subr.mxu0 0.0
  %187 = vmatpush1.msra.mxu0 %v76
  %188 = vmatprep.subr.mxu0 0.0
  %189 = vmatpush1.msra.mxu0 %v75
  %190 = vmatprep.subr.mxu0 0.0
  %191 = vmatpush1.msra.mxu0 %v74
  %192 = vmatprep.subr.mxu0 0.0
  %193 = vmatpush1.msra.mxu0 %v73
  %194 = vmatprep.subr.mxu0 0.0
  %195 = vmatpush1.msra.mxu0 %v72
  %196 = vmatprep.subr.mxu0 0.0
  %197 = vmatpush2.msra.mxu0 %v103
  %198 = vmatprep.subr.mxu0 0.0
  %199 = vmatpush2.msra.mxu0 %v102
  %200 = vmatprep.subr.mxu0 0.0
  %201 = vmatpush2.msra.mxu0 %v101
  %202 = vmatprep.subr.mxu0 0.0
  %203 = vmatpush2.msra.mxu0 %v100
  %204 = vmatprep.subr.mxu0 0.0
  %205 = vmatpush2.msra.mxu0 %v99
  %206 = vmatprep.subr.mxu0 0.0
  %207 = vmatpush2.msra.mxu0 %v98
  %208 = vmatprep.subr.mxu0 0.0
  %209 = vmatpush2.msra.mxu0 %v97
  %210 = vmatprep.subr.mxu0 0.0
  %211 = vmatpush2.msra.mxu0 %v96
  %212 = vmatprep.subr.mxu0 0.0
  %213 = vmatpush2.msra.mxu0 %v95
  %214 = vmatprep.subr.mxu0 0.0
  %215 = vmatpush2.msra.mxu0 %v94
  %216 = vmatprep.subr.mxu0 0.0
  %217 = vmatpush2.msra.mxu0 %v93
  %218 = vmatprep.subr.mxu0 0.0
  %219 = vmatpush2.msra.mxu0 %v92
  %220 = vmatprep.subr.mxu0 0.0
  %221 = vmatpush2.msra.mxu0 %v91
  %222 = vmatprep.subr.mxu0 0.0
  %223 = vmatpush2.msra.mxu0 %v90
  %224 = vmatprep.subr.mxu0 0.0
  %225 = vmatpush2.msra.mxu0 %v89
  %226 = vmatprep.subr.mxu0 0.0
  %227 = vmatpush2.msra.mxu0 %v88
  %228 = vmatprep.mubr.f32.mxu0 %v25
  %229 = vmatmul.mubr.f32.gmra.mxu0 %v24
  %v230 = vpop.f32.mrf.mxu0
  %v231 = vadd.f32 %v113, %v230
  %v232 = vpop.f32.mrf.mxu0
  %233 = vmatprep.mubr.f32.mxu0 %v28
  %234 = vmatmul.mubr.f32.gmra.mxu0 %v27
  %v235 = vpop.f32.mrf.mxu0
  %v236 = vadd.f32 %v113, %v235
  %v237 = vpop.f32.mrf.mxu0
  %238 = vmatprep.mubr.f32.mxu0 %v31
  %239 = vmatmul.mubr.f32.gmra.mxu0 %v30
  %v240 = vpop.f32.mrf.mxu0
  %v241 = vadd.f32 %v113, %v240
  %v242 = vpop.f32.mrf.mxu0
  %243 = vmatprep.mubr.f32.mxu0 %v34
  %244 = vmatmul.mubr.f32.gmra.mxu0 %v33
  %v245 = vpop.f32.mrf.mxu0
  %v246 = vadd.f32 %v113, %v245
  %v247 = vpop.f32.mrf.mxu0
  %248 = vmatprep.mubr.f32.mxu0 %v37
  %249 = vmatmul.mubr.f32.gmra.mxu0 %v36
  %v250 = vpop.f32.mrf.mxu0
  %v251 = vadd.f32 %v113, %v250
  %v252 = vpop.f32.mrf.mxu0
  %253 = vmatprep.mubr.f32.mxu0 %v40
  %254 = vmatmul.mubr.f32.gmra.mxu0 %v39
  %v255 = vpop.f32.mrf.mxu0
  %v256 = vadd.f32 %v113, %v255
  %v257 = vpop.f32.mrf.mxu0
  %258 = vmatprep.mubr.f32.mxu0 %v43
  %259 = vmatmul.mubr.f32.gmra.mxu0 %v42
  %v260 = vpop.f32.mrf.mxu0
  %v261 = vadd.f32 %v113, %v260
  %v262 = vpop.f32.mrf.mxu0
  %263 = vmatprep.mubr.f32.mxu0 %v46
  %264 = vmatmul.mubr.f32.gmra.mxu0 %v45
  %v265 = vpop.f32.mrf.mxu0
  %v266 = vadd.f32 %v113, %v265
  %v267 = vpop.f32.mrf.mxu0
  %268 = vmatprep.mubr.f32.mxu0 %v49
  %269 = vmatmul.mubr.f32.gmra.mxu0 %v48
  %v270 = vpop.f32.mrf.mxu0
  %v271 = vadd.f32 %v113, %v270
  %v272 = vpop.f32.mrf.mxu0
  %273 = vmatprep.mubr.f32.mxu0 %v52
  %274 = vmatmul.mubr.f32.gmra.mxu0 %v51
  %v275 = vpop.f32.mrf.mxu0
  %v276 = vadd.f32 %v113, %v275
  %v277 = vpop.f32.mrf.mxu0
  %278 = vmatprep.mubr.f32.mxu0 %v55
  %279 = vmatmul.mubr.f32.gmra.mxu0 %v54
  %v280 = vpop.f32.mrf.mxu0
  %v281 = vadd.f32 %v113, %v280
  %v282 = vpop.f32.mrf.mxu0
  %283 = vmatprep.mubr.f32.mxu0 %v58
  %284 = vmatmul.mubr.f32.gmra.mxu0 %v57
  %v285 = vpop.f32.mrf.mxu0
  %v286 = vadd.f32 %v113, %v285
  %v287 = vpop.f32.mrf.mxu0
  %288 = vmatprep.mubr.f32.mxu0 %v61
  %289 = vmatmul.mubr.f32.gmra.mxu0 %v60
  %v290 = vpop.f32.mrf.mxu0
  %v291 = vadd.f32 %v113, %v290
  %v292 = vpop.f32.mrf.mxu0
  %293 = vmatprep.mubr.f32.mxu0 %v64
  %294 = vmatmul.mubr.f32.gmra.mxu0 %v63
  %v295 = vpop.f32.mrf.mxu0
  %v296 = vadd.f32 %v113, %v295
  %v297 = vpop.f32.mrf.mxu0
  %298 = vmatprep.mubr.f32.mxu0 %v67
  %299 = vmatmul.mubr.f32.gmra.mxu0 %v66
  %v300 = vpop.f32.mrf.mxu0
  %v301 = vadd.f32 %v113, %v300
  %v302 = vpop.f32.mrf.mxu0
  %303 = vmatprep.mubr.f32.mxu0 %v70
  %304 = vmatmul.mubr.f32.gmra.mxu0 %v69
  %v305 = vpop.f32.mrf.mxu0
  %v306 = vadd.f32 %v113, %v305
  %v307 = vpop.f32.mrf.mxu0
  %308 = vdwg.mxu0
  %309 = vmatprep.subr.mxu0 0.0
  %310 = vmatpush1.msra.mxu0 0.0
  %311 = vmatprep.subr.mxu0 0.0
  %312 = vmatpush1.msra.mxu0 0.0
  %313 = vmatprep.subr.mxu0 0.0
  %314 = vmatpush1.msra.mxu0 0.0
  %315 = vmatprep.subr.mxu0 0.0
  %316 = vmatpush1.msra.mxu0 0.0
  %317 = vmatprep.subr.mxu0 0.0
  %318 = vmatpush1.msra.mxu0 0.0
  %319 = vmatprep.subr.mxu0 0.0
  %320 = vmatpush1.msra.mxu0 0.0
  %321 = vmatprep.subr.mxu0 0.0
  %322 = vmatpush1.msra.mxu0 0.0
  %323 = vmatprep.subr.mxu0 0.0
  %324 = vmatpush1.msra.mxu0 0.0
  %325 = vmatprep.subr.mxu0 0.0
  %326 = vmatpush1.msra.mxu0 0.0
  %327 = vmatprep.subr.mxu0 0.0
  %328 = vmatpush1.msra.mxu0 0.0
  %329 = vmatprep.subr.mxu0 0.0
  %330 = vmatpush1.msra.mxu0 0.0
  %331 = vmatprep.subr.mxu0 0.0
  %332 = vmatpush1.msra.mxu0 0.0
  %333 = vmatprep.subr.mxu0 0.0
  %334 = vmatpush1.msra.mxu0 %v107
  %335 = vmatprep.subr.mxu0 0.0
  %336 = vmatpush1.msra.mxu0 %v106
  %337 = vmatprep.subr.mxu0 0.0
  %338 = vmatpush1.msra.mxu0 %v105
  %339 = vmatprep.subr.mxu0 0.0
  %340 = vmatpush1.msra.mxu0 %v104
  %341 = vmatprep.subr.mxu0 0.0
  %342 = vmatpush2.msra.mxu0 0.0
  %343 = vmatprep.subr.mxu0 0.0
  %344 = vmatpush2.msra.mxu0 0.0
  %345 = vmatprep.subr.mxu0 0.0
  %346 = vmatpush2.msra.mxu0 0.0
  %347 = vmatprep.subr.mxu0 0.0
  %348 = vmatpush2.msra.mxu0 0.0
  %349 = vmatprep.subr.mxu0 0.0
  %350 = vmatpush2.msra.mxu0 0.0
  %351 = vmatprep.subr.mxu0 0.0
  %352 = vmatpush2.msra.mxu0 0.0
  %353 = vmatprep.subr.mxu0 0.0
  %354 = vmatpush2.msra.mxu0 0.0
  %355 = vmatprep.subr.mxu0 0.0
  %356 = vmatpush2.msra.mxu0 0.0
  %357 = vmatprep.subr.mxu0 0.0
  %358 = vmatpush2.msra.mxu0 0.0
  %359 = vmatprep.subr.mxu0 0.0
  %360 = vmatpush2.msra.mxu0 0.0
  %361 = vmatprep.subr.mxu0 0.0
  %362 = vmatpush2.msra.mxu0 0.0
  %363 = vmatprep.subr.mxu0 0.0
  %364 = vmatpush2.msra.mxu0 0.0
  %365 = vmatprep.subr.mxu0 0.0
  %366 = vmatpush2.msra.mxu0 0.0
  %367 = vmatprep.subr.mxu0 0.0
  %368 = vmatpush2.msra.mxu0 0.0
  %369 = vmatprep.subr.mxu0 0.0
  %370 = vmatpush2.msra.mxu0 0.0
  %371 = vmatprep.subr.mxu0 0.0
  %372 = vmatpush2.msra.mxu0 0.0
  %373 = vmatprep.mubr.f32.mxu0 0.0
  %374 = vmatmul.mubr.f32.gmra.mxu0 %v117
  %v375 = vpop.f32.mrf.mxu0
  %v376 = vadd.f32 %v231, %v375
  %v377 = vpop.f32.mrf.mxu0
  %378 = vmatprep.mubr.f32.mxu0 0.0
  %379 = vmatmul.mubr.f32.gmra.mxu0 %v120
  %v380 = vpop.f32.mrf.mxu0
  %v381 = vadd.f32 %v236, %v380
  %v382 = vpop.f32.mrf.mxu0
  %383 = vmatprep.mubr.f32.mxu0 0.0
  %384 = vmatmul.mubr.f32.gmra.mxu0 %v123
  %v385 = vpop.f32.mrf.mxu0
  %v386 = vadd.f32 %v241, %v385
  %v387 = vpop.f32.mrf.mxu0
  %388 = vmatprep.mubr.f32.mxu0 0.0
  %389 = vmatmul.mubr.f32.gmra.mxu0 %v126
  %v390 = vpop.f32.mrf.mxu0
  %v391 = vadd.f32 %v246, %v390
  %v392 = vpop.f32.mrf.mxu0
  %393 = vmatprep.mubr.f32.mxu0 0.0
  %394 = vmatmul.mubr.f32.gmra.mxu0 %v129
  %v395 = vpop.f32.mrf.mxu0
  %v396 = vadd.f32 %v251, %v395
  %v397 = vpop.f32.mrf.mxu0
  %398 = vmatprep.mubr.f32.mxu0 0.0
  %399 = vmatmul.mubr.f32.gmra.mxu0 %v132
  %v400 = vpop.f32.mrf.mxu0
  %v401 = vadd.f32 %v256, %v400
  %v402 = vpop.f32.mrf.mxu0
  %403 = vmatprep.mubr.f32.mxu0 0.0
  %404 = vmatmul.mubr.f32.gmra.mxu0 %v135
  %v405 = vpop.f32.mrf.mxu0
  %v406 = vadd.f32 %v261, %v405
  %v407 = vpop.f32.mrf.mxu0
  %408 = vmatprep.mubr.f32.mxu0 0.0
  %409 = vmatmul.mubr.f32.gmra.mxu0 %v138
  %v410 = vpop.f32.mrf.mxu0
  %v411 = vadd.f32 %v266, %v410
  %v412 = vpop.f32.mrf.mxu0
  %413 = vmatprep.mubr.f32.mxu0 0.0
  %414 = vmatmul.mubr.f32.gmra.mxu0 %v141
  %v415 = vpop.f32.mrf.mxu0
  %v416 = vadd.f32 %v271, %v415
  %v417 = vpop.f32.mrf.mxu0
  %418 = vmatprep.mubr.f32.mxu0 0.0
  %419 = vmatmul.mubr.f32.gmra.mxu0 %v144
  %v420 = vpop.f32.mrf.mxu0
  %v421 = vadd.f32 %v276, %v420
  %v422 = vpop.f32.mrf.mxu0
  %423 = vmatprep.mubr.f32.mxu0 0.0
  %424 = vmatmul.mubr.f32.gmra.mxu0 %v147
  %v425 = vpop.f32.mrf.mxu0
  %v426 = vadd.f32 %v281, %v425
  %v427 = vpop.f32.mrf.mxu0
  %428 = vmatprep.mubr.f32.mxu0 0.0
  %429 = vmatmul.mubr.f32.gmra.mxu0 %v150
  %v430 = vpop.f32.mrf.mxu0
  %v431 = vadd.f32 %v286, %v430
  %v432 = vpop.f32.mrf.mxu0
  %433 = vmatprep.mubr.f32.mxu0 0.0
  %434 = vmatmul.mubr.f32.gmra.mxu0 %v153
  %v435 = vpop.f32.mrf.mxu0
  %v436 = vadd.f32 %v291, %v435
  %v437 = vpop.f32.mrf.mxu0
  %438 = vmatprep.mubr.f32.mxu0 0.0
  %439 = vmatmul.mubr.f32.gmra.mxu0 %v156
  %v440 = vpop.f32.mrf.mxu0
  %v441 = vadd.f32 %v296, %v440
  %v442 = vpop.f32.mrf.mxu0
  %443 = vmatprep.mubr.f32.mxu0 0.0
  %444 = vmatmul.mubr.f32.gmra.mxu0 %v159
  %v445 = vpop.f32.mrf.mxu0
  %v446 = vadd.f32 %v301, %v445
  %v447 = vpop.f32.mrf.mxu0
  %448 = vmatprep.mubr.f32.mxu0 0.0
  %449 = vmatmul.mubr.f32.gmra.mxu0 %v162
  %v450 = vpop.f32.mrf.mxu0
  %v451 = vadd.f32 %v306, %v450
  %v452 = vpop.f32.mrf.mxu0
  %453 = vdwg.mxu0
  %vm454 = vcmask 523264
  %455 = vst.msk [vmem:[%s3] sm:$0xff] %vm454, %v376
  %456 = vst.msk [vmem:[%s3 + $0x8] sm:$0xff] %vm454, %v381
  %457 = vst.msk [vmem:[%s3 + $0x10] sm:$0xff] %vm454, %v386
  %458 = vst.msk [vmem:[%s3 + $0x18] sm:$0xff] %vm454, %v391
  %459 = vst.msk [vmem:[%s3 + $0x20] sm:$0xff] %vm454, %v396
  %460 = vst.msk [vmem:[%s3 + $0x28] sm:$0xff] %vm454, %v401
  %461 = vst.msk [vmem:[%s3 + $0x30] sm:$0xff] %vm454, %v406
  %462 = vst.msk [vmem:[%s3 + $0x38] sm:$0xff] %vm454, %v411
  %463 = vst.msk [vmem:[%s3 + $0x40] sm:$0xff] %vm454, %v416
  %464 = vst.msk [vmem:[%s3 + $0x48] sm:$0xff] %vm454, %v421
  %465 = vst.msk [vmem:[%s3 + $0x50] sm:$0xff] %vm454, %v426
  %466 = vst.msk [vmem:[%s3 + $0x58] sm:$0xff] %vm454, %v431
  %467 = vst.msk [vmem:[%s3 + $0x60] sm:$0xff] %vm454, %v436
  %468 = vst.msk [vmem:[%s3 + $0x68] sm:$0xff] %vm454, %v441
  %469 = vst.msk [vmem:[%s3 + $0x70] sm:$0xff] %vm454, %v446
  %470 = vst.msk [vmem:[%s3 + $0x78] sm:$0xff] %vm454, %v451
  %v471 = vld [vmem:[%s4] sm:$0x1]
  %v472 = vsel %vm454, %v376, 0.0
  %v473 = vsel %vm454, %v381, 0.0
  %v474 = vadd.f32 %v472, %v473
  %v475 = vsel %vm454, %v386, 0.0
  %v476 = vadd.f32 %v474, %v475
  %v477 = vsel %vm454, %v391, 0.0
  %v478 = vadd.f32 %v476, %v477
  %v479 = vsel %vm454, %v396, 0.0
  %v480 = vadd.f32 %v478, %v479
  %v481 = vsel %vm454, %v401, 0.0
  %v482 = vadd.f32 %v480, %v481
  %v483 = vsel %vm454, %v406, 0.0
  %v484 = vadd.f32 %v482, %v483
  %v485 = vsel %vm454, %v411, 0.0
  %v486 = vadd.f32 %v484, %v485
  %v487 = vsel %vm454, %v416, 0.0
  %v488 = vadd.f32 %v486, %v487
  %v489 = vsel %vm454, %v421, 0.0
  %v490 = vadd.f32 %v488, %v489
  %v491 = vsel %vm454, %v426, 0.0
  %v492 = vadd.f32 %v490, %v491
  %v493 = vsel %vm454, %v431, 0.0
  %v494 = vadd.f32 %v492, %v493
  %v495 = vsel %vm454, %v436, 0.0
  %v496 = vadd.f32 %v494, %v495
  %v497 = vsel %vm454, %v441, 0.0
  %v498 = vadd.f32 %v496, %v497
  %v499 = vsel %vm454, %v446, 0.0
  %v500 = vadd.f32 %v498, %v499
  %v501 = vsel %vm454, %v451, 0.0
  %v502 = vadd.f32 %v500, %v501
  %v503 = vrot.slane %v502, 4
  %v504 = vadd.f32 %v502, %v503
  %v505 = vrot.slane %v504, 2
  %v506 = vadd.f32 %v504, %v505
  %v507 = vrot.slane %v506, 1
  %v508 = vadd.f32 %v506, %v507
  %v509 = vadd.f32 %v471, %v508
  %vm510 = vcmask 516096
  %511 = vst.msk [vmem:[%s4] sm:$0x1] %vm510, %v509
  %v512 = vld [vmem:[%s5] sm:$0x1]
  %v513 = vmul.f32 %v376, %v376
  %v514 = vmul.f32 %v381, %v381
  %v515 = vmul.f32 %v386, %v386
  %v516 = vmul.f32 %v391, %v391
  %v517 = vmul.f32 %v396, %v396
  %v518 = vmul.f32 %v401, %v401
  %v519 = vmul.f32 %v406, %v406
  %v520 = vmul.f32 %v411, %v411
  %v521 = vmul.f32 %v416, %v416
  %v522 = vmul.f32 %v421, %v421
  %v523 = vmul.f32 %v426, %v426
  %v524 = vmul.f32 %v431, %v431
  %v525 = vmul.f32 %v436, %v436
  %v526 = vmul.f32 %v441, %v441
  %v527 = vmul.f32 %v446, %v446
  %v528 = vmul.f32 %v451, %v451
  %v529 = vsel %vm454, %v513, 0.0
  %v530 = vsel %vm454, %v514, 0.0
  %v531 = vadd.f32 %v529, %v530
  %v532 = vsel %vm454, %v515, 0.0
  %v533 = vadd.f32 %v531, %v532
  %v534 = vsel %vm454, %v516, 0.0
  %v535 = vadd.f32 %v533, %v534
  %v536 = vsel %vm454, %v517, 0.0
  %v537 = vadd.f32 %v535, %v536
  %v538 = vsel %vm454, %v518, 0.0
  %v539 = vadd.f32 %v537, %v538
  %v540 = vsel %vm454, %v519, 0.0
  %v541 = vadd.f32 %v539, %v540
  %v542 = vsel %vm454, %v520, 0.0
  %v543 = vadd.f32 %v541, %v542
  %v544 = vsel %vm454, %v521, 0.0
  %v545 = vadd.f32 %v543, %v544
  %v546 = vsel %vm454, %v522, 0.0
  %v547 = vadd.f32 %v545, %v546
  %v548 = vsel %vm454, %v523, 0.0
  %v549 = vadd.f32 %v547, %v548
  %v550 = vsel %vm454, %v524, 0.0
  %v551 = vadd.f32 %v549, %v550
  %v552 = vsel %vm454, %v525, 0.0
  %v553 = vadd.f32 %v551, %v552
  %v554 = vsel %vm454, %v526, 0.0
  %v555 = vadd.f32 %v553, %v554
  %v556 = vsel %vm454, %v527, 0.0
  %v557 = vadd.f32 %v555, %v556
  %v558 = vsel %vm454, %v528, 0.0
  %v559 = vadd.f32 %v557, %v558
  %v560 = vrot.slane %v559, 4
  %v561 = vadd.f32 %v559, %v560
  %v562 = vrot.slane %v561, 2
  %v563 = vadd.f32 %v561, %v562
  %v564 = vrot.slane %v563, 1
  %v565 = vadd.f32 %v563, %v564
  %v566 = vadd.f32 %v512, %v565
  %567 = vst.msk [vmem:[%s5] sm:$0x1] %vm510, %v566
  // Predicated region
  $region18: #{autoencoder_forward.13} parent=0 // pred_check
    _
  $region19: #{autoencoder_forward.13} parent=0 // pred_check_branch
    %569 = sbr.rel (0) target = $region21
  $region20: #{autoencoder_forward.13} parent=0 // pred_region
    _
  $region21: #{autoencoder_forward.13} parent=0 // pred_fallthru
    _
  // Predicated region
  $region22: #{autoencoder_forward.13} parent=0 // pred_check
    _
  $region23: #{autoencoder_forward.13} parent=0 // pred_check_branch
    %571 = sbr.rel (0) target = $region25
  $region24: #{autoencoder_forward.13} parent=0 // pred_region
    _
  $region25: #{autoencoder_forward.13} parent=0 // pred_fallthru
    _
  // Predicated region
  $region26: #{autoencoder_forward.13} parent=0 // pred_check
    _
  $region27: #{autoencoder_forward.13} parent=0 // pred_check_branch
    %573 = sbr.rel (0) target = $region29
  $region28: #{autoencoder_forward.13} parent=0 // pred_region
    _
  $region29: #{autoencoder_forward.13} parent=0 // pred_fallthru
    _
  // Predicated region
  $region30: #{autoencoder_forward.13} parent=0 // pred_check
    _
  $region31: #{autoencoder_forward.13} parent=0 // pred_check_branch
    %575 = sbr.rel (0) target = $region33
  $region32: #{autoencoder_forward.13} parent=0 // pred_region
    _
  $region33: #{autoencoder_forward.13} parent=0 // pred_fallthru
    _
  // Predicated region
  $region34: #{autoencoder_forward.13} parent=0 // pred_check
    _
  $region35: #{autoencoder_forward.13} parent=0 // pred_check_branch
    %577 = sbr.rel (0) target = $region37
  $region36: #{autoencoder_forward.13} parent=0 // pred_region
    _
  $region37: #{autoencoder_forward.13} parent=0 // pred_fallthru
    _
  // Predicated region
  $region38: #{autoencoder_forward.13} parent=0 // pred_check
    _
  $region39: #{autoencoder_forward.13} parent=0 // pred_check_branch
    %579 = sbr.rel (0) target = $region41
  $region40: #{autoencoder_forward.13} parent=0 // pred_region
    _
  $region41: #{autoencoder_forward.13} parent=0 // pred_fallthru
    _

// kernel: tile.38
$region0: #{tile.38}
  #allocation0 [shape = 's32[1]{0}', space=sflag, size = 0x4, scoped, tag = 'scoped memory for tile.38']
  %s0 = inlined_call_operand.vmem [shape: f32[64], index: 0, kind: input, shape index: {}]
  %s1 = inlined_call_operand.vmem [shape: f32[4,64], index: 1, kind: output, shape index: {}]
  // Predicated region
  $region2: #{tile.38} parent=0 // pred_check
    _
  $region3: #{tile.38} parent=0 // pred_check_branch
    %3 = sbr.rel (0) target = $region5
  $region4: #{tile.38} parent=0 // pred_region
    _
  $region5: #{tile.38} parent=0 // pred_fallthru
    _
  %v4 = vld [vmem:[%s0] ss:$0 sm:$0xff]
  %5 = vst [vmem:[%s1] sm:$0xf] %v4

// kernel: tile.39
$region0: #{tile.39}
  %s0 = inlined_call_operand.vmem [shape: f32[4,64], index: 0, kind: input, shape index: {}]
  %s1 = inlined_call_operand.vmem [shape: f32[1,256], index: 1, kind: output, shape index: {}]
  $region1: #{tile.39} parent=0
    #allocation0 [shape = 'u8[8192]{0}', space=vmem, size = 0x2000, scoped, tag = 'scoped mem for output reshape']
    #allocation1 [shape = 'u8[4096]{0}', space=vmem, size = 0x1000, scoped, tag = 'scoped mem for input reshape']
    %s3 = sshll.u32 1, 4
    %s4 = ssub.s32 %s3, 1
    %v5 = vld [vmem:[%s0] sm:%s4]
    %6 = vst [vmem:[#allocation1] sm:%s4] %v5
    %s7 = smov 3
    %v8 = vld [vmem:[#allocation1] ss:$2 sm:%s7]
    %vm9 = vcmask 523264
    %10 = vst.msk [vmem:[#allocation0] ss:$8 sm:$0x3] %vm9, %v8
    %s11 = scalar_lea.vmem [#allocation1], 1
    %s12 = smov 3
    %v13 = vld [vmem:[%s11] ss:$2 sm:%s12]
    %14 = vrot.lane.b32.xlu0 %v13, 64
    %v15 = vpop.permute.xlu0 %14
    %vm16 = vcmask 1048064
    %17 = vst.msk [vmem:[#allocation0] ss:$8 sm:$0x3] %vm16, %v15
    %s19 = sshll.u32 1, 1
    %s20 = ssub.s32 %s19, 1
    %v22 = vld [vmem:[#allocation0] sm:%s20]
    %s23 = sshll.u32 1, 1
    %s24 = ssub.s32 %s23, 1
    %25 = vst [vmem:[%s1] sm:%s24] %v22
    %s26 = scalar_lea.vmem [#allocation0], 8
    %v27 = vld [vmem:[%s26] sm:%s20]
    %s28 = sshll.u32 1, 1
    %s29 = ssub.s32 %s28, 1
    %s30 = scalar_lea.vmem %s1, 1
    %31 = vst [vmem:[%s30] sm:%s29] %v27

// kernel: autoencoder_forward.14
$region0: #{autoencoder_forward.14}
  #allocation0 [shape = 'u32[]', space=smem, size = 0x4, offset = 0x4, fixed_abs, tag = 'smem constant byte address 0x4 - core index']
  #allocation1 [shape = 'u32[144,128]{1,0:T(1,128)}', space=vmem, size = 0x12000, scoped, tag = 'internal scratch']
  %s0 = inlined_call_operand.vmem [shape: f32[4,32,64], index: 0, kind: input, shape index: {}]
  %s1 = inlined_call_operand.vmem [shape: f32[1,64], index: 1, kind: input, shape index: {}]
  %s2 = inlined_call_operand.vmem [shape: f32[1,64], index: 2, kind: input, shape index: {}]
  %s3 = inlined_call_operand.vmem [shape: f32[32,64], index: 3, kind: output, shape index: {}]
  %s4 = sld [smem:[#allocation0]]
  $region22: #{autoencoder_forward.14} parent=0
    _
  %s6 = ssub.s32 1, %s4
  %s7 = scalar_select 0, %s6, %s4
  // Predicated region
  $region2: #{autoencoder_forward.14} parent=0 // pred_check
    _
  $region3: #{autoencoder_forward.14} parent=0 // pred_check_branch
    %9 = sbr.rel (0) target = $region5
  $region4: #{autoencoder_forward.14} parent=0 // pred_region
    _
  $region5: #{autoencoder_forward.14} parent=0 // pred_fallthru
    _
  // Predicated region
  $region6: #{autoencoder_forward.14} parent=0 // pred_check
    _
  $region7: #{autoencoder_forward.14} parent=0 // pred_check_branch
    %11 = sbr.rel (0) target = $region9
  $region8: #{autoencoder_forward.14} parent=0 // pred_region
    _
  $region9: #{autoencoder_forward.14} parent=0 // pred_fallthru
    _
  // Predicated region
  $region10: #{autoencoder_forward.14} parent=0 // pred_check
    _
  $region11: #{autoencoder_forward.14} parent=0 // pred_check_branch
    %13 = sbr.rel (0) target = $region13
  $region12: #{autoencoder_forward.14} parent=0 // pred_region
    _
  $region13: #{autoencoder_forward.14} parent=0 // pred_fallthru
    _
  %v14 = vld [vmem:[%s0] sm:$0xff]
  %v15 = vld [vmem:[%s0 + $0x8] sm:$0xff]
  %v16 = vld [vmem:[%s0 + $0x10] sm:$0xff]
  %v17 = vld [vmem:[%s0 + $0x18] sm:$0xff]
  %v18 = vld [vmem:[%s0 + $0x20] sm:$0xff]
  %v19 = vld [vmem:[%s0 + $0x28] sm:$0xff]
  %v20 = vld [vmem:[%s0 + $0x30] sm:$0xff]
  %v21 = vld [vmem:[%s0 + $0x38] sm:$0xff]
  %v22 = vld [vmem:[%s0 + $0x40] sm:$0xff]
  %v23 = vld [vmem:[%s0 + $0x48] sm:$0xff]
  %v24 = vld [vmem:[%s0 + $0x50] sm:$0xff]
  %v25 = vld [vmem:[%s0 + $0x58] sm:$0xff]
  %v26 = vld [vmem:[%s0 + $0x60] sm:$0xff]
  %v27 = vld [vmem:[%s0 + $0x68] sm:$0xff]
  %v28 = vld [vmem:[%s0 + $0x70] sm:$0xff]
  %v29 = vld [vmem:[%s0 + $0x78] sm:$0xff]
  %v30 = vld [vmem:[%s1] sm:$0x1]
  %v32 = vlaneseq
  %v33 = vshrl.u32 %v32, 7
  %v34 = vsub.s32 0, %v33
  %v35 = vrot.slane %v30, %v34
  %v37 = vmul.f32 %v14, %v35
  %v38 = vmul.f32 %v15, %v35
  %v39 = vmul.f32 %v16, %v35
  %v40 = vmul.f32 %v17, %v35
  %v41 = vmul.f32 %v18, %v35
  %v42 = vmul.f32 %v19, %v35
  %v43 = vmul.f32 %v20, %v35
  %v44 = vmul.f32 %v21, %v35
  %v45 = vmul.f32 %v22, %v35
  %v46 = vmul.f32 %v23, %v35
  %v47 = vmul.f32 %v24, %v35
  %v48 = vmul.f32 %v25, %v35
  %v49 = vmul.f32 %v26, %v35
  %v50 = vmul.f32 %v27, %v35
  %v51 = vmul.f32 %v28, %v35
  %v52 = vmul.f32 %v29, %v35
  %v53 = vld [vmem:[%s2] sm:$0x1]
  %v55 = vlaneseq
  %v56 = vshrl.u32 %v55, 7
  %v57 = vsub.s32 0, %v56
  %v58 = vrot.slane %v53, %v57
  %v60 = vadd.f32 %v37, %v58
  %v61 = vadd.f32 %v38, %v58
  %v62 = vadd.f32 %v39, %v58
  %v63 = vadd.f32 %v40, %v58
  %v64 = vadd.f32 %v41, %v58
  %v65 = vadd.f32 %v42, %v58
  %v66 = vadd.f32 %v43, %v58
  %v67 = vadd.f32 %v44, %v58
  %v68 = vadd.f32 %v45, %v58
  %v69 = vadd.f32 %v46, %v58
  %v70 = vadd.f32 %v47, %v58
  %v71 = vadd.f32 %v48, %v58
  %v72 = vadd.f32 %v49, %v58
  %v73 = vadd.f32 %v50, %v58
  %v74 = vadd.f32 %v51, %v58
  %v75 = vadd.f32 %v52, %v58
  %v76 = vmax.f32 %v60, 0.0
  %v77 = vmax.f32 %v61, 0.0
  %v78 = vmax.f32 %v62, 0.0
  %v79 = vmax.f32 %v63, 0.0
  %v80 = vmax.f32 %v64, 0.0
  %v81 = vmax.f32 %v65, 0.0
  %v82 = vmax.f32 %v66, 0.0
  %v83 = vmax.f32 %v67, 0.0
  %v84 = vmax.f32 %v68, 0.0
  %v85 = vmax.f32 %v69, 0.0
  %v86 = vmax.f32 %v70, 0.0
  %v87 = vmax.f32 %v71, 0.0
  %v88 = vmax.f32 %v72, 0.0
  %v89 = vmax.f32 %v73, 0.0
  %v90 = vmax.f32 %v74, 0.0
  %v91 = vmax.f32 %v75, 0.0
  %vm92 = vcmask 523264
  %v93 = vsel %vm92, %v76, -inf
  %v94 = vsel %vm92, %v80, -inf
  %v95 = vmax.f32 %v93, %v94
  %v96 = vsel %vm92, %v84, -inf
  %v97 = vmax.f32 %v95, %v96
  %v98 = vsel %vm92, %v88, -inf
  %v99 = vmax.f32 %v97, %v98
  %v100 = vsel %vm92, %v77, -inf
  %v101 = vsel %vm92, %v81, -inf
  %v102 = vmax.f32 %v100, %v101
  %v103 = vsel %vm92, %v85, -inf
  %v104 = vmax.f32 %v102, %v103
  %v105 = vsel %vm92, %v89, -inf
  %v106 = vmax.f32 %v104, %v105
  %v107 = vsel %vm92, %v78, -inf
  %v108 = vsel %vm92, %v82, -inf
  %v109 = vmax.f32 %v107, %v108
  %v110 = vsel %vm92, %v86, -inf
  %v111 = vmax.f32 %v109, %v110
  %v112 = vsel %vm92, %v90, -inf
  %v113 = vmax.f32 %v111, %v112
  %v114 = vsel %vm92, %v79, -inf
  %v115 = vsel %vm92, %v83, -inf
  %v116 = vmax.f32 %v114, %v115
  %v117 = vsel %vm92, %v87, -inf
  %v118 = vmax.f32 %v116, %v117
  %v119 = vsel %vm92, %v91, -inf
  %v120 = vmax.f32 %v118, %v119
  %121 = vst.msk [vmem:[%s3] sm:$0xff] %vm92, %v99
  %122 = vst.msk [vmem:[%s3 + $0x8] sm:$0xff] %vm92, %v106
  %123 = vst.msk [vmem:[%s3 + $0x10] sm:$0xff] %vm92, %v113
  %124 = vst.msk [vmem:[%s3 + $0x18] sm:$0xff] %vm92, %v120
  // Predicated region
  $region14: #{autoencoder_forward.14} parent=0 // pred_check
    _
  $region15: #{autoencoder_forward.14} parent=0 // pred_check_branch
    %126 = sbr.rel (0) target = $region17
  $region16: #{autoencoder_forward.14} parent=0 // pred_region
    _
  $region17: #{autoencoder_forward.14} parent=0 // pred_fallthru
    _
  // Predicated region
  $region18: #{autoencoder_forward.14} parent=0 // pred_check
    _
  $region19: #{autoencoder_forward.14} parent=0 // pred_check_branch
    %128 = sbr.rel (0) target = $region21
  $region20: #{autoencoder_forward.14} parent=0 // pred_region
    _
  $region21: #{autoencoder_forward.14} parent=0 // pred_fallthru
    _

// kernel: autoencoder_forward.16
$region0: #{autoencoder_forward.16}
  #allocation0 [shape = 'u32[]', space=smem, size = 0x4, offset = 0x4, fixed_abs, tag = 'smem constant byte address 0x4 - core index']
  #allocation1 [shape = 'u32[144,128]{1,0:T(1,128)}', space=vmem, size = 0x12000, scoped, tag = 'internal scratch']
  %s0 = inlined_call_operand.vmem [shape: f32[4,8,128], index: 0, kind: input, shape index: {}]
  %s1 = inlined_call_operand.vmem [shape: f32[1,128], index: 1, kind: input, shape index: {}]
  %s2 = inlined_call_operand.vmem [shape: f32[1,128], index: 2, kind: input, shape index: {}]
  %s3 = inlined_call_operand.vmem [shape: f32[8,128], index: 3, kind: output, shape index: {}]
  %s4 = sld [smem:[#allocation0]]
  $region22: #{autoencoder_forward.16} parent=0
    _
  %s6 = ssub.s32 1, %s4
  %s7 = scalar_select 0, %s6, %s4
  // Predicated region
  $region2: #{autoencoder_forward.16} parent=0 // pred_check
    _
  $region3: #{autoencoder_forward.16} parent=0 // pred_check_branch
    %9 = sbr.rel (0) target = $region5
  $region4: #{autoencoder_forward.16} parent=0 // pred_region
    _
  $region5: #{autoencoder_forward.16} parent=0 // pred_fallthru
    _
  // Predicated region
  $region6: #{autoencoder_forward.16} parent=0 // pred_check
    _
  $region7: #{autoencoder_forward.16} parent=0 // pred_check_branch
    %11 = sbr.rel (0) target = $region9
  $region8: #{autoencoder_forward.16} parent=0 // pred_region
    _
  $region9: #{autoencoder_forward.16} parent=0 // pred_fallthru
    _
  // Predicated region
  $region10: #{autoencoder_forward.16} parent=0 // pred_check
    _
  $region11: #{autoencoder_forward.16} parent=0 // pred_check_branch
    %13 = sbr.rel (0) target = $region13
  $region12: #{autoencoder_forward.16} parent=0 // pred_region
    _
  $region13: #{autoencoder_forward.16} parent=0 // pred_fallthru
    _
  %v14 = vld [vmem:[%s0] sm:$0xff]
  %v15 = vld [vmem:[%s0 + $0x8] sm:$0xff]
  %v16 = vld [vmem:[%s0 + $0x10] sm:$0xff]
  %v17 = vld [vmem:[%s0 + $0x18] sm:$0xff]
  %v18 = vld [vmem:[%s1] sm:$0x1]
  %v20 = vlaneseq
  %v21 = vshrl.u32 %v20, 7
  %v22 = vsub.s32 0, %v21
  %v23 = vrot.slane %v18, %v22
  %v25 = vmul.f32 %v14, %v23
  %v26 = vmul.f32 %v15, %v23
  %v27 = vmul.f32 %v16, %v23
  %v28 = vmul.f32 %v17, %v23
  %v29 = vld [vmem:[%s2] sm:$0x1]
  %v31 = vlaneseq
  %v32 = vshrl.u32 %v31, 7
  %v33 = vsub.s32 0, %v32
  %v34 = vrot.slane %v29, %v33
  %v36 = vadd.f32 %v25, %v34
  %v37 = vadd.f32 %v26, %v34
  %v38 = vadd.f32 %v27, %v34
  %v39 = vadd.f32 %v28, %v34
  %v40 = vmax.f32 %v36, 0.0
  %v41 = vmax.f32 %v37, 0.0
  %v42 = vmax.f32 %v38, 0.0
  %v43 = vmax.f32 %v39, 0.0
  %v44 = vmax.f32 %v40, %v41
  %v45 = vmax.f32 %v42, %v43
  %v46 = vmax.f32 %v44, %v45
  %47 = vst [vmem:[%s3] sm:$0xff] %v46
  // Predicated region
  $region14: #{autoencoder_forward.16} parent=0 // pred_check
    _
  $region15: #{autoencoder_forward.16} parent=0 // pred_check_branch
    %49 = sbr.rel (0) target = $region17
  $region16: #{autoencoder_forward.16} parent=0 // pred_region
    _
  $region17: #{autoencoder_forward.16} parent=0 // pred_fallthru
    _
  // Predicated region
  $region18: #{autoencoder_forward.16} parent=0 // pred_check
    _
  $region19: #{autoencoder_forward.16} parent=0 // pred_check_branch
    %51 = sbr.rel (0) target = $region21
  $region20: #{autoencoder_forward.16} parent=0 // pred_region
    _
  $region21: #{autoencoder_forward.16} parent=0 // pred_fallthru
    _

// kernel: squeeze.16
$region0: #{squeeze.16}
  %s0 = inlined_call_operand.vmem [shape: f32[256], index: 0, kind: input, shape index: {}]
  %s1 = inlined_call_operand.vmem [shape: f32[4,64], index: 1, kind: output, shape index: {}]
  $region1: #{squeeze.16} parent=0
    #allocation0 [shape = 'u8[4096]{0}', space=vmem, size = 0x1000, scoped, tag = 'scoped mem for output reshape']
    #allocation1 [shape = 'u8[4096]{0}', space=vmem, size = 0x1000, scoped, tag = 'scoped mem for input reshape']
    %s3 = sshll.u32 1, 2
    %s4 = ssub.s32 %s3, 1
    %v5 = vld [vmem:[%s0] sm:%s4]
    %6 = vst [vmem:[#allocation1] sm:%s4] %v5
    %v7 = vld [vmem:[#allocation1] sm:$0x3]
    %vm8 = vcmask 523264
    %9 = vst.msk [vmem:[#allocation0] ss:$2 sm:$0x3] %vm8, %v7
    %v10 = vld [vmem:[#allocation1] sm:$0x3]
    %11 = vrot.lane.b32.xlu0 %v10, 64
    %v12 = vpop.permute.xlu0 %11
    %vm13 = vcmask 523264
    %s14 = scalar_lea.vmem [#allocation0], 1
    %15 = vst.msk [vmem:[%s14] ss:$2 sm:$0x3] %vm13, %v12
    %s17 = sshll.u32 1, 4
    %s18 = ssub.s32 %s17, 1
    %v20 = vld [vmem:[#allocation0] sm:%s18]
    %s21 = sshll.u32 1, 4
    %s22 = ssub.s32 %s21, 1
    %23 = vst [vmem:[%s1] sm:%s22] %v20

// kernel: autoencoder_forward.15
$region0: #{autoencoder_forward.15}
  #allocation0 [shape = 'u32[]', space=smem, size = 0x4, offset = 0x4, fixed_abs, tag = 'smem constant byte address 0x4 - core index']
  #allocation1 [shape = 'u32[144,128]{1,0:T(1,128)}', space=vmem, size = 0x12000, scoped, tag = 'internal scratch']
  %s0 = inlined_call_operand.vmem [shape: f32[32,576], index: 0, kind: input, shape index: {}]
  %s1 = inlined_call_operand.vmem [shape: f32[576,128], index: 1, kind: input, shape index: {}]
  %s2 = inlined_call_operand.vmem [shape: f32[1,128], index: 2, kind: input, shape index: {}]
  %s3 = inlined_call_operand.vmem [shape: f32[32,128], index: 3, kind: output, shape index: {0}]
  %s4 = inlined_call_operand.vmem [shape: f32[1,128], index: 4, kind: output, shape index: {1}]
  %s5 = inlined_call_operand.vmem [shape: f32[1,128], index: 5, kind: output, shape index: {2}]
  %6 = xla_tuple %s3, %s4, %s5
  %s7 = sld [smem:[#allocation0]]
  $region42: #{autoencoder_forward.15} parent=0
    _
  %s9 = ssub.s32 1, %s7
  %s10 = scalar_select 0, %s9, %s7
  // Predicated region
  $region2: #{autoencoder_forward.15} parent=0 // pred_check
    _
  $region3: #{autoencoder_forward.15} parent=0 // pred_check_branch
    %12 = sbr.rel (0) target = $region5
  $region4: #{autoencoder_forward.15} parent=0 // pred_region
    _
  $region5: #{autoencoder_forward.15} parent=0 // pred_fallthru
    _
  // Predicated region
  $region6: #{autoencoder_forward.15} parent=0 // pred_check
    _
  $region7: #{autoencoder_forward.15} parent=0 // pred_check_branch
    %14 = sbr.rel (0) target = $region9
  $region8: #{autoencoder_forward.15} parent=0 // pred_region
    _
  $region9: #{autoencoder_forward.15} parent=0 // pred_fallthru
    _
  // Predicated region
  $region10: #{autoencoder_forward.15} parent=0 // pred_check
    _
  $region11: #{autoencoder_forward.15} parent=0 // pred_check_branch
    %16 = sbr.rel (0) target = $region13
  $region12: #{autoencoder_forward.15} parent=0 // pred_region
    _
  $region13: #{autoencoder_forward.15} parent=0 // pred_fallthru
    _
  %p17 = scmp.eq.s32.totalorder 0, 0
  // Predicated region
  $region14: #{autoencoder_forward.15} parent=0 // pred_check
    %p18 = pneg %p17
  $region15: #{autoencoder_forward.15} parent=0 // pred_check_branch
    %20 = sbr.rel (%p18) target = $region17
  $region16: #{autoencoder_forward.15} parent=0 // pred_region
    %21 = vst [vmem:[%s4] sm:$0x1] 0.0
    %22 = vst [vmem:[%s5] sm:$0x1] 0.0
  $region17: #{autoencoder_forward.15} parent=0 // pred_fallthru
    _
  %v23 = vld [vmem:[%s0] sm:$0xff]
  %v24 = vld [vmem:[%s0 + $0x8] sm:$0xff]
  %v25 = vld [vmem:[%s0 + $0x10] sm:$0xff]
  %v26 = vld [vmem:[%s0 + $0x18] sm:$0xff]
  %v27 = vld [vmem:[%s0 + $0x20] sm:$0xff]
  %v28 = vld [vmem:[%s0 + $0x28] sm:$0xff]
  %v29 = vld [vmem:[%s0 + $0x30] sm:$0xff]
  %v30 = vld [vmem:[%s0 + $0x38] sm:$0xff]
  %v31 = vld [vmem:[%s0 + $0x40] sm:$0xff]
  %v32 = vld [vmem:[%s0 + $0x48] sm:$0xff]
  %v33 = vld [vmem:[%s0 + $0x50] sm:$0xff]
  %v34 = vld [vmem:[%s0 + $0x58] sm:$0xff]
  %v35 = vld [vmem:[%s0 + $0x60] sm:$0xff]
  %v36 = vld [vmem:[%s0 + $0x68] sm:$0xff]
  %v37 = vld [vmem:[%s0 + $0x70] sm:$0xff]
  %v38 = vld [vmem:[%s0 + $0x78] sm:$0xff]
  %v39 = vld [vmem:[%s0 + $0x80] sm:$0xff]
  %v40 = vld [vmem:[%s0 + $0x88] sm:$0xff]
  %v41 = vld [vmem:[%s0 + $0x90] sm:$0xff]
  %v42 = vld [vmem:[%s0 + $0x98] sm:$0xff]
  %v43 = vld [vmem:[%s1] sm:$0xff]
  %v44 = vld [vmem:[%s1 + $0x8] sm:$0xff]
  %v45 = vld [vmem:[%s1 + $0x10] sm:$0xff]
  %v46 = vld [vmem:[%s1 + $0x18] sm:$0xff]
  %v47 = vld [vmem:[%s1 + $0x20] sm:$0xff]
  %v48 = vld [vmem:[%s1 + $0x28] sm:$0xff]
  %v49 = vld [vmem:[%s1 + $0x30] sm:$0xff]
  %v50 = vld [vmem:[%s1 + $0x38] sm:$0xff]
  %v51 = vld [vmem:[%s1 + $0x40] sm:$0xff]
  %v52 = vld [vmem:[%s1 + $0x48] sm:$0xff]
  %v53 = vld [vmem:[%s1 + $0x50] sm:$0xff]
  %v54 = vld [vmem:[%s1 + $0x58] sm:$0xff]
  %v55 = vld [vmem:[%s1 + $0x60] sm:$0xff]
  %v56 = vld [vmem:[%s1 + $0x68] sm:$0xff]
  %v57 = vld [vmem:[%s1 + $0x70] sm:$0xff]
  %v58 = vld [vmem:[%s1 + $0x78] sm:$0xff]
  %v59 = vld [vmem:[%s1 + $0x80] sm:$0xff]
  %v60 = vld [vmem:[%s1 + $0x88] sm:$0xff]
  %v61 = vld [vmem:[%s1 + $0x90] sm:$0xff]
  %v62 = vld [vmem:[%s1 + $0x98] sm:$0xff]
  %v63 = vld [vmem:[%s1 + $0xa0] sm:$0xff]
  %v64 = vld [vmem:[%s1 + $0xa8] sm:$0xff]
  %v65 = vld [vmem:[%s1 + $0xb0] sm:$0xff]
  %v66 = vld [vmem:[%s1 + $0xb8] sm:$0xff]
  %v67 = vld [vmem:[%s1 + $0xc0] sm:$0xff]
  %v68 = vld [vmem:[%s1 + $0xc8] sm:$0xff]
  %v69 = vld [vmem:[%s1 + $0xd0] sm:$0xff]
  %v70 = vld [vmem:[%s1 + $0xd8] sm:$0xff]
  %v71 = vld [vmem:[%s1 + $0xe0] sm:$0xff]
  %v72 = vld [vmem:[%s1 + $0xe8] sm:$0xff]
  %v73 = vld [vmem:[%s1 + $0xf0] sm:$0xff]
  %v74 = vld [vmem:[%s1 + $0xf8] sm:$0xff]
  %v75 = vld [vmem:[%s1 + $0x100] sm:$0xff]
  %v76 = vld [vmem:[%s1 + $0x108] sm:$0xff]
  %v77 = vld [vmem:[%s1 + $0x110] sm:$0xff]
  %v78 = vld [vmem:[%s1 + $0x118] sm:$0xff]
  %v79 = vld [vmem:[%s1 + $0x120] sm:$0xff]
  %v80 = vld [vmem:[%s1 + $0x128] sm:$0xff]
  %v81 = vld [vmem:[%s1 + $0x130] sm:$0xff]
  %v82 = vld [vmem:[%s1 + $0x138] sm:$0xff]
  %v83 = vld [vmem:[%s1 + $0x140] sm:$0xff]
  %v84 = vld [vmem:[%s1 + $0x148] sm:$0xff]
  %v85 = vld [vmem:[%s1 + $0x150] sm:$0xff]
  %v86 = vld [vmem:[%s1 + $0x158] sm:$0xff]
  %v87 = vld [vmem:[%s1 + $0x160] sm:$0xff]
  %v88 = vld [vmem:[%s1 + $0x168] sm:$0xff]
  %v89 = vld [vmem:[%s1 + $0x170] sm:$0xff]
  %v90 = vld [vmem:[%s1 + $0x178] sm:$0xff]
  %v91 = vld [vmem:[%s1 + $0x180] sm:$0xff]
  %v92 = vld [vmem:[%s1 + $0x188] sm:$0xff]
  %v93 = vld [vmem:[%s1 + $0x190] sm:$0xff]
  %v94 = vld [vmem:[%s1 + $0x198] sm:$0xff]
  %v95 = vld [vmem:[%s1 + $0x1a0] sm:$0xff]
  %v96 = vld [vmem:[%s1 + $0x1a8] sm:$0xff]
  %v97 = vld [vmem:[%s1 + $0x1b0] sm:$0xff]
  %v98 = vld [vmem:[%s1 + $0x1b8] sm:$0xff]
  %v99 = vld [vmem:[%s1 + $0x1c0] sm:$0xff]
  %v100 = vld [vmem:[%s1 + $0x1c8] sm:$0xff]
  %v101 = vld [vmem:[%s1 + $0x1d0] sm:$0xff]
  %v102 = vld [vmem:[%s1 + $0x1d8] sm:$0xff]
  %v103 = vld [vmem:[%s1 + $0x1e0] sm:$0xff]
  %v104 = vld [vmem:[%s1 + $0x1e8] sm:$0xff]
  %v105 = vld [vmem:[%s1 + $0x1f0] sm:$0xff]
  %v106 = vld [vmem:[%s1 + $0x1f8] sm:$0xff]
  %v107 = vld [vmem:[%s1 + $0x200] sm:$0xff]
  %v108 = vld [vmem:[%s1 + $0x208] sm:$0xff]
  %v109 = vld [vmem:[%s1 + $0x210] sm:$0xff]
  %v110 = vld [vmem:[%s1 + $0x218] sm:$0xff]
  %v111 = vld [vmem:[%s1 + $0x220] sm:$0xff]
  %v112 = vld [vmem:[%s1 + $0x228] sm:$0xff]
  %v113 = vld [vmem:[%s1 + $0x230] sm:$0xff]
  %v114 = vld [vmem:[%s1 + $0x238] sm:$0xff]
  %v115 = vld [vmem:[%s2] sm:$0x1]
  %v117 = vlaneseq
  %v118 = vshrl.u32 %v117, 7
  %v119 = vsub.s32 0, %v118
  %v120 = vrot.slane %v115, %v119
  %vm122 = vcmask 523264
  %v124 = vsel %vm122, %v27, 0
  %v127 = vsel %vm122, %v32, 0
  %v130 = vsel %vm122, %v37, 0
  %v133 = vsel %vm122, %v42, 0
  %135 = vmatprep.subr.mxu0 0.0
  %136 = vmatpush1.msra.mxu0 %v58
  %137 = vmatprep.subr.mxu0 0.0
  %138 = vmatpush1.msra.mxu0 %v57
  %139 = vmatprep.subr.mxu0 0.0
  %140 = vmatpush1.msra.mxu0 %v56
  %141 = vmatprep.subr.mxu0 0.0
  %142 = vmatpush1.msra.mxu0 %v55
  %143 = vmatprep.subr.mxu0 0.0
  %144 = vmatpush1.msra.mxu0 %v54
  %145 = vmatprep.subr.mxu0 0.0
  %146 = vmatpush1.msra.mxu0 %v53
  %147 = vmatprep.subr.mxu0 0.0
  %148 = vmatpush1.msra.mxu0 %v52
  %149 = vmatprep.subr.mxu0 0.0
  %150 = vmatpush1.msra.mxu0 %v51
  %151 = vmatprep.subr.mxu0 0.0
  %152 = vmatpush1.msra.mxu0 %v50
  %153 = vmatprep.subr.mxu0 0.0
  %154 = vmatpush1.msra.mxu0 %v49
  %155 = vmatprep.subr.mxu0 0.0
  %156 = vmatpush1.msra.mxu0 %v48
  %157 = vmatprep.subr.mxu0 0.0
  %158 = vmatpush1.msra.mxu0 %v47
  %159 = vmatprep.subr.mxu0 0.0
  %160 = vmatpush1.msra.mxu0 %v46
  %161 = vmatprep.subr.mxu0 0.0
  %162 = vmatpush1.msra.mxu0 %v45
  %163 = vmatprep.subr.mxu0 0.0
  %164 = vmatpush1.msra.mxu0 %v44
  %165 = vmatprep.subr.mxu0 0.0
  %166 = vmatpush1.msra.mxu0 %v43
  %167 = vmatprep.subr.mxu0 0.0
  %168 = vmatpush2.msra.mxu0 %v74
  %169 = vmatprep.subr.mxu0 0.0
  %170 = vmatpush2.msra.mxu0 %v73
  %171 = vmatprep.subr.mxu0 0.0
  %172 = vmatpush2.msra.mxu0 %v72
  %173 = vmatprep.subr.mxu0 0.0
  %174 = vmatpush2.msra.mxu0 %v71
  %175 = vmatprep.subr.mxu0 0.0
  %176 = vmatpush2.msra.mxu0 %v70
  %177 = vmatprep.subr.mxu0 0.0
  %178 = vmatpush2.msra.mxu0 %v69
  %179 = vmatprep.subr.mxu0 0.0
  %180 = vmatpush2.msra.mxu0 %v68
  %181 = vmatprep.subr.mxu0 0.0
  %182 = vmatpush2.msra.mxu0 %v67
  %183 = vmatprep.subr.mxu0 0.0
  %184 = vmatpush2.msra.mxu0 %v66
  %185 = vmatprep.subr.mxu0 0.0
  %186 = vmatpush2.msra.mxu0 %v65
  %187 = vmatprep.subr.mxu0 0.0
  %188 = vmatpush2.msra.mxu0 %v64
  %189 = vmatprep.subr.mxu0 0.0
  %190 = vmatpush2.msra.mxu0 %v63
  %191 = vmatprep.subr.mxu0 0.0
  %192 = vmatpush2.msra.mxu0 %v62
  %193 = vmatprep.subr.mxu0 0.0
  %194 = vmatpush2.msra.mxu0 %v61
  %195 = vmatprep.subr.mxu0 0.0
  %196 = vmatpush2.msra.mxu0 %v60
  %197 = vmatprep.subr.mxu0 0.0
  %198 = vmatpush2.msra.mxu0 %v59
  %199 = vmatprep.mubr.f32.mxu0 %v24
  %200 = vmatmul.mubr.f32.gmra.mxu0 %v23
  %v201 = vpop.f32.mrf.mxu0
  %v202 = vadd.f32 %v120, %v201
  %v203 = vpop.f32.mrf.mxu0
  %204 = vmatprep.mubr.f32.mxu0 %v29
  %205 = vmatmul.mubr.f32.gmra.mxu0 %v28
  %v206 = vpop.f32.mrf.mxu0
  %v207 = vadd.f32 %v120, %v206
  %v208 = vpop.f32.mrf.mxu0
  %209 = vmatprep.mubr.f32.mxu0 %v34
  %210 = vmatmul.mubr.f32.gmra.mxu0 %v33
  %v211 = vpop.f32.mrf.mxu0
  %v212 = vadd.f32 %v120, %v211
  %v213 = vpop.f32.mrf.mxu0
  %214 = vmatprep.mubr.f32.mxu0 %v39
  %215 = vmatmul.mubr.f32.gmra.mxu0 %v38
  %v216 = vpop.f32.mrf.mxu0
  %v217 = vadd.f32 %v120, %v216
  %v218 = vpop.f32.mrf.mxu0
  %219 = vdwg.mxu0
  %220 = vmatprep.subr.mxu0 0.0
  %221 = vmatpush1.msra.mxu0 %v90
  %222 = vmatprep.subr.mxu0 0.0
  %223 = vmatpush1.msra.mxu0 %v89
  %224 = vmatprep.subr.mxu0 0.0
  %225 = vmatpush1.msra.mxu0 %v88
  %226 = vmatprep.subr.mxu0 0.0
  %227 = vmatpush1.msra.mxu0 %v87
  %228 = vmatprep.subr.mxu0 0.0
  %229 = vmatpush1.msra.mxu0 %v86
  %230 = vmatprep.subr.mxu0 0.0
  %231 = vmatpush1.msra.mxu0 %v85
  %232 = vmatprep.subr.mxu0 0.0
  %233 = vmatpush1.msra.mxu0 %v84
  %234 = vmatprep.subr.mxu0 0.0
  %235 = vmatpush1.msra.mxu0 %v83
  %236 = vmatprep.subr.mxu0 0.0
  %237 = vmatpush1.msra.mxu0 %v82
  %238 = vmatprep.subr.mxu0 0.0
  %239 = vmatpush1.msra.mxu0 %v81
  %240 = vmatprep.subr.mxu0 0.0
  %241 = vmatpush1.msra.mxu0 %v80
  %242 = vmatprep.subr.mxu0 0.0
  %243 = vmatpush1.msra.mxu0 %v79
  %244 = vmatprep.subr.mxu0 0.0
  %245 = vmatpush1.msra.mxu0 %v78
  %246 = vmatprep.subr.mxu0 0.0
  %247 = vmatpush1.msra.mxu0 %v77
  %248 = vmatprep.subr.mxu0 0.0
  %249 = vmatpush1.msra.mxu0 %v76
  %250 = vmatprep.subr.mxu0 0.0
  %251 = vmatpush1.msra.mxu0 %v75
  %252 = vmatprep.subr.mxu0 0.0
  %253 = vmatpush2.msra.mxu0 %v106
  %254 = vmatprep.subr.mxu0 0.0
  %255 = vmatpush2.msra.mxu0 %v105
  %256 = vmatprep.subr.mxu0 0.0
  %257 = vmatpush2.msra.mxu0 %v104
  %258 = vmatprep.subr.mxu0 0.0
  %259 = vmatpush2.msra.mxu0 %v103
  %260 = vmatprep.subr.mxu0 0.0
  %261 = vmatpush2.msra.mxu0 %v102
  %262 = vmatprep.subr.mxu0 0.0
  %263 = vmatpush2.msra.mxu0 %v101
  %264 = vmatprep.subr.mxu0 0.0
  %265 = vmatpush2.msra.mxu0 %v100
  %266 = vmatprep.subr.mxu0 0.0
  %267 = vmatpush2.msra.mxu0 %v99
  %268 = vmatprep.subr.mxu0 0.0
  %269 = vmatpush2.msra.mxu0 %v98
  %270 = vmatprep.subr.mxu0 0.0
  %271 = vmatpush2.msra.mxu0 %v97
  %272 = vmatprep.subr.mxu0 0.0
  %273 = vmatpush2.msra.mxu0 %v96
  %274 = vmatprep.subr.mxu0 0.0
  %275 = vmatpush2.msra.mxu0 %v95
  %276 = vmatprep.subr.mxu0 0.0
  %277 = vmatpush2.msra.mxu0 %v94
  %278 = vmatprep.subr.mxu0 0.0
  %279 = vmatpush2.msra.mxu0 %v93
  %280 = vmatprep.subr.mxu0 0.0
  %281 = vmatpush2.msra.mxu0 %v92
  %282 = vmatprep.subr.mxu0 0.0
  %283 = vmatpush2.msra.mxu0 %v91
  %284 = vmatprep.mubr.f32.mxu0 %v26
  %285 = vmatmul.mubr.f32.gmra.mxu0 %v25
  %v286 = vpop.f32.mrf.mxu0
  %v287 = vadd.f32 %v202, %v286
  %v288 = vpop.f32.mrf.mxu0
  %289 = vmatprep.mubr.f32.mxu0 %v31
  %290 = vmatmul.mubr.f32.gmra.mxu0 %v30
  %v291 = vpop.f32.mrf.mxu0
  %v292 = vadd.f32 %v207, %v291
  %v293 = vpop.f32.mrf.mxu0
  %294 = vmatprep.mubr.f32.mxu0 %v36
  %295 = vmatmul.mubr.f32.gmra.mxu0 %v35
  %v296 = vpop.f32.mrf.mxu0
  %v297 = vadd.f32 %v212, %v296
  %v298 = vpop.f32.mrf.mxu0
  %299 = vmatprep.mubr.f32.mxu0 %v41
  %300 = vmatmul.mubr.f32.gmra.mxu0 %v40
  %v301 = vpop.f32.mrf.mxu0
  %v302 = vadd.f32 %v217, %v301
  %v303 = vpop.f32.mrf.mxu0
  %304 = vdwg.mxu0
  %305 = vmatprep.subr.mxu0 0.0
  %306 = vmatpush1.msra.mxu0 0.0
  %307 = vmatprep.subr.mxu0 0.0
  %308 = vmatpush1.msra.mxu0 0.0
  %309 = vmatprep.subr.mxu0 0.0
  %310 = vmatpush1.msra.mxu0 0.0
  %311 = vmatprep.subr.mxu0 0.0
  %312 = vmatpush1.msra.mxu0 0.0
  %313 = vmatprep.subr.mxu0 0.0
  %314 = vmatpush1.msra.mxu0 0.0
  %315 = vmatprep.subr.mxu0 0.0
  %316 = vmatpush1.msra.mxu0 0.0
  %317 = vmatprep.subr.mxu0 0.0
  %318 = vmatpush1.msra.mxu0 0.0
  %319 = vmatprep.subr.mxu0 0.0
  %320 = vmatpush1.msra.mxu0 0.0
  %321 = vmatprep.subr.mxu0 0.0
  %322 = vmatpush1.msra.mxu0 %v114
  %323 = vmatprep.subr.mxu0 0.0
  %324 = vmatpush1.msra.mxu0 %v113
  %325 = vmatprep.subr.mxu0 0.0
  %326 = vmatpush1.msra.mxu0 %v112
  %327 = vmatprep.subr.mxu0 0.0
  %328 = vmatpush1.msra.mxu0 %v111
  %329 = vmatprep.subr.mxu0 0.0
  %330 = vmatpush1.msra.mxu0 %v110
  %331 = vmatprep.subr.mxu0 0.0
  %332 = vmatpush1.msra.mxu0 %v109
  %333 = vmatprep.subr.mxu0 0.0
  %334 = vmatpush1.msra.mxu0 %v108
  %335 = vmatprep.subr.mxu0 0.0
  %336 = vmatpush1.msra.mxu0 %v107
  %337 = vmatprep.subr.mxu0 0.0
  %338 = vmatpush2.msra.mxu0 0.0
  %339 = vmatprep.subr.mxu0 0.0
  %340 = vmatpush2.msra.mxu0 0.0
  %341 = vmatprep.subr.mxu0 0.0
  %342 = vmatpush2.msra.mxu0 0.0
  %343 = vmatprep.subr.mxu0 0.0
  %344 = vmatpush2.msra.mxu0 0.0
  %345 = vmatprep.subr.mxu0 0.0
  %346 = vmatpush2.msra.mxu0 0.0
  %347 = vmatprep.subr.mxu0 0.0
  %348 = vmatpush2.msra.mxu0 0.0
  %349 = vmatprep.subr.mxu0 0.0
  %350 = vmatpush2.msra.mxu0 0.0
  %351 = vmatprep.subr.mxu0 0.0
  %352 = vmatpush2.msra.mxu0 0.0
  %353 = vmatprep.subr.mxu0 0.0
  %354 = vmatpush2.msra.mxu0 0.0
  %355 = vmatprep.subr.mxu0 0.0
  %356 = vmatpush2.msra.mxu0 0.0
  %357 = vmatprep.subr.mxu0 0.0
  %358 = vmatpush2.msra.mxu0 0.0
  %359 = vmatprep.subr.mxu0 0.0
  %360 = vmatpush2.msra.mxu0 0.0
  %361 = vmatprep.subr.mxu0 0.0
  %362 = vmatpush2.msra.mxu0 0.0
  %363 = vmatprep.subr.mxu0 0.0
  %364 = vmatpush2.msra.mxu0 0.0
  %365 = vmatprep.subr.mxu0 0.0
  %366 = vmatpush2.msra.mxu0 0.0
  %367 = vmatprep.subr.mxu0 0.0
  %368 = vmatpush2.msra.mxu0 0.0
  %369 = vmatprep.mubr.f32.mxu0 0.0
  %370 = vmatmul.mubr.f32.gmra.mxu0 %v124
  %v371 = vpop.f32.mrf.mxu0
  %v372 = vadd.f32 %v287, %v371
  %v373 = vpop.f32.mrf.mxu0
  %374 = vmatprep.mubr.f32.mxu0 0.0
  %375 = vmatmul.mubr.f32.gmra.mxu0 %v127
  %v376 = vpop.f32.mrf.mxu0
  %v377 = vadd.f32 %v292, %v376
  %v378 = vpop.f32.mrf.mxu0
  %379 = vmatprep.mubr.f32.mxu0 0.0
  %380 = vmatmul.mubr.f32.gmra.mxu0 %v130
  %v381 = vpop.f32.mrf.mxu0
  %v382 = vadd.f32 %v297, %v381
  %v383 = vpop.f32.mrf.mxu0
  %384 = vmatprep.mubr.f32.mxu0 0.0
  %385 = vmatmul.mubr.f32.gmra.mxu0 %v133
  %v386 = vpop.f32.mrf.mxu0
  %v387 = vadd.f32 %v302, %v386
  %v388 = vpop.f32.mrf.mxu0
  %389 = vdwg.mxu0
  %390 = vst [vmem:[%s3] sm:$0xff] %v372
  %391 = vst [vmem:[%s3 + $0x8] sm:$0xff] %v377
  %392 = vst [vmem:[%s3 + $0x10] sm:$0xff] %v382
  %393 = vst [vmem:[%s3 + $0x18] sm:$0xff] %v387
  %v394 = vld [vmem:[%s4] sm:$0x1]
  %v395 = vadd.f32 %v372, %v377
  %v396 = vadd.f32 %v395, %v382
  %v397 = vadd.f32 %v396, %v387
  %v398 = vrot.slane %v397, 4
  %v399 = vadd.f32 %v397, %v398
  %v400 = vrot.slane %v399, 2
  %v401 = vadd.f32 %v399, %v400
  %v402 = vrot.slane %v401, 1
  %v403 = vadd.f32 %v401, %v402
  %v404 = vadd.f32 %v394, %v403
  %405 = vst [vmem:[%s4] sm:$0x1] %v404
  %v406 = vld [vmem:[%s5] sm:$0x1]
  %v407 = vmul.f32 %v372, %v372
  %v408 = vmul.f32 %v377, %v377
  %v409 = vmul.f32 %v382, %v382
  %v410 = vmul.f32 %v387, %v387
  %v411 = vadd.f32 %v407, %v408
  %v412 = vadd.f32 %v411, %v409
  %v413 = vadd.f32 %v412, %v410
  %v414 = vrot.slane %v413, 4
  %v415 = vadd.f32 %v413, %v414
  %v416 = vrot.slane %v415, 2
  %v417 = vadd.f32 %v415, %v416
  %v418 = vrot.slane %v417, 1
  %v419 = vadd.f32 %v417, %v418
  %v420 = vadd.f32 %v406, %v419
  %421 = vst [vmem:[%s5] sm:$0x1] %v420
  // Predicated region
  $region18: #{autoencoder_forward.15} parent=0 // pred_check
    _
  $region19: #{autoencoder_forward.15} parent=0 // pred_check_branch
    %423 = sbr.rel (0) target = $region21
  $region20: #{autoencoder_forward.15} parent=0 // pred_region
    _
  $region21: #{autoencoder_forward.15} parent=0 // pred_fallthru
    _
  // Predicated region
  $region22: #{autoencoder_forward.15} parent=0 // pred_check
    _
  $region23: #{autoencoder_forward.15} parent=0 // pred_check_branch
    %425 = sbr.rel (0) target = $region25
  $region24: #{autoencoder_forward.15} parent=0 // pred_region
    _
  $region25: #{autoencoder_forward.15} parent=0 // pred_fallthru
    _
  // Predicated region
  $region26: #{autoencoder_forward.15} parent=0 // pred_check
    _
  $region27: #{autoencoder_forward.15} parent=0 // pred_check_branch
    %427 = sbr.rel (0) target = $region29
  $region28: #{autoencoder_forward.15} parent=0 // pred_region
    _
  $region29: #{autoencoder_forward.15} parent=0 // pred_fallthru
    _
  // Predicated region
  $region30: #{autoencoder_forward.15} parent=0 // pred_check
    _
  $region31: #{autoencoder_forward.15} parent=0 // pred_check_branch
    %429 = sbr.rel (0) target = $region33
  $region32: #{autoencoder_forward.15} parent=0 // pred_region
    _
  $region33: #{autoencoder_forward.15} parent=0 // pred_fallthru
    _
  // Predicated region
  $region34: #{autoencoder_forward.15} parent=0 // pred_check
    _
  $region35: #{autoencoder_forward.15} parent=0 // pred_check_branch
    %431 = sbr.rel (0) target = $region37
  $region36: #{autoencoder_forward.15} parent=0 // pred_region
    _
  $region37: #{autoencoder_forward.15} parent=0 // pred_fallthru
    _
  // Predicated region
  $region38: #{autoencoder_forward.15} parent=0 // pred_check
    _
  $region39: #{autoencoder_forward.15} parent=0 // pred_check_branch
    %433 = sbr.rel (0) target = $region41
  $region40: #{autoencoder_forward.15} parent=0 // pred_region
    _
  $region41: #{autoencoder_forward.15} parent=0 // pred_fallthru
    _

// kernel: tile.53
$region0: #{tile.53}
  #allocation0 [shape = 's32[1]{0}', space=sflag, size = 0x4, scoped, tag = 'scoped memory for tile.53']
  %s0 = inlined_call_operand.vmem [shape: f32[32], index: 0, kind: input, shape index: {}]
  %s1 = inlined_call_operand.vmem [shape: f32[4,32], index: 1, kind: output, shape index: {}]
  // Predicated region
  $region2: #{tile.53} parent=0 // pred_check
    _
  $region3: #{tile.53} parent=0 // pred_check_branch
    %3 = sbr.rel (0) target = $region5
  $region4: #{tile.53} parent=0 // pred_region
    _
  $region5: #{tile.53} parent=0 // pred_fallthru
    _
  %v4 = vld [vmem:[%s0] ss:$0 sm:$0xff]
  %5 = vst [vmem:[%s1] sm:$0xf] %v4

// kernel: tile.54
$region0: #{tile.54}
  %s0 = inlined_call_operand.vmem [shape: f32[4,32], index: 0, kind: input, shape index: {}]
  %s1 = inlined_call_operand.vmem [shape: f32[1,128], index: 1, kind: output, shape index: {}]
  $region1: #{tile.54} parent=0
    #allocation0 [shape = 'u8[4096]{0}', space=vmem, size = 0x1000, scoped, tag = 'scoped mem for output reshape']
    #allocation1 [shape = 'u8[4096]{0}', space=vmem, size = 0x1000, scoped, tag = 'scoped mem for input reshape']
    %s3 = sshll.u32 1, 4
    %s4 = ssub.s32 %s3, 1
    %v5 = vld [vmem:[%s0] sm:%s4]
    %6 = vst [vmem:[#allocation1] sm:%s4] %v5
    %v7 = vld [vmem:[#allocation1] sm:$0x1]
    %vm8 = vcmask 261120
    %9 = vst.msk [vmem:[#allocation0] sm:$0x1] %vm8, %v7
    %s10 = scalar_lea.vmem [#allocation1], 3
    %v11 = vld [vmem:[%s10] sm:$0x1]
    %12 = vrot.lane.b32.xlu0 %v11, 96
    %v13 = vpop.permute.xlu0 %12
    %vm14 = vcmask 1048320
    %15 = vst.msk [vmem:[#allocation0] sm:$0x1] %vm14, %v13
    %s16 = scalar_lea.vmem [#allocation1], 2
    %v17 = vld [vmem:[%s16] sm:$0x1]
    %18 = vrot.lane.b32.xlu0 %v17, 64
    %v19 = vpop.permute.xlu0 %18
    %vm20 = vcmask 785920
    %21 = vst.msk [vmem:[#allocation0] sm:$0x1] %vm20, %v19
    %s22 = scalar_lea.vmem [#allocation1], 1
    %v23 = vld [vmem:[%s22] sm:$0x1]
    %24 = vrot.lane.b32.xlu0 %v23, 32
    %v25 = vpop.permute.xlu0 %24
    %vm26 = vcmask 523520
    %27 = vst.msk [vmem:[#allocation0] sm:$0x1] %vm26, %v25
    %s29 = sshll.u32 1, 1
    %s30 = ssub.s32 %s29, 1
    %v32 = vld [vmem:[#allocation0] sm:%s30]
    %s33 = sshll.u32 1, 1
    %s34 = ssub.s32 %s33, 1
    %35 = vst [vmem:[%s1] sm:%s34] %v32

// kernel: squeeze.19
$region0: #{squeeze.19}
  %s0 = inlined_call_operand.vmem [shape: f32[128], index: 0, kind: input, shape index: {}]
  %s1 = inlined_call_operand.vmem [shape: f32[4,32], index: 1, kind: output, shape index: {}]
  $region1: #{squeeze.19} parent=0
    #allocation0 [shape = 'u8[4096]{0}', space=vmem, size = 0x1000, scoped, tag = 'scoped mem for output reshape']
    #allocation1 [shape = 'u8[4096]{0}', space=vmem, size = 0x1000, scoped, tag = 'scoped mem for input reshape']
    %s3 = sshll.u32 1, 1
    %s4 = ssub.s32 %s3, 1
    %v5 = vld [vmem:[%s0] sm:%s4]
    %6 = vst [vmem:[#allocation1] sm:%s4] %v5
    %v7 = vld [vmem:[#allocation1] sm:$0x1]
    %vm8 = vcmask 261120
    %9 = vst.msk [vmem:[#allocation0] sm:$0x1] %vm8, %v7
    %v10 = vld [vmem:[#allocation1] sm:$0x1]
    %11 = vrot.lane.b32.xlu0 %v10, 96
    %v12 = vpop.permute.xlu0 %11
    %vm13 = vcmask 261120
    %s14 = scalar_lea.vmem [#allocation0], 1
    %15 = vst.msk [vmem:[%s14] sm:$0x1] %vm13, %v12
    %v16 = vld [vmem:[#allocation1] sm:$0x1]
    %17 = vrot.lane.b32.xlu0 %v16, 64
    %v18 = vpop.permute.xlu0 %17
    %vm19 = vcmask 261120
    %s20 = scalar_lea.vmem [#allocation0], 2
    %21 = vst.msk [vmem:[%s20] sm:$0x1] %vm19, %v18
    %v22 = vld [vmem:[#allocation1] sm:$0x1]
    %23 = vrot.lane.b32.xlu0 %v22, 32
    %v24 = vpop.permute.xlu0 %23
    %vm25 = vcmask 261120
    %s26 = scalar_lea.vmem [#allocation0], 3
    %27 = vst.msk [vmem:[%s26] sm:$0x1] %vm25, %v24
    %s29 = sshll.u32 1, 4
    %s30 = ssub.s32 %s29, 1
    %v32 = vld [vmem:[#allocation0] sm:%s30]
    %s33 = sshll.u32 1, 4
    %s34 = ssub.s32 %s33, 1
    %35 = vst [vmem:[%s1] sm:%s34] %v32

// kernel: autoencoder_forward.17
$region0: #{autoencoder_forward.17}
  #allocation0 [shape = 'u32[]', space=smem, size = 0x4, offset = 0x4, fixed_abs, tag = 'smem constant byte address 0x4 - core index']
  #allocation1 [shape = 'u32[144,128]{1,0:T(1,128)}', space=vmem, size = 0x12000, scoped, tag = 'internal scratch']
  %s0 = inlined_call_operand.vmem [shape: f32[8,128], index: 0, kind: input, shape index: {}]
  %s1 = inlined_call_operand.vmem [shape: f32[128,256], index: 1, kind: input, shape index: {}]
  %s2 = inlined_call_operand.vmem [shape: f32[1,256], index: 2, kind: input, shape index: {}]
  %s3 = inlined_call_operand.vmem [shape: f32[8,256], index: 3, kind: output, shape index: {0}]
  %s4 = inlined_call_operand.vmem [shape: f32[1,256], index: 4, kind: output, shape index: {1}]
  %s5 = inlined_call_operand.vmem [shape: f32[1,256], index: 5, kind: output, shape index: {2}]
  %6 = xla_tuple %s3, %s4, %s5
  %s7 = sld [smem:[#allocation0]]
  $region42: #{autoencoder_forward.17} parent=0
    _
  %s9 = ssub.s32 1, %s7
  %s10 = scalar_select 0, %s9, %s7
  // Predicated region
  $region2: #{autoencoder_forward.17} parent=0 // pred_check
    _
  $region3: #{autoencoder_forward.17} parent=0 // pred_check_branch
    %12 = sbr.rel (0) target = $region5
  $region4: #{autoencoder_forward.17} parent=0 // pred_region
    _
  $region5: #{autoencoder_forward.17} parent=0 // pred_fallthru
    _
  // Predicated region
  $region6: #{autoencoder_forward.17} parent=0 // pred_check
    _
  $region7: #{autoencoder_forward.17} parent=0 // pred_check_branch
    %14 = sbr.rel (0) target = $region9
  $region8: #{autoencoder_forward.17} parent=0 // pred_region
    _
  $region9: #{autoencoder_forward.17} parent=0 // pred_fallthru
    _
  // Predicated region
  $region10: #{autoencoder_forward.17} parent=0 // pred_check
    _
  $region11: #{autoencoder_forward.17} parent=0 // pred_check_branch
    %16 = sbr.rel (0) target = $region13
  $region12: #{autoencoder_forward.17} parent=0 // pred_region
    _
  $region13: #{autoencoder_forward.17} parent=0 // pred_fallthru
    _
  %p17 = scmp.eq.s32.totalorder 0, 0
  // Predicated region
  $region14: #{autoencoder_forward.17} parent=0 // pred_check
    %p18 = pneg %p17
  $region15: #{autoencoder_forward.17} parent=0 // pred_check_branch
    %20 = sbr.rel (%p18) target = $region17
  $region16: #{autoencoder_forward.17} parent=0 // pred_region
    %v21 = vlaneseq
    %vm22 = vcmp.ge.s32.totalorder %v21, 0
    %vm23 = vcmp.lt.s32.totalorder %v21, 256
    %vm24 = vmand %vm22, %vm23
    %25 = vst.msk [vmem:[%s4] sm:$0x3] %vm24, 0.0
    %26 = vst.msk [vmem:[%s5] sm:$0x3] %vm24, 0.0
  $region17: #{autoencoder_forward.17} parent=0 // pred_fallthru
    _
  %v27 = vld [vmem:[%s0] sm:$0xff]
  %v28 = vld [vmem:[%s1] sm:$0xff]
  %v29 = vld [vmem:[%s1 + $0x8] sm:$0xff]
  %v30 = vld [vmem:[%s1 + $0x10] sm:$0xff]
  %v31 = vld [vmem:[%s1 + $0x18] sm:$0xff]
  %v32 = vld [vmem:[%s1 + $0x20] sm:$0xff]
  %v33 = vld [vmem:[%s1 + $0x28] sm:$0xff]
  %v34 = vld [vmem:[%s1 + $0x30] sm:$0xff]
  %v35 = vld [vmem:[%s1 + $0x38] sm:$0xff]
  %v36 = vld [vmem:[%s1 + $0x40] sm:$0xff]
  %v37 = vld [vmem:[%s1 + $0x48] sm:$0xff]
  %v38 = vld [vmem:[%s1 + $0x50] sm:$0xff]
  %v39 = vld [vmem:[%s1 + $0x58] sm:$0xff]
  %v40 = vld [vmem:[%s1 + $0x60] sm:$0xff]
  %v41 = vld [vmem:[%s1 + $0x68] sm:$0xff]
  %v42 = vld [vmem:[%s1 + $0x70] sm:$0xff]
  %v43 = vld [vmem:[%s1 + $0x78] sm:$0xff]
  %v44 = vld [vmem:[%s1 + $0x80] sm:$0xff]
  %v45 = vld [vmem:[%s1 + $0x88] sm:$0xff]
  %v46 = vld [vmem:[%s1 + $0x90] sm:$0xff]
  %v47 = vld [vmem:[%s1 + $0x98] sm:$0xff]
  %v48 = vld [vmem:[%s1 + $0xa0] sm:$0xff]
  %v49 = vld [vmem:[%s1 + $0xa8] sm:$0xff]
  %v50 = vld [vmem:[%s1 + $0xb0] sm:$0xff]
  %v51 = vld [vmem:[%s1 + $0xb8] sm:$0xff]
  %v52 = vld [vmem:[%s1 + $0xc0] sm:$0xff]
  %v53 = vld [vmem:[%s1 + $0xc8] sm:$0xff]
  %v54 = vld [vmem:[%s1 + $0xd0] sm:$0xff]
  %v55 = vld [vmem:[%s1 + $0xd8] sm:$0xff]
  %v56 = vld [vmem:[%s1 + $0xe0] sm:$0xff]
  %v57 = vld [vmem:[%s1 + $0xe8] sm:$0xff]
  %v58 = vld [vmem:[%s1 + $0xf0] sm:$0xff]
  %v59 = vld [vmem:[%s1 + $0xf8] sm:$0xff]
  %v60 = vld [vmem:[%s2] sm:$0x3]
  %v62 = vlaneseq
  %v63 = vshrl.u32 %v62, 7
  %v64 = vsub.s32 0, %v63
  %v65 = vrot.slane %v60, %v64
  %v66 = vlaneseq
  %v67 = vshrl.u32 %v66, 7
  %v68 = vsub.s32 1, %v67
  %v69 = vrot.slane %v60, %v68
  %72 = vmatprep.subr.mxu0 %v59
  %73 = vmatpush1.msra.mxu0 %v58
  %74 = vmatprep.subr.mxu0 %v57
  %75 = vmatpush1.msra.mxu0 %v56
  %76 = vmatprep.subr.mxu0 %v55
  %77 = vmatpush1.msra.mxu0 %v54
  %78 = vmatprep.subr.mxu0 %v53
  %79 = vmatpush1.msra.mxu0 %v52
  %80 = vmatprep.subr.mxu0 %v51
  %81 = vmatpush1.msra.mxu0 %v50
  %82 = vmatprep.subr.mxu0 %v49
  %83 = vmatpush1.msra.mxu0 %v48
  %84 = vmatprep.subr.mxu0 %v47
  %85 = vmatpush1.msra.mxu0 %v46
  %86 = vmatprep.subr.mxu0 %v45
  %87 = vmatpush1.msra.mxu0 %v44
  %88 = vmatprep.subr.mxu0 %v43
  %89 = vmatpush1.msra.mxu0 %v42
  %90 = vmatprep.subr.mxu0 %v41
  %91 = vmatpush1.msra.mxu0 %v40
  %92 = vmatprep.subr.mxu0 %v39
  %93 = vmatpush1.msra.mxu0 %v38
  %94 = vmatprep.subr.mxu0 %v37
  %95 = vmatpush1.msra.mxu0 %v36
  %96 = vmatprep.subr.mxu0 %v35
  %97 = vmatpush1.msra.mxu0 %v34
  %98 = vmatprep.subr.mxu0 %v33
  %99 = vmatpush1.msra.mxu0 %v32
  %100 = vmatprep.subr.mxu0 %v31
  %101 = vmatpush1.msra.mxu0 %v30
  %102 = vmatprep.subr.mxu0 %v29
  %103 = vmatpush1.msra.mxu0 %v28
  %104 = vmatprep.subr.mxu0 0.0
  %105 = vmatpush2.msra.mxu0 0.0
  %106 = vmatprep.subr.mxu0 0.0
  %107 = vmatpush2.msra.mxu0 0.0
  %108 = vmatprep.subr.mxu0 0.0
  %109 = vmatpush2.msra.mxu0 0.0
  %110 = vmatprep.subr.mxu0 0.0
  %111 = vmatpush2.msra.mxu0 0.0
  %112 = vmatprep.subr.mxu0 0.0
  %113 = vmatpush2.msra.mxu0 0.0
  %114 = vmatprep.subr.mxu0 0.0
  %115 = vmatpush2.msra.mxu0 0.0
  %116 = vmatprep.subr.mxu0 0.0
  %117 = vmatpush2.msra.mxu0 0.0
  %118 = vmatprep.subr.mxu0 0.0
  %119 = vmatpush2.msra.mxu0 0.0
  %120 = vmatprep.subr.mxu0 0.0
  %121 = vmatpush2.msra.mxu0 0.0
  %122 = vmatprep.subr.mxu0 0.0
  %123 = vmatpush2.msra.mxu0 0.0
  %124 = vmatprep.subr.mxu0 0.0
  %125 = vmatpush2.msra.mxu0 0.0
  %126 = vmatprep.subr.mxu0 0.0
  %127 = vmatpush2.msra.mxu0 0.0
  %128 = vmatprep.subr.mxu0 0.0
  %129 = vmatpush2.msra.mxu0 0.0
  %130 = vmatprep.subr.mxu0 0.0
  %131 = vmatpush2.msra.mxu0 0.0
  %132 = vmatprep.subr.mxu0 0.0
  %133 = vmatpush2.msra.mxu0 0.0
  %134 = vmatprep.subr.mxu0 0.0
  %135 = vmatpush2.msra.mxu0 0.0
  %136 = vmatprep.mubr.f32.mxu0 0.0
  %137 = vmatmul.mubr.f32.gmra.mxu0 %v27
  %v138 = vpop.f32.mrf.mxu0
  %v139 = vadd.f32 %v65, %v138
  %v140 = vpop.f32.mrf.mxu0
  %v141 = vadd.f32 %v69, %v140
  %142 = vdwg.mxu0
  %143 = vst [vmem:[%s3] sm:$0xff] %v139
  %144 = vst [vmem:[%s3 + $0x8] sm:$0xff] %v141
  %v145 = vld [vmem:[%s4] sm:$0x3]
  %v146 = vrot.slane %v139, 4
  %v147 = vadd.f32 %v139, %v146
  %v148 = vrot.slane %v147, 2
  %v149 = vadd.f32 %v147, %v148
  %v150 = vrot.slane %v149, 1
  %v151 = vadd.f32 %v149, %v150
  %v152 = vrot.slane %v141, 4
  %v153 = vadd.f32 %v141, %v152
  %v154 = vrot.slane %v153, 2
  %v155 = vadd.f32 %v153, %v154
  %v156 = vrot.slane %v155, 1
  %v157 = vadd.f32 %v155, %v156
  %v160 = vcombine.low %v151, %v157
  %v162 = vunpack.c.l.s4 1966171168
  %v163 = vunpack.c.0.s8 %v162
  %v164 = vlaneseq
  %v165 = vshrl.u32 %v164, 7
  %v166 = vsub.s32 %v163, %v165
  %v167 = vrot.slane %v160, %v166
  %v169 = vunpack.c.l.s4 1966171168
  %v170 = vunpack.c.0.s8 %v169
  %v171 = vlaneseq
  %v172 = vshrl.u32 %v171, 7
  %v173 = vsub.s32 %v170, %v172
  %v174 = vrot.slane %v167, %v173
  %v176 = vadd.f32 %v145, %v174
  %v177 = vlaneseq
  %vm178 = vcmp.ge.s32.totalorder %v177, 0
  %vm179 = vcmp.lt.s32.totalorder %v177, 256
  %vm180 = vmand %vm178, %vm179
  %181 = vst.msk [vmem:[%s4] sm:$0x3] %vm180, %v176
  %v182 = vld [vmem:[%s5] sm:$0x3]
  %v183 = vmul.f32 %v139, %v139
  %v184 = vmul.f32 %v141, %v141
  %v185 = vrot.slane %v183, 4
  %v186 = vadd.f32 %v183, %v185
  %v187 = vrot.slane %v186, 2
  %v188 = vadd.f32 %v186, %v187
  %v189 = vrot.slane %v188, 1
  %v190 = vadd.f32 %v188, %v189
  %v191 = vrot.slane %v184, 4
  %v192 = vadd.f32 %v184, %v191
  %v193 = vrot.slane %v192, 2
  %v194 = vadd.f32 %v192, %v193
  %v195 = vrot.slane %v194, 1
  %v196 = vadd.f32 %v194, %v195
  %v199 = vcombine.low %v190, %v196
  %v201 = vunpack.c.l.s4 1966171168
  %v202 = vunpack.c.0.s8 %v201
  %v203 = vlaneseq
  %v204 = vshrl.u32 %v203, 7
  %v205 = vsub.s32 %v202, %v204
  %v206 = vrot.slane %v199, %v205
  %v208 = vunpack.c.l.s4 1966171168
  %v209 = vunpack.c.0.s8 %v208
  %v210 = vlaneseq
  %v211 = vshrl.u32 %v210, 7
  %v212 = vsub.s32 %v209, %v211
  %v213 = vrot.slane %v206, %v212
  %v215 = vadd.f32 %v182, %v213
  %216 = vst.msk [vmem:[%s5] sm:$0x3] %vm180, %v215
  // Predicated region
  $region18: #{autoencoder_forward.17} parent=0 // pred_check
    _
  $region19: #{autoencoder_forward.17} parent=0 // pred_check_branch
    %218 = sbr.rel (0) target = $region21
  $region20: #{autoencoder_forward.17} parent=0 // pred_region
    _
  $region21: #{autoencoder_forward.17} parent=0 // pred_fallthru
    _
  // Predicated region
  $region22: #{autoencoder_forward.17} parent=0 // pred_check
    _
  $region23: #{autoencoder_forward.17} parent=0 // pred_check_branch
    %220 = sbr.rel (0) target = $region25
  $region24: #{autoencoder_forward.17} parent=0 // pred_region
    _
  $region25: #{autoencoder_forward.17} parent=0 // pred_fallthru
    _
  // Predicated region
  $region26: #{autoencoder_forward.17} parent=0 // pred_check
    _
  $region27: #{autoencoder_forward.17} parent=0 // pred_check_branch
    %222 = sbr.rel (0) target = $region29
  $region28: #{autoencoder_forward.17} parent=0 // pred_region
    _
  $region29: #{autoencoder_forward.17} parent=0 // pred_fallthru
    _
  // Predicated region
  $region30: #{autoencoder_forward.17} parent=0 // pred_check
    _
  $region31: #{autoencoder_forward.17} parent=0 // pred_check_branch
    %224 = sbr.rel (0) target = $region33
  $region32: #{autoencoder_forward.17} parent=0 // pred_region
    _
  $region33: #{autoencoder_forward.17} parent=0 // pred_fallthru
    _
  // Predicated region
  $region34: #{autoencoder_forward.17} parent=0 // pred_check
    _
  $region35: #{autoencoder_forward.17} parent=0 // pred_check_branch
    %226 = sbr.rel (0) target = $region37
  $region36: #{autoencoder_forward.17} parent=0 // pred_region
    _
  $region37: #{autoencoder_forward.17} parent=0 // pred_fallthru
    _
  // Predicated region
  $region38: #{autoencoder_forward.17} parent=0 // pred_check
    _
  $region39: #{autoencoder_forward.17} parent=0 // pred_check_branch
    %228 = sbr.rel (0) target = $region41
  $region40: #{autoencoder_forward.17} parent=0 // pred_region
    _
  $region41: #{autoencoder_forward.17} parent=0 // pred_fallthru
    _

// kernel: autoencoder_forward.18
$region0: #{autoencoder_forward.18}
  #allocation0 [shape = 'u32[]', space=smem, size = 0x4, offset = 0x4, fixed_abs, tag = 'smem constant byte address 0x4 - core index']
  #allocation1 [shape = 'u32[144,128]{1,0:T(1,128)}', space=vmem, size = 0x12000, scoped, tag = 'internal scratch']
  %s0 = inlined_call_operand.vmem [shape: f32[8,256], index: 0, kind: input, shape index: {}]
  %s1 = inlined_call_operand.vmem [shape: f32[1,256], index: 1, kind: input, shape index: {}]
  %s2 = inlined_call_operand.vmem [shape: f32[1,256], index: 2, kind: input, shape index: {}]
  %s3 = inlined_call_operand.vmem [shape: f32[8,256], index: 3, kind: output, shape index: {}]
  %s4 = sld [smem:[#allocation0]]
  $region22: #{autoencoder_forward.18} parent=0
    _
  %s6 = ssub.s32 1, %s4
  %s7 = scalar_select 0, %s6, %s4
  // Predicated region
  $region2: #{autoencoder_forward.18} parent=0 // pred_check
    _
  $region3: #{autoencoder_forward.18} parent=0 // pred_check_branch
    %9 = sbr.rel (0) target = $region5
  $region4: #{autoencoder_forward.18} parent=0 // pred_region
    _
  $region5: #{autoencoder_forward.18} parent=0 // pred_fallthru
    _
  // Predicated region
  $region6: #{autoencoder_forward.18} parent=0 // pred_check
    _
  $region7: #{autoencoder_forward.18} parent=0 // pred_check_branch
    %11 = sbr.rel (0) target = $region9
  $region8: #{autoencoder_forward.18} parent=0 // pred_region
    _
  $region9: #{autoencoder_forward.18} parent=0 // pred_fallthru
    _
  // Predicated region
  $region10: #{autoencoder_forward.18} parent=0 // pred_check
    _
  $region11: #{autoencoder_forward.18} parent=0 // pred_check_branch
    %13 = sbr.rel (0) target = $region13
  $region12: #{autoencoder_forward.18} parent=0 // pred_region
    _
  $region13: #{autoencoder_forward.18} parent=0 // pred_fallthru
    _
  %v14 = vld [vmem:[%s0] sm:$0xff]
  %v15 = vld [vmem:[%s0 + $0x8] sm:$0xff]
  %v16 = vld [vmem:[%s1] sm:$0x3]
  %v18 = vlaneseq
  %v19 = vshrl.u32 %v18, 7
  %v20 = vsub.s32 0, %v19
  %v21 = vrot.slane %v16, %v20
  %v22 = vlaneseq
  %v23 = vshrl.u32 %v22, 7
  %v24 = vsub.s32 1, %v23
  %v25 = vrot.slane %v16, %v24
  %v28 = vmul.f32 %v14, %v21
  %v29 = vmul.f32 %v15, %v25
  %v30 = vld [vmem:[%s2] sm:$0x3]
  %v32 = vlaneseq
  %v33 = vshrl.u32 %v32, 7
  %v34 = vsub.s32 0, %v33
  %v35 = vrot.slane %v30, %v34
  %v36 = vlaneseq
  %v37 = vshrl.u32 %v36, 7
  %v38 = vsub.s32 1, %v37
  %v39 = vrot.slane %v30, %v38
  %v42 = vadd.f32 %v28, %v35
  %v43 = vadd.f32 %v29, %v39
  %v44 = vmax.f32 %v42, 0.0
  %v45 = vmax.f32 %v43, 0.0
  %46 = vst [vmem:[%s3] sm:$0xff] %v44
  %47 = vst [vmem:[%s3 + $0x8] sm:$0xff] %v45
  // Predicated region
  $region14: #{autoencoder_forward.18} parent=0 // pred_check
    _
  $region15: #{autoencoder_forward.18} parent=0 // pred_check_branch
    %49 = sbr.rel (0) target = $region17
  $region16: #{autoencoder_forward.18} parent=0 // pred_region
    _
  $region17: #{autoencoder_forward.18} parent=0 // pred_fallthru
    _
  // Predicated region
  $region18: #{autoencoder_forward.18} parent=0 // pred_check
    _
  $region19: #{autoencoder_forward.18} parent=0 // pred_check_branch
    %51 = sbr.rel (0) target = $region21
  $region20: #{autoencoder_forward.18} parent=0 // pred_region
    _
  $region21: #{autoencoder_forward.18} parent=0 // pred_fallthru
    _

// kernel: tile.68
$region0: #{tile.68}
  #allocation0 [shape = 's32[1]{0}', space=sflag, size = 0x4, scoped, tag = 'scoped memory for tile.68']
  %s0 = inlined_call_operand.vmem [shape: f32[3], index: 0, kind: input, shape index: {}]
  %s1 = inlined_call_operand.vmem [shape: f32[4,3], index: 1, kind: output, shape index: {}]
  // Predicated region
  $region2: #{tile.68} parent=0 // pred_check
    _
  $region3: #{tile.68} parent=0 // pred_check_branch
    %3 = sbr.rel (0) target = $region5
  $region4: #{tile.68} parent=0 // pred_region
    _
  $region5: #{tile.68} parent=0 // pred_fallthru
    _
  %v4 = vld [vmem:[%s0] ss:$0 sm:$0xff]
  %5 = vst [vmem:[%s1] sm:$0xf] %v4

// kernel: tile.69
$region0: #{tile.69}
  %s0 = inlined_call_operand.vmem [shape: f32[4,3], index: 0, kind: input, shape index: {}]
  %s1 = inlined_call_operand.vmem [shape: f32[1,12], index: 1, kind: output, shape index: {}]
  $region1: #{tile.69} parent=0
    #allocation0 [shape = 'u8[4096]{0}', space=vmem, size = 0x1000, scoped, tag = 'scoped mem for output reshape']
    #allocation1 [shape = 'u8[4096]{0}', space=vmem, size = 0x1000, scoped, tag = 'scoped mem for input reshape']
    %s3 = sshll.u32 1, 4
    %s4 = ssub.s32 %s3, 1
    %v5 = vld [vmem:[%s0] sm:%s4]
    %6 = vst [vmem:[#allocation1] sm:%s4] %v5
    %v7 = vld [vmem:[#allocation1] sm:$0x1]
    %vm8 = vcmask 23552
    %9 = vst.msk [vmem:[#allocation0] sm:$0x1] %vm8, %v7
    %s10 = scalar_lea.vmem [#allocation1], 3
    %v11 = vld [vmem:[%s10] sm:$0x1]
    %12 = vrot.lane.b32.xlu0 %v11, 9
    %v13 = vpop.permute.xlu0 %12
    %vm14 = vcmask 97352
    %15 = vst.msk [vmem:[#allocation0] sm:$0x1] %vm14, %v13
    %s16 = scalar_lea.vmem [#allocation1], 2
    %v17 = vld [vmem:[%s16] sm:$0x1]
    %18 = vrot.lane.b32.xlu0 %v17, 6
    %v19 = vpop.permute.xlu0 %18
    %vm20 = vcmask 72752
    %21 = vst.msk [vmem:[#allocation0] sm:$0x1] %vm20, %v19
    %s22 = scalar_lea.vmem [#allocation1], 1
    %v23 = vld [vmem:[%s22] sm:$0x1]
    %24 = vrot.lane.b32.xlu0 %v23, 3
    %v25 = vpop.permute.xlu0 %24
    %vm26 = vcmask 48152
    %27 = vst.msk [vmem:[#allocation0] sm:$0x1] %vm26, %v25
    %s29 = sshll.u32 1, 1
    %s30 = ssub.s32 %s29, 1
    %v32 = vld [vmem:[#allocation0] sm:%s30]
    %s33 = sshll.u32 1, 1
    %s34 = ssub.s32 %s33, 1
    %35 = vst [vmem:[%s1] sm:%s34] %v32

// kernel: autoencoder_forward.19
$region0: #{autoencoder_forward.19}
  #allocation0 [shape = 'u32[]', space=smem, size = 0x4, offset = 0x4, fixed_abs, tag = 'smem constant byte address 0x4 - core index']
  #allocation1 [shape = 'u32[144,128]{1,0:T(1,128)}', space=vmem, size = 0x12000, scoped, tag = 'internal scratch']
  %s0 = inlined_call_operand.vmem [shape: f32[32,64], index: 0, kind: input, shape index: {}]
  %s1 = inlined_call_operand.vmem [shape: f32[64,128], index: 1, kind: input, shape index: {}]
  %s2 = inlined_call_operand.vmem [shape: f32[1,128], index: 2, kind: input, shape index: {}]
  %s3 = inlined_call_operand.vmem [shape: f32[32,128], index: 3, kind: output, shape index: {0}]
  %s4 = inlined_call_operand.vmem [shape: f32[1,128], index: 4, kind: output, shape index: {1}]
  %s5 = inlined_call_operand.vmem [shape: f32[1,128], index: 5, kind: output, shape index: {2}]
  %6 = xla_tuple %s3, %s4, %s5
  %s7 = sld [smem:[#allocation0]]
  $region42: #{autoencoder_forward.19} parent=0
    _
  %s9 = ssub.s32 1, %s7
  %s10 = scalar_select 0, %s9, %s7
  // Predicated region
  $region2: #{autoencoder_forward.19} parent=0 // pred_check
    _
  $region3: #{autoencoder_forward.19} parent=0 // pred_check_branch
    %12 = sbr.rel (0) target = $region5
  $region4: #{autoencoder_forward.19} parent=0 // pred_region
    _
  $region5: #{autoencoder_forward.19} parent=0 // pred_fallthru
    _
  // Predicated region
  $region6: #{autoencoder_forward.19} parent=0 // pred_check
    _
  $region7: #{autoencoder_forward.19} parent=0 // pred_check_branch
    %14 = sbr.rel (0) target = $region9
  $region8: #{autoencoder_forward.19} parent=0 // pred_region
    _
  $region9: #{autoencoder_forward.19} parent=0 // pred_fallthru
    _
  // Predicated region
  $region10: #{autoencoder_forward.19} parent=0 // pred_check
    _
  $region11: #{autoencoder_forward.19} parent=0 // pred_check_branch
    %16 = sbr.rel (0) target = $region13
  $region12: #{autoencoder_forward.19} parent=0 // pred_region
    _
  $region13: #{autoencoder_forward.19} parent=0 // pred_fallthru
    _
  %p17 = scmp.eq.s32.totalorder 0, 0
  // Predicated region
  $region14: #{autoencoder_forward.19} parent=0 // pred_check
    %p18 = pneg %p17
  $region15: #{autoencoder_forward.19} parent=0 // pred_check_branch
    %20 = sbr.rel (%p18) target = $region17
  $region16: #{autoencoder_forward.19} parent=0 // pred_region
    %21 = vst [vmem:[%s4] sm:$0x1] 0.0
    %22 = vst [vmem:[%s5] sm:$0x1] 0.0
  $region17: #{autoencoder_forward.19} parent=0 // pred_fallthru
    _
  %v23 = vld [vmem:[%s0] sm:$0xff]
  %v24 = vld [vmem:[%s0 + $0x8] sm:$0xff]
  %v25 = vld [vmem:[%s0 + $0x10] sm:$0xff]
  %v26 = vld [vmem:[%s0 + $0x18] sm:$0xff]
  %v27 = vld [vmem:[%s1] sm:$0xff]
  %v28 = vld [vmem:[%s1 + $0x8] sm:$0xff]
  %v29 = vld [vmem:[%s1 + $0x10] sm:$0xff]
  %v30 = vld [vmem:[%s1 + $0x18] sm:$0xff]
  %v31 = vld [vmem:[%s1 + $0x20] sm:$0xff]
  %v32 = vld [vmem:[%s1 + $0x28] sm:$0xff]
  %v33 = vld [vmem:[%s1 + $0x30] sm:$0xff]
  %v34 = vld [vmem:[%s1 + $0x38] sm:$0xff]
  %v35 = vld [vmem:[%s2] sm:$0x1]
  %v37 = vlaneseq
  %v38 = vshrl.u32 %v37, 7
  %v39 = vsub.s32 0, %v38
  %v40 = vrot.slane %v35, %v39
  %vm42 = vcmask 523264
  %v44 = vsel %vm42, %v23, 0
  %v47 = vsel %vm42, %v24, 0
  %v50 = vsel %vm42, %v25, 0
  %v53 = vsel %vm42, %v26, 0
  %55 = vmatprep.subr.mxu0 0.0
  %56 = vmatpush1.msra.mxu0 0.0
  %57 = vmatprep.subr.mxu0 0.0
  %58 = vmatpush1.msra.mxu0 0.0
  %59 = vmatprep.subr.mxu0 0.0
  %60 = vmatpush1.msra.mxu0 0.0
  %61 = vmatprep.subr.mxu0 0.0
  %62 = vmatpush1.msra.mxu0 0.0
  %63 = vmatprep.subr.mxu0 0.0
  %64 = vmatpush1.msra.mxu0 0.0
  %65 = vmatprep.subr.mxu0 0.0
  %66 = vmatpush1.msra.mxu0 0.0
  %67 = vmatprep.subr.mxu0 0.0
  %68 = vmatpush1.msra.mxu0 0.0
  %69 = vmatprep.subr.mxu0 0.0
  %70 = vmatpush1.msra.mxu0 0.0
  %71 = vmatprep.subr.mxu0 0.0
  %72 = vmatpush1.msra.mxu0 %v34
  %73 = vmatprep.subr.mxu0 0.0
  %74 = vmatpush1.msra.mxu0 %v33
  %75 = vmatprep.subr.mxu0 0.0
  %76 = vmatpush1.msra.mxu0 %v32
  %77 = vmatprep.subr.mxu0 0.0
  %78 = vmatpush1.msra.mxu0 %v31
  %79 = vmatprep.subr.mxu0 0.0
  %80 = vmatpush1.msra.mxu0 %v30
  %81 = vmatprep.subr.mxu0 0.0
  %82 = vmatpush1.msra.mxu0 %v29
  %83 = vmatprep.subr.mxu0 0.0
  %84 = vmatpush1.msra.mxu0 %v28
  %85 = vmatprep.subr.mxu0 0.0
  %86 = vmatpush1.msra.mxu0 %v27
  %87 = vmatprep.subr.mxu0 0.0
  %88 = vmatpush2.msra.mxu0 0.0
  %89 = vmatprep.subr.mxu0 0.0
  %90 = vmatpush2.msra.mxu0 0.0
  %91 = vmatprep.subr.mxu0 0.0
  %92 = vmatpush2.msra.mxu0 0.0
  %93 = vmatprep.subr.mxu0 0.0
  %94 = vmatpush2.msra.mxu0 0.0
  %95 = vmatprep.subr.mxu0 0.0
  %96 = vmatpush2.msra.mxu0 0.0
  %97 = vmatprep.subr.mxu0 0.0
  %98 = vmatpush2.msra.mxu0 0.0
  %99 = vmatprep.subr.mxu0 0.0
  %100 = vmatpush2.msra.mxu0 0.0
  %101 = vmatprep.subr.mxu0 0.0
  %102 = vmatpush2.msra.mxu0 0.0
  %103 = vmatprep.subr.mxu0 0.0
  %104 = vmatpush2.msra.mxu0 0.0
  %105 = vmatprep.subr.mxu0 0.0
  %106 = vmatpush2.msra.mxu0 0.0
  %107 = vmatprep.subr.mxu0 0.0
  %108 = vmatpush2.msra.mxu0 0.0
  %109 = vmatprep.subr.mxu0 0.0
  %110 = vmatpush2.msra.mxu0 0.0
  %111 = vmatprep.subr.mxu0 0.0
  %112 = vmatpush2.msra.mxu0 0.0
  %113 = vmatprep.subr.mxu0 0.0
  %114 = vmatpush2.msra.mxu0 0.0
  %115 = vmatprep.subr.mxu0 0.0
  %116 = vmatpush2.msra.mxu0 0.0
  %117 = vmatprep.subr.mxu0 0.0
  %118 = vmatpush2.msra.mxu0 0.0
  %119 = vmatprep.mubr.f32.mxu0 0.0
  %120 = vmatmul.mubr.f32.gmra.mxu0 %v44
  %v121 = vpop.f32.mrf.mxu0
  %v122 = vadd.f32 %v40, %v121
  %v123 = vpop.f32.mrf.mxu0
  %124 = vmatprep.mubr.f32.mxu0 0.0
  %125 = vmatmul.mubr.f32.gmra.mxu0 %v47
  %v126 = vpop.f32.mrf.mxu0
  %v127 = vadd.f32 %v40, %v126
  %v128 = vpop.f32.mrf.mxu0
  %129 = vmatprep.mubr.f32.mxu0 0.0
  %130 = vmatmul.mubr.f32.gmra.mxu0 %v50
  %v131 = vpop.f32.mrf.mxu0
  %v132 = vadd.f32 %v40, %v131
  %v133 = vpop.f32.mrf.mxu0
  %134 = vmatprep.mubr.f32.mxu0 0.0
  %135 = vmatmul.mubr.f32.gmra.mxu0 %v53
  %v136 = vpop.f32.mrf.mxu0
  %v137 = vadd.f32 %v40, %v136
  %v138 = vpop.f32.mrf.mxu0
  %139 = vdwg.mxu0
  %140 = vst [vmem:[%s3] sm:$0xff] %v122
  %141 = vst [vmem:[%s3 + $0x8] sm:$0xff] %v127
  %142 = vst [vmem:[%s3 + $0x10] sm:$0xff] %v132
  %143 = vst [vmem:[%s3 + $0x18] sm:$0xff] %v137
  %v144 = vld [vmem:[%s4] sm:$0x1]
  %v145 = vadd.f32 %v122, %v127
  %v146 = vadd.f32 %v145, %v132
  %v147 = vadd.f32 %v146, %v137
  %v148 = vrot.slane %v147, 4
  %v149 = vadd.f32 %v147, %v148
  %v150 = vrot.slane %v149, 2
  %v151 = vadd.f32 %v149, %v150
  %v152 = vrot.slane %v151, 1
  %v153 = vadd.f32 %v151, %v152
  %v154 = vadd.f32 %v144, %v153
  %155 = vst [vmem:[%s4] sm:$0x1] %v154
  %v156 = vld [vmem:[%s5] sm:$0x1]
  %v157 = vmul.f32 %v122, %v122
  %v158 = vmul.f32 %v127, %v127
  %v159 = vmul.f32 %v132, %v132
  %v160 = vmul.f32 %v137, %v137
  %v161 = vadd.f32 %v157, %v158
  %v162 = vadd.f32 %v161, %v159
  %v163 = vadd.f32 %v162, %v160
  %v164 = vrot.slane %v163, 4
  %v165 = vadd.f32 %v163, %v164
  %v166 = vrot.slane %v165, 2
  %v167 = vadd.f32 %v165, %v166
  %v168 = vrot.slane %v167, 1
  %v169 = vadd.f32 %v167, %v168
  %v170 = vadd.f32 %v156, %v169
  %171 = vst [vmem:[%s5] sm:$0x1] %v170
  // Predicated region
  $region18: #{autoencoder_forward.19} parent=0 // pred_check
    _
  $region19: #{autoencoder_forward.19} parent=0 // pred_check_branch
    %173 = sbr.rel (0) target = $region21
  $region20: #{autoencoder_forward.19} parent=0 // pred_region
    _
  $region21: #{autoencoder_forward.19} parent=0 // pred_fallthru
    _
  // Predicated region
  $region22: #{autoencoder_forward.19} parent=0 // pred_check
    _
  $region23: #{autoencoder_forward.19} parent=0 // pred_check_branch
    %175 = sbr.rel (0) target = $region25
  $region24: #{autoencoder_forward.19} parent=0 // pred_region
    _
  $region25: #{autoencoder_forward.19} parent=0 // pred_fallthru
    _
  // Predicated region
  $region26: #{autoencoder_forward.19} parent=0 // pred_check
    _
  $region27: #{autoencoder_forward.19} parent=0 // pred_check_branch
    %177 = sbr.rel (0) target = $region29
  $region28: #{autoencoder_forward.19} parent=0 // pred_region
    _
  $region29: #{autoencoder_forward.19} parent=0 // pred_fallthru
    _
  // Predicated region
  $region30: #{autoencoder_forward.19} parent=0 // pred_check
    _
  $region31: #{autoencoder_forward.19} parent=0 // pred_check_branch
    %179 = sbr.rel (0) target = $region33
  $region32: #{autoencoder_forward.19} parent=0 // pred_region
    _
  $region33: #{autoencoder_forward.19} parent=0 // pred_fallthru
    _
  // Predicated region
  $region34: #{autoencoder_forward.19} parent=0 // pred_check
    _
  $region35: #{autoencoder_forward.19} parent=0 // pred_check_branch
    %181 = sbr.rel (0) target = $region37
  $region36: #{autoencoder_forward.19} parent=0 // pred_region
    _
  $region37: #{autoencoder_forward.19} parent=0 // pred_fallthru
    _
  // Predicated region
  $region38: #{autoencoder_forward.19} parent=0 // pred_check
    _
  $region39: #{autoencoder_forward.19} parent=0 // pred_check_branch
    %183 = sbr.rel (0) target = $region41
  $region40: #{autoencoder_forward.19} parent=0 // pred_region
    _
  $region41: #{autoencoder_forward.19} parent=0 // pred_fallthru
    _

// kernel: autoencoder_forward.20
$region0: #{autoencoder_forward.20}
  #allocation0 [shape = 'u32[]', space=smem, size = 0x4, offset = 0x4, fixed_abs, tag = 'smem constant byte address 0x4 - core index']
  #allocation1 [shape = 'u32[144,128]{1,0:T(1,128)}', space=vmem, size = 0x12000, scoped, tag = 'internal scratch']
  %s0 = inlined_call_operand.vmem [shape: f32[32,128], index: 0, kind: input, shape index: {}]
  %s1 = inlined_call_operand.vmem [shape: f32[1,128], index: 1, kind: input, shape index: {}]
  %s2 = inlined_call_operand.vmem [shape: f32[1,128], index: 2, kind: input, shape index: {}]
  %s3 = inlined_call_operand.vmem [shape: f32[32,128], index: 3, kind: output, shape index: {}]
  %s4 = sld [smem:[#allocation0]]
  $region22: #{autoencoder_forward.20} parent=0
    _
  %s6 = ssub.s32 1, %s4
  %s7 = scalar_select 0, %s6, %s4
  // Predicated region
  $region2: #{autoencoder_forward.20} parent=0 // pred_check
    _
  $region3: #{autoencoder_forward.20} parent=0 // pred_check_branch
    %9 = sbr.rel (0) target = $region5
  $region4: #{autoencoder_forward.20} parent=0 // pred_region
    _
  $region5: #{autoencoder_forward.20} parent=0 // pred_fallthru
    _
  // Predicated region
  $region6: #{autoencoder_forward.20} parent=0 // pred_check
    _
  $region7: #{autoencoder_forward.20} parent=0 // pred_check_branch
    %11 = sbr.rel (0) target = $region9
  $region8: #{autoencoder_forward.20} parent=0 // pred_region
    _
  $region9: #{autoencoder_forward.20} parent=0 // pred_fallthru
    _
  // Predicated region
  $region10: #{autoencoder_forward.20} parent=0 // pred_check
    _
  $region11: #{autoencoder_forward.20} parent=0 // pred_check_branch
    %13 = sbr.rel (0) target = $region13
  $region12: #{autoencoder_forward.20} parent=0 // pred_region
    _
  $region13: #{autoencoder_forward.20} parent=0 // pred_fallthru
    _
  %v14 = vld [vmem:[%s0] sm:$0xff]
  %v15 = vld [vmem:[%s0 + $0x8] sm:$0xff]
  %v16 = vld [vmem:[%s0 + $0x10] sm:$0xff]
  %v17 = vld [vmem:[%s0 + $0x18] sm:$0xff]
  %v18 = vld [vmem:[%s1] sm:$0x1]
  %v20 = vlaneseq
  %v21 = vshrl.u32 %v20, 7
  %v22 = vsub.s32 0, %v21
  %v23 = vrot.slane %v18, %v22
  %v25 = vmul.f32 %v14, %v23
  %v26 = vmul.f32 %v15, %v23
  %v27 = vmul.f32 %v16, %v23
  %v28 = vmul.f32 %v17, %v23
  %v29 = vld [vmem:[%s2] sm:$0x1]
  %v31 = vlaneseq
  %v32 = vshrl.u32 %v31, 7
  %v33 = vsub.s32 0, %v32
  %v34 = vrot.slane %v29, %v33
  %v36 = vadd.f32 %v25, %v34
  %v37 = vadd.f32 %v26, %v34
  %v38 = vadd.f32 %v27, %v34
  %v39 = vadd.f32 %v28, %v34
  %v40 = vmax.f32 %v36, 0.0
  %v41 = vmax.f32 %v37, 0.0
  %v42 = vmax.f32 %v38, 0.0
  %v43 = vmax.f32 %v39, 0.0
  %44 = vst [vmem:[%s3] sm:$0xff] %v40
  %45 = vst [vmem:[%s3 + $0x8] sm:$0xff] %v41
  %46 = vst [vmem:[%s3 + $0x10] sm:$0xff] %v42
  %47 = vst [vmem:[%s3 + $0x18] sm:$0xff] %v43
  // Predicated region
  $region14: #{autoencoder_forward.20} parent=0 // pred_check
    _
  $region15: #{autoencoder_forward.20} parent=0 // pred_check_branch
    %49 = sbr.rel (0) target = $region17
  $region16: #{autoencoder_forward.20} parent=0 // pred_region
    _
  $region17: #{autoencoder_forward.20} parent=0 // pred_fallthru
    _
  // Predicated region
  $region18: #{autoencoder_forward.20} parent=0 // pred_check
    _
  $region19: #{autoencoder_forward.20} parent=0 // pred_check_branch
    %51 = sbr.rel (0) target = $region21
  $region20: #{autoencoder_forward.20} parent=0 // pred_region
    _
  $region21: #{autoencoder_forward.20} parent=0 // pred_fallthru
    _

// kernel: autoencoder_forward.21
$region0: #{autoencoder_forward.21}
  #allocation0 [shape = 'u32[]', space=smem, size = 0x4, offset = 0x4, fixed_abs, tag = 'smem constant byte address 0x4 - core index']
  #allocation1 [shape = 'u32[144,128]{1,0:T(1,128)}', space=vmem, size = 0x12000, scoped, tag = 'internal scratch']
  %s0 = inlined_call_operand.vmem [shape: f32[128,32], index: 0, kind: input, shape index: {}]
  %s1 = inlined_call_operand.vmem [shape: f32[32,12], index: 1, kind: input, shape index: {}]
  %s2 = inlined_call_operand.vmem [shape: f32[1,12], index: 2, kind: input, shape index: {}]
  %s3 = inlined_call_operand.vmem [shape: f32[128,12], index: 3, kind: output, shape index: {}]
  %s4 = sld [smem:[#allocation0]]
  $region22: #{autoencoder_forward.21} parent=0
    _
  %s6 = ssub.s32 1, %s4
  %s7 = scalar_select 0, %s6, %s4
  // Predicated region
  $region2: #{autoencoder_forward.21} parent=0 // pred_check
    _
  $region3: #{autoencoder_forward.21} parent=0 // pred_check_branch
    %9 = sbr.rel (0) target = $region5
  $region4: #{autoencoder_forward.21} parent=0 // pred_region
    _
  $region5: #{autoencoder_forward.21} parent=0 // pred_fallthru
    _
  // Predicated region
  $region6: #{autoencoder_forward.21} parent=0 // pred_check
    _
  $region7: #{autoencoder_forward.21} parent=0 // pred_check_branch
    %11 = sbr.rel (0) target = $region9
  $region8: #{autoencoder_forward.21} parent=0 // pred_region
    _
  $region9: #{autoencoder_forward.21} parent=0 // pred_fallthru
    _
  // Predicated region
  $region10: #{autoencoder_forward.21} parent=0 // pred_check
    _
  $region11: #{autoencoder_forward.21} parent=0 // pred_check_branch
    %13 = sbr.rel (0) target = $region13
  $region12: #{autoencoder_forward.21} parent=0 // pred_region
    _
  $region13: #{autoencoder_forward.21} parent=0 // pred_fallthru
    _
  %v14 = vld [vmem:[%s0] sm:$0xff]
  %v15 = vld [vmem:[%s0 + $0x8] sm:$0xff]
  %v16 = vld [vmem:[%s0 + $0x10] sm:$0xff]
  %v17 = vld [vmem:[%s0 + $0x18] sm:$0xff]
  %v18 = vld [vmem:[%s0 + $0x20] sm:$0xff]
  %v19 = vld [vmem:[%s0 + $0x28] sm:$0xff]
  %v20 = vld [vmem:[%s0 + $0x30] sm:$0xff]
  %v21 = vld [vmem:[%s0 + $0x38] sm:$0xff]
  %v22 = vld [vmem:[%s0 + $0x40] sm:$0xff]
  %v23 = vld [vmem:[%s0 + $0x48] sm:$0xff]
  %v24 = vld [vmem:[%s0 + $0x50] sm:$0xff]
  %v25 = vld [vmem:[%s0 + $0x58] sm:$0xff]
  %v26 = vld [vmem:[%s0 + $0x60] sm:$0xff]
  %v27 = vld [vmem:[%s0 + $0x68] sm:$0xff]
  %v28 = vld [vmem:[%s0 + $0x70] sm:$0xff]
  %v29 = vld [vmem:[%s0 + $0x78] sm:$0xff]
  %v30 = vld [vmem:[%s1] sm:$0xff]
  %v31 = vld [vmem:[%s1 + $0x8] sm:$0xff]
  %v32 = vld [vmem:[%s1 + $0x10] sm:$0xff]
  %v33 = vld [vmem:[%s1 + $0x18] sm:$0xff]
  %v34 = vld [vmem:[%s2] sm:$0x1]
  %v36 = vlaneseq
  %v37 = vshrl.u32 %v36, 7
  %v38 = vsub.s32 0, %v37
  %v39 = vrot.slane %v34, %v38
  %vm41 = vcmask 261120
  %v43 = vsel %vm41, %v14, 0
  %v46 = vsel %vm41, %v15, 0
  %v49 = vsel %vm41, %v16, 0
  %v52 = vsel %vm41, %v17, 0
  %v55 = vsel %vm41, %v18, 0
  %v58 = vsel %vm41, %v19, 0
  %v61 = vsel %vm41, %v20, 0
  %v64 = vsel %vm41, %v21, 0
  %v67 = vsel %vm41, %v22, 0
  %v70 = vsel %vm41, %v23, 0
  %v73 = vsel %vm41, %v24, 0
  %v76 = vsel %vm41, %v25, 0
  %v79 = vsel %vm41, %v26, 0
  %v82 = vsel %vm41, %v27, 0
  %v85 = vsel %vm41, %v28, 0
  %v88 = vsel %vm41, %v29, 0
  %90 = vmatprep.subr.mxu0 0.0
  %91 = vmatpush1.msra.mxu0 0.0
  %92 = vmatprep.subr.mxu0 0.0
  %93 = vmatpush1.msra.mxu0 0.0
  %94 = vmatprep.subr.mxu0 0.0
  %95 = vmatpush1.msra.mxu0 0.0
  %96 = vmatprep.subr.mxu0 0.0
  %97 = vmatpush1.msra.mxu0 0.0
  %98 = vmatprep.subr.mxu0 0.0
  %99 = vmatpush1.msra.mxu0 0.0
  %100 = vmatprep.subr.mxu0 0.0
  %101 = vmatpush1.msra.mxu0 0.0
  %102 = vmatprep.subr.mxu0 0.0
  %103 = vmatpush1.msra.mxu0 0.0
  %104 = vmatprep.subr.mxu0 0.0
  %105 = vmatpush1.msra.mxu0 0.0
  %106 = vmatprep.subr.mxu0 0.0
  %107 = vmatpush1.msra.mxu0 0.0
  %108 = vmatprep.subr.mxu0 0.0
  %109 = vmatpush1.msra.mxu0 0.0
  %110 = vmatprep.subr.mxu0 0.0
  %111 = vmatpush1.msra.mxu0 0.0
  %112 = vmatprep.subr.mxu0 0.0
  %113 = vmatpush1.msra.mxu0 0.0
  %114 = vmatprep.subr.mxu0 0.0
  %115 = vmatpush1.msra.mxu0 %v33
  %116 = vmatprep.subr.mxu0 0.0
  %117 = vmatpush1.msra.mxu0 %v32
  %118 = vmatprep.subr.mxu0 0.0
  %119 = vmatpush1.msra.mxu0 %v31
  %120 = vmatprep.subr.mxu0 0.0
  %121 = vmatpush1.msra.mxu0 %v30
  %122 = vmatprep.subr.mxu0 0.0
  %123 = vmatpush2.msra.mxu0 0.0
  %124 = vmatprep.subr.mxu0 0.0
  %125 = vmatpush2.msra.mxu0 0.0
  %126 = vmatprep.subr.mxu0 0.0
  %127 = vmatpush2.msra.mxu0 0.0
  %128 = vmatprep.subr.mxu0 0.0
  %129 = vmatpush2.msra.mxu0 0.0
  %130 = vmatprep.subr.mxu0 0.0
  %131 = vmatpush2.msra.mxu0 0.0
  %132 = vmatprep.subr.mxu0 0.0
  %133 = vmatpush2.msra.mxu0 0.0
  %134 = vmatprep.subr.mxu0 0.0
  %135 = vmatpush2.msra.mxu0 0.0
  %136 = vmatprep.subr.mxu0 0.0
  %137 = vmatpush2.msra.mxu0 0.0
  %138 = vmatprep.subr.mxu0 0.0
  %139 = vmatpush2.msra.mxu0 0.0
  %140 = vmatprep.subr.mxu0 0.0
  %141 = vmatpush2.msra.mxu0 0.0
  %142 = vmatprep.subr.mxu0 0.0
  %143 = vmatpush2.msra.mxu0 0.0
  %144 = vmatprep.subr.mxu0 0.0
  %145 = vmatpush2.msra.mxu0 0.0
  %146 = vmatprep.subr.mxu0 0.0
  %147 = vmatpush2.msra.mxu0 0.0
  %148 = vmatprep.subr.mxu0 0.0
  %149 = vmatpush2.msra.mxu0 0.0
  %150 = vmatprep.subr.mxu0 0.0
  %151 = vmatpush2.msra.mxu0 0.0
  %152 = vmatprep.subr.mxu0 0.0
  %153 = vmatpush2.msra.mxu0 0.0
  %154 = vmatprep.mubr.f32.mxu0 0.0
  %155 = vmatmul.mubr.f32.gmra.mxu0 %v43
  %v156 = vpop.f32.mrf.mxu0
  %v157 = vadd.f32 %v39, %v156
  %v158 = vpop.f32.mrf.mxu0
  %159 = vmatprep.mubr.f32.mxu0 0.0
  %160 = vmatmul.mubr.f32.gmra.mxu0 %v46
  %v161 = vpop.f32.mrf.mxu0
  %v162 = vadd.f32 %v39, %v161
  %v163 = vpop.f32.mrf.mxu0
  %164 = vmatprep.mubr.f32.mxu0 0.0
  %165 = vmatmul.mubr.f32.gmra.mxu0 %v49
  %v166 = vpop.f32.mrf.mxu0
  %v167 = vadd.f32 %v39, %v166
  %v168 = vpop.f32.mrf.mxu0
  %169 = vmatprep.mubr.f32.mxu0 0.0
  %170 = vmatmul.mubr.f32.gmra.mxu0 %v52
  %v171 = vpop.f32.mrf.mxu0
  %v172 = vadd.f32 %v39, %v171
  %v173 = vpop.f32.mrf.mxu0
  %174 = vmatprep.mubr.f32.mxu0 0.0
  %175 = vmatmul.mubr.f32.gmra.mxu0 %v55
  %v176 = vpop.f32.mrf.mxu0
  %v177 = vadd.f32 %v39, %v176
  %v178 = vpop.f32.mrf.mxu0
  %179 = vmatprep.mubr.f32.mxu0 0.0
  %180 = vmatmul.mubr.f32.gmra.mxu0 %v58
  %v181 = vpop.f32.mrf.mxu0
  %v182 = vadd.f32 %v39, %v181
  %v183 = vpop.f32.mrf.mxu0
  %184 = vmatprep.mubr.f32.mxu0 0.0
  %185 = vmatmul.mubr.f32.gmra.mxu0 %v61
  %v186 = vpop.f32.mrf.mxu0
  %v187 = vadd.f32 %v39, %v186
  %v188 = vpop.f32.mrf.mxu0
  %189 = vmatprep.mubr.f32.mxu0 0.0
  %190 = vmatmul.mubr.f32.gmra.mxu0 %v64
  %v191 = vpop.f32.mrf.mxu0
  %v192 = vadd.f32 %v39, %v191
  %v193 = vpop.f32.mrf.mxu0
  %194 = vmatprep.mubr.f32.mxu0 0.0
  %195 = vmatmul.mubr.f32.gmra.mxu0 %v67
  %v196 = vpop.f32.mrf.mxu0
  %v197 = vadd.f32 %v39, %v196
  %v198 = vpop.f32.mrf.mxu0
  %199 = vmatprep.mubr.f32.mxu0 0.0
  %200 = vmatmul.mubr.f32.gmra.mxu0 %v70
  %v201 = vpop.f32.mrf.mxu0
  %v202 = vadd.f32 %v39, %v201
  %v203 = vpop.f32.mrf.mxu0
  %204 = vmatprep.mubr.f32.mxu0 0.0
  %205 = vmatmul.mubr.f32.gmra.mxu0 %v73
  %v206 = vpop.f32.mrf.mxu0
  %v207 = vadd.f32 %v39, %v206
  %v208 = vpop.f32.mrf.mxu0
  %209 = vmatprep.mubr.f32.mxu0 0.0
  %210 = vmatmul.mubr.f32.gmra.mxu0 %v76
  %v211 = vpop.f32.mrf.mxu0
  %v212 = vadd.f32 %v39, %v211
  %v213 = vpop.f32.mrf.mxu0
  %214 = vmatprep.mubr.f32.mxu0 0.0
  %215 = vmatmul.mubr.f32.gmra.mxu0 %v79
  %v216 = vpop.f32.mrf.mxu0
  %v217 = vadd.f32 %v39, %v216
  %v218 = vpop.f32.mrf.mxu0
  %219 = vmatprep.mubr.f32.mxu0 0.0
  %220 = vmatmul.mubr.f32.gmra.mxu0 %v82
  %v221 = vpop.f32.mrf.mxu0
  %v222 = vadd.f32 %v39, %v221
  %v223 = vpop.f32.mrf.mxu0
  %224 = vmatprep.mubr.f32.mxu0 0.0
  %225 = vmatmul.mubr.f32.gmra.mxu0 %v85
  %v226 = vpop.f32.mrf.mxu0
  %v227 = vadd.f32 %v39, %v226
  %v228 = vpop.f32.mrf.mxu0
  %229 = vmatprep.mubr.f32.mxu0 0.0
  %230 = vmatmul.mubr.f32.gmra.mxu0 %v88
  %v231 = vpop.f32.mrf.mxu0
  %v232 = vadd.f32 %v39, %v231
  %v233 = vpop.f32.mrf.mxu0
  %234 = vdwg.mxu0
  %v235 = vxor.u32 %v157, 2147483648
  %v236 = vxor.u32 %v162, 2147483648
  %v237 = vxor.u32 %v167, 2147483648
  %v238 = vxor.u32 %v172, 2147483648
  %v239 = vxor.u32 %v177, 2147483648
  %v240 = vxor.u32 %v182, 2147483648
  %v241 = vxor.u32 %v187, 2147483648
  %v242 = vxor.u32 %v192, 2147483648
  %v243 = vxor.u32 %v197, 2147483648
  %v244 = vxor.u32 %v202, 2147483648
  %v245 = vxor.u32 %v207, 2147483648
  %v246 = vxor.u32 %v212, 2147483648
  %v247 = vxor.u32 %v217, 2147483648
  %v248 = vxor.u32 %v222, 2147483648
  %v249 = vxor.u32 %v227, 2147483648
  %v250 = vxor.u32 %v232, 2147483648
  %v251 = vmul.f32 %v235, 1.442695
  %v252 = vpow.pop %v251
  %v253 = vmul.f32 %v236, 1.442695
  %v254 = vpow.pop %v253
  %v255 = vmul.f32 %v237, 1.442695
  %v256 = vpow.pop %v255
  %v257 = vmul.f32 %v238, 1.442695
  %v258 = vpow.pop %v257
  %v259 = vmul.f32 %v239, 1.442695
  %v260 = vpow.pop %v259
  %v261 = vmul.f32 %v240, 1.442695
  %v262 = vpow.pop %v261
  %v263 = vmul.f32 %v241, 1.442695
  %v264 = vpow.pop %v263
  %v265 = vmul.f32 %v242, 1.442695
  %v266 = vpow.pop %v265
  %v267 = vmul.f32 %v243, 1.442695
  %v268 = vpow.pop %v267
  %v269 = vmul.f32 %v244, 1.442695
  %v270 = vpow.pop %v269
  %v271 = vmul.f32 %v245, 1.442695
  %v272 = vpow.pop %v271
  %v273 = vmul.f32 %v246, 1.442695
  %v274 = vpow.pop %v273
  %v275 = vmul.f32 %v247, 1.442695
  %v276 = vpow.pop %v275
  %v277 = vmul.f32 %v248, 1.442695
  %v278 = vpow.pop %v277
  %v279 = vmul.f32 %v249, 1.442695
  %v280 = vpow.pop %v279
  %v281 = vmul.f32 %v250, 1.442695
  %v282 = vpow.pop %v281
  %v283 = vadd.f32 %v252, 1.0
  %v284 = vadd.f32 %v254, 1.0
  %v285 = vadd.f32 %v256, 1.0
  %v286 = vadd.f32 %v258, 1.0
  %v287 = vadd.f32 %v260, 1.0
  %v288 = vadd.f32 %v262, 1.0
  %v289 = vadd.f32 %v264, 1.0
  %v290 = vadd.f32 %v266, 1.0
  %v291 = vadd.f32 %v268, 1.0
  %v292 = vadd.f32 %v270, 1.0
  %v293 = vadd.f32 %v272, 1.0
  %v294 = vadd.f32 %v274, 1.0
  %v295 = vadd.f32 %v276, 1.0
  %v296 = vadd.f32 %v278, 1.0
  %v297 = vadd.f32 %v280, 1.0
  %v298 = vadd.f32 %v282, 1.0
  %v299 = vrcp.pop %v283
  %v300 = vmul.f32 1.0, %v299
  %v301 = vrcp.pop %v284
  %v302 = vmul.f32 1.0, %v301
  %v303 = vrcp.pop %v285
  %v304 = vmul.f32 1.0, %v303
  %v305 = vrcp.pop %v286
  %v306 = vmul.f32 1.0, %v305
  %v307 = vrcp.pop %v287
  %v308 = vmul.f32 1.0, %v307
  %v309 = vrcp.pop %v288
  %v310 = vmul.f32 1.0, %v309
  %v311 = vrcp.pop %v289
  %v312 = vmul.f32 1.0, %v311
  %v313 = vrcp.pop %v290
  %v314 = vmul.f32 1.0, %v313
  %v315 = vrcp.pop %v291
  %v316 = vmul.f32 1.0, %v315
  %v317 = vrcp.pop %v292
  %v318 = vmul.f32 1.0, %v317
  %v319 = vrcp.pop %v293
  %v320 = vmul.f32 1.0, %v319
  %v321 = vrcp.pop %v294
  %v322 = vmul.f32 1.0, %v321
  %v323 = vrcp.pop %v295
  %v324 = vmul.f32 1.0, %v323
  %v325 = vrcp.pop %v296
  %v326 = vmul.f32 1.0, %v325
  %v327 = vrcp.pop %v297
  %v328 = vmul.f32 1.0, %v327
  %v329 = vrcp.pop %v298
  %v330 = vmul.f32 1.0, %v329
  %vm331 = vcmask 97280
  %332 = vst.msk [vmem:[%s3] sm:$0xff] %vm331, %v300
  %333 = vst.msk [vmem:[%s3 + $0x8] sm:$0xff] %vm331, %v302
  %334 = vst.msk [vmem:[%s3 + $0x10] sm:$0xff] %vm331, %v304
  %335 = vst.msk [vmem:[%s3 + $0x18] sm:$0xff] %vm331, %v306
  %336 = vst.msk [vmem:[%s3 + $0x20] sm:$0xff] %vm331, %v308
  %337 = vst.msk [vmem:[%s3 + $0x28] sm:$0xff] %vm331, %v310
  %338 = vst.msk [vmem:[%s3 + $0x30] sm:$0xff] %vm331, %v312
  %339 = vst.msk [vmem:[%s3 + $0x38] sm:$0xff] %vm331, %v314
  %340 = vst.msk [vmem:[%s3 + $0x40] sm:$0xff] %vm331, %v316
  %341 = vst.msk [vmem:[%s3 + $0x48] sm:$0xff] %vm331, %v318
  %342 = vst.msk [vmem:[%s3 + $0x50] sm:$0xff] %vm331, %v320
  %343 = vst.msk [vmem:[%s3 + $0x58] sm:$0xff] %vm331, %v322
  %344 = vst.msk [vmem:[%s3 + $0x60] sm:$0xff] %vm331, %v324
  %345 = vst.msk [vmem:[%s3 + $0x68] sm:$0xff] %vm331, %v326
  %346 = vst.msk [vmem:[%s3 + $0x70] sm:$0xff] %vm331, %v328
  %347 = vst.msk [vmem:[%s3 + $0x78] sm:$0xff] %vm331, %v330
  // Predicated region
  $region14: #{autoencoder_forward.21} parent=0 // pred_check
    _
  $region15: #{autoencoder_forward.21} parent=0 // pred_check_branch
    %349 = sbr.rel (0) target = $region17
  $region16: #{autoencoder_forward.21} parent=0 // pred_region
    _
  $region17: #{autoencoder_forward.21} parent=0 // pred_fallthru
    _
  // Predicated region
  $region18: #{autoencoder_forward.21} parent=0 // pred_check
    _
  $region19: #{autoencoder_forward.21} parent=0 // pred_check_branch
    %351 = sbr.rel (0) target = $region21
  $region20: #{autoencoder_forward.21} parent=0 // pred_region
    _
  $region21: #{autoencoder_forward.21} parent=0 // pred_fallthru
    _

</llo_original>
